<compile_context>
chip_gen: v5e
topology: v5e:2x2
jax: 0.10.0
libtpu: 0.0.40
codegen_flags: <defaults>
</compile_context>

<pallas_src>
import functools

import jax
import jax.numpy as jnp
from jax.experimental import pallas as pl
from jax.experimental.pallas import tpu as pltpu

IN_FEAT = 8
H_FEAT = 128          # module default hidden size
NUM_CLASSES = 4
BN_EPS = 1e-5

_BF16 = jnp.bfloat16
_F32 = jnp.float32


def _mm(a, b):
    return jnp.dot(a, b, preferred_element_type=_F32)


# --------------------------------------------------------------------------
# Kernel 1: GIN (3 GINConv layers) + JumpingKnowledge('cat') + global_add_pool
# --------------------------------------------------------------------------
def _gnn_kernel(npg,
                a_ref, x_ref,
                w1a_ref, b1a_ref, w1b_ref, b1b_ref,
                w2a_ref, b2a_ref, w2b_ref, b2b_ref,
                w3a_ref, b3a_ref, w3b_ref, b3b_ref,
                wjk1_ref, wjk2_ref, wjk3_ref, bjk_ref,
                pooled_ref):
    """One grid step processes TG packed graphs -> pooled [TG, H] features."""
    A = a_ref[0]            # [R, R] bf16, block-diagonal (A + I) for TG graphs
    x = x_ref[...]          # [R, IN_FEAT] bf16, R = TG * npg

    # GINConv layer 1, reordered (exact by associativity): A'(x W1a) == (A'x) W1a.
    u = _mm(x, w1a_ref[...]).astype(_BF16)                          # [R, H]
    t = jnp.maximum(_mm(A, u) + b1a_ref[...], 0.0).astype(_BF16)    # inner-MLP ReLU
    h1 = jnp.maximum(_mm(t, w1b_ref[...]) + b1b_ref[...], 0.0)      # BasicGNN ReLU
    h1b = h1.astype(_BF16)

    # GINConv layers 2/3 (self-loop (1+eps)*x, eps=0, folded into A).
    def gin_conv(hb, wa_ref, ba_ref, wb_ref, bb_ref):
        z = _mm(A, hb).astype(_BF16)                                 # neighbor sum + self
        tt = jnp.maximum(_mm(z, wa_ref[...]) + ba_ref[...], 0.0).astype(_BF16)
        return _mm(tt, wb_ref[...]) + bb_ref[...]                    # plain_last: no act

    h2b = jnp.maximum(gin_conv(h1b, w2a_ref, b2a_ref, w2b_ref, b2b_ref),
                      0.0).astype(_BF16)
    h3b = jnp.maximum(gin_conv(h2b, w3a_ref, b3a_ref, w3b_ref, b3b_ref),
                      0.0).astype(_BF16)

    # JumpingKnowledge 'cat' + Linear(3H -> H) as 3 partial matmuls.
    hjk = (_mm(h1b, wjk1_ref[...]) + _mm(h2b, wjk2_ref[...])
           + _mm(h3b, wjk3_ref[...]) + bjk_ref[...])                 # [R, H] f32

    # global_add_pool: nodes of graph g occupy rows [g*npg, (g+1)*npg).
    # TODO(synk): ragged per-graph node counts would need a scalar-prefetched
    #             node-count mask to zero padding rows before this sum.
    r, h = hjk.shape
    pooled_ref[...] = jnp.sum(hjk.reshape(r // npg, npg, h), axis=1)  # [TG, H] f32


# --------------------------------------------------------------------------
# Kernel 2: classifier MLP([H, 2H, C]), eval-mode BN folded into wc1/bc1,
# batched once over all G pooled graph embeddings.
# --------------------------------------------------------------------------
def _classifier_kernel(p_ref, wc1_ref, bc1_ref, wc2_ref, bc2_ref, out_ref):
    p = p_ref[...].astype(_BF16)                                     # [G, H]
    c = jnp.maximum(_mm(p, wc1_ref[...]) + bc1_ref[...], 0.0)        # Lin+BN(fold)+ReLU
    # TODO(synk): dropout is identity in eval mode; training-mode RNG dropout
    #             (pltpu.prng_*) is not implemented here.
    out_ref[...] = _mm(c.astype(_BF16), wc2_ref[...]) + bc2_ref[...]  # [G, C]


# --------------------------------------------------------------------------
# Wrappers
# --------------------------------------------------------------------------
def gin_forward(x_flat, a_blocks, npg, gnn_params, cls_params):
    """x_flat: [G*npg, IN_FEAT] bf16 packed node features.
       a_blocks: [nblk, R, R] bf16 block-diagonal (A + I), R = TG*npg."""
    nblk, R, _ = a_blocks.shape
    tg = R // npg
    G = nblk * tg
    H, C = H_FEAT, NUM_CLASSES

    vmem_spec = pl.BlockSpec(memory_space=pltpu.MemorySpace.VMEM)

    gnn_in_specs = [
        pl.BlockSpec((1, R, R), lambda i: (i, 0, 0)),       # block-diag A' tile
        pl.BlockSpec((R, IN_FEAT), lambda i: (i, 0)),       # packed node features
    ] + [vmem_spec] * len(gnn_params)
    pooled_spec = pl.BlockSpec((tg, H), lambda i: (i, 0))   # lane-dense (128) output

    flops_per_block = (
        2 * R * IN_FEAT * H          # x @ W1a (reordered layer 1)
        + 3 * 2 * R * R * H          # three A' @ h aggregations
        + 5 * 2 * R * H * H          # W1b, W2a, W2b, W3a, W3b
        + 3 * 2 * R * H * H)         # JK partial matmuls
    bytes_accessed = int(
        a_blocks.size * a_blocks.dtype.itemsize
        + x_flat.size * x_flat.dtype.itemsize
        + sum(p.size * p.dtype.itemsize for p in gnn_params)
        + G * H * 4)

    pooled = pl.pallas_call(
        functools.partial(_gnn_kernel, npg),
        out_shape=jax.ShapeDtypeStruct((G, H), jnp.float32),
        grid_spec=pltpu.PrefetchScalarGridSpec(
            num_scalar_prefetch=0,
            grid=(nblk,),
            in_specs=gnn_in_specs,
            out_specs=pooled_spec),
        compiler_params=pltpu.CompilerParams(
            dimension_semantics=("parallel",),
            vmem_limit_bytes=32 << 20),
        cost_estimate=pl.CostEstimate(
            flops=int(nblk * flops_per_block),
            transcendentals=0,
            bytes_accessed=bytes_accessed),
    )(a_blocks, x_flat, *gnn_params)

    logits = pl.pallas_call(
        _classifier_kernel,
        out_shape=jax.ShapeDtypeStruct((G, C), jnp.float32),
        grid_spec=pltpu.PrefetchScalarGridSpec(
            num_scalar_prefetch=0,
            grid=(1,),
            in_specs=[pl.BlockSpec((G, H), lambda i: (0, 0))]
                     + [vmem_spec] * len(cls_params),
            out_specs=pl.BlockSpec((G, C), lambda i: (0, 0))),
        compiler_params=pltpu.CompilerParams(
            vmem_limit_bytes=16 << 20),
        cost_estimate=pl.CostEstimate(
            flops=2 * G * H * 2 * H + 2 * G * 2 * H * C,
            transcendentals=0,
            bytes_accessed=int(G * H * 4 + G * C * 4
                               + sum(p.size * p.dtype.itemsize for p in cls_params))),
    )(pooled, *cls_params)

    return logits


# --------------------------------------------------------------------------
# Parameters (deterministic init mirroring the PyTorch module structure)
# --------------------------------------------------------------------------
def init_params(key):
    def lin(k, fan_in, fan_out):
        kw, kb = jax.random.split(k)
        w = jax.random.normal(kw, (fan_in, fan_out), _F32) / jnp.sqrt(float(fan_in))
        b = jax.random.normal(kb, (1, fan_out), _F32) * 0.01
        return w, b

    keys = jax.random.split(key, 9)
    w1a, b1a = lin(keys[0], IN_FEAT, H_FEAT)
    w1b, b1b = lin(keys[1], H_FEAT, H_FEAT)
    w2a, b2a = lin(keys[2], H_FEAT, H_FEAT)
    w2b, b2b = lin(keys[3], H_FEAT, H_FEAT)
    w3a, b3a = lin(keys[4], H_FEAT, H_FEAT)
    w3b, b3b = lin(keys[5], H_FEAT, H_FEAT)
    wjk, bjk = lin(keys[6], 3 * H_FEAT, H_FEAT)
    wjk1, wjk2, wjk3 = wjk[:H_FEAT], wjk[H_FEAT:2 * H_FEAT], wjk[2 * H_FEAT:]
    wc1, bc1 = lin(keys[7], H_FEAT, 2 * H_FEAT)
    # BatchNorm1d(2H) freshly-initialized running stats (eval mode).
    bng = jnp.ones((1, 2 * H_FEAT), _F32)
    bnb = jnp.zeros((1, 2 * H_FEAT), _F32)
    bnm = jnp.zeros((1, 2 * H_FEAT), _F32)
    bnv = jnp.ones((1, 2 * H_FEAT), _F32)
    wc2, bc2 = lin(keys[8], 2 * H_FEAT, NUM_CLASSES)
    return (w1a, b1a, w1b, b1b, w2a, b2a, w2b, b2b, w3a, b3a, w3b, b3b,
            wjk1, wjk2, wjk3, bjk, wc1, bc1, bng, bnb, bnm, bnv, wc2, bc2)


def fold_and_cast_params(params):
    """Fold eval-mode BN into the first classifier linear; cast weights to bf16."""
    (w1a, b1a, w1b, b1b, w2a, b2a, w2b, b2b, w3a, b3a, w3b, b3b,
     wjk1, wjk2, wjk3, bjk, wc1, bc1, bng, bnb, bnm, bnv, wc2, bc2) = params
    scale = bng * jax.lax.rsqrt(bnv + BN_EPS)              # [1, 2H]
    wc1f = wc1 * scale                                     # exact fold (eval BN)
    bc1f = (bc1 - bnm) * scale + bnb
    bf = lambda w: w.astype(_BF16)
    gnn_params = (bf(w1a), b1a, bf(w1b), b1b,
                  bf(w2a), b2a, bf(w2b), b2b,
                  bf(w3a), b3a, bf(w3b), b3b,
                  bf(wjk1), bf(wjk2), bf(wjk3), bjk)
    cls_params = (bf(wc1f), bc1f, bf(wc2), bc2)
    return gnn_params, cls_params


# --------------------------------------------------------------------------
# Pure-JAX reference mirroring the kernel's bf16-operand / f32-accumulate math
# --------------------------------------------------------------------------
def reference_forward(x_flat, a_blocks, npg, gnn_params, cls_params):
    (w1a, b1a, w1b, b1b, w2a, b2a, w2b, b2b, w3a, b3a, w3b, b3b,
     wjk1, wjk2, wjk3, bjk) = gnn_params
    wc1, bc1, wc2, bc2 = cls_params
    nblk, R, _ = a_blocks.shape
    pooled_blocks = []
    for i in range(nblk):
        A = a_blocks[i]
        x = x_flat[i * R:(i + 1) * R]
        u = _mm(x, w1a).astype(_BF16)
        t = jnp.maximum(_mm(A, u) + b1a, 0.0).astype(_BF16)
        h1b = jnp.maximum(_mm(t, w1b) + b1b, 0.0).astype(_BF16)

        def conv(hb, wa, ba, wb, bb):
            z = _mm(A, hb).astype(_BF16)
            tt = jnp.maximum(_mm(z, wa) + ba, 0.0).astype(_BF16)
            return _mm(tt, wb) + bb

        h2b = jnp.maximum(conv(h1b, w2a, b2a, w2b, b2b), 0.0).astype(_BF16)
        h3b = jnp.maximum(conv(h2b, w3a, b3a, w3b, b3b), 0.0).astype(_BF16)
        hjk = _mm(h1b, wjk1) + _mm(h2b, wjk2) + _mm(h3b, wjk3) + bjk
        pooled_blocks.append(jnp.sum(hjk.reshape(R // npg, npg, H_FEAT), axis=1))
    pooled = jnp.concatenate(pooled_blocks, axis=0)
    c = jnp.maximum(_mm(pooled.astype(_BF16), wc1) + bc1, 0.0)
    return _mm(c.astype(_BF16), wc2) + bc2


if __name__ == "__main__":
    key = jax.random.PRNGKey(0)
    k_x, k_p = jax.random.split(key)

    npg = 8                # nodes per graph
    tg = 32                # graphs packed per grid step -> 256 MXU rows
    nblk = 2               # grid steps (>=2 so both v7x TensorCores get work)
    G = tg * nblk          # 64 graphs in the batch
    N = G * npg            # 512 nodes total
    R = tg * npg           # 256 packed rows per grid step

    # Bidirectional ring graphs (0/1 adjacency).
    src_list, dst_list = [], []
    for gidx in range(G):
        base = gidx * npg
        for i in range(npg):
            j = (i + 1) % npg
            src_list += [base + i, base + j]
            dst_list += [base + j, base + i]
    src = jnp.array(src_list, jnp.int32)
    dst = jnp.array(dst_list, jnp.int32)

    x = jax.random.normal(k_x, (N, IN_FEAT), _F32)
    A_full = jnp.zeros((N, N), _F32).at[dst, src].add(1.0) + jnp.eye(N, dtype=_F32)

    # Per-step block-diagonal tiles of (A + I). Whole graphs never span a tile
    # boundary, so this is exact; entries are small integers -> exact in bf16.
    a_blocks = jnp.stack([A_full[i * R:(i + 1) * R, i * R:(i + 1) * R]
                          for i in range(nblk)]).astype(_BF16)
    x_flat = x.astype(_BF16)

    params = init_params(k_p)
    gnn_params, cls_params = fold_and_cast_params(params)

    out = gin_forward(x_flat, a_blocks, npg, gnn_params, cls_params)   # [G, C]
    out = jax.block_until_ready(out)

    ref = reference_forward(x_flat, a_blocks, npg, gnn_params, cls_params)
    assert out.shape == (G, NUM_CLASSES)
    assert jnp.allclose(out, ref, atol=5e-2, rtol=2e-2), \
        float(jnp.max(jnp.abs(out - ref)))

    print("KERNEL_OK")
</pallas_src>

<mosaic_0001>
module attributes {stable_mosaic.version = 11 : i64} {
  func.func @_gnn_kernel(%arg0: i32, %arg1: memref<1x256x256xbf16, #tpu.memory_space<vmem>>, %arg2: memref<256x8xbf16, #tpu.memory_space<vmem>>, %arg3: memref<8x128xbf16, #tpu.memory_space<vmem>>, %arg4: memref<1x128xf32, #tpu.memory_space<vmem>>, %arg5: memref<128x128xbf16, #tpu.memory_space<vmem>>, %arg6: memref<1x128xf32, #tpu.memory_space<vmem>>, %arg7: memref<128x128xbf16, #tpu.memory_space<vmem>>, %arg8: memref<1x128xf32, #tpu.memory_space<vmem>>, %arg9: memref<128x128xbf16, #tpu.memory_space<vmem>>, %arg10: memref<1x128xf32, #tpu.memory_space<vmem>>, %arg11: memref<128x128xbf16, #tpu.memory_space<vmem>>, %arg12: memref<1x128xf32, #tpu.memory_space<vmem>>, %arg13: memref<128x128xbf16, #tpu.memory_space<vmem>>, %arg14: memref<1x128xf32, #tpu.memory_space<vmem>>, %arg15: memref<128x128xbf16, #tpu.memory_space<vmem>>, %arg16: memref<128x128xbf16, #tpu.memory_space<vmem>>, %arg17: memref<128x128xbf16, #tpu.memory_space<vmem>>, %arg18: memref<1x128xf32, #tpu.memory_space<vmem>>, %arg19: memref<32x128xf32, #tpu.memory_space<vmem>>) attributes {dimension_semantics = [#tpu.dimension_semantics<parallel>], iteration_bounds = array<i64: 2>, scalar_prefetch = 0 : i64, scratch_operands = 0 : i64, tpu.core_type = #tpu.core_type<tc>, window_params = [{transform_indices = @transform_0, window_bounds = array<i64: 1, 256, 256>}, {transform_indices = @transform_1, window_bounds = array<i64: 256, 8>}, {pipeline_mode = #tpu.pipeline_mode<synchronous>, transform_indices = @transform_2, window_bounds = array<i64: 8, 128>}, {pipeline_mode = #tpu.pipeline_mode<synchronous>, transform_indices = @transform_3, window_bounds = array<i64: 1, 128>}, {pipeline_mode = #tpu.pipeline_mode<synchronous>, transform_indices = @transform_4, window_bounds = array<i64: 128, 128>}, {pipeline_mode = #tpu.pipeline_mode<synchronous>, transform_indices = @transform_5, window_bounds = array<i64: 1, 128>}, {pipeline_mode = #tpu.pipeline_mode<synchronous>, transform_indices = @transform_6, window_bounds = array<i64: 128, 128>}, {pipeline_mode = #tpu.pipeline_mode<synchronous>, transform_indices = @transform_7, window_bounds = array<i64: 1, 128>}, {pipeline_mode = #tpu.pipeline_mode<synchronous>, transform_indices = @transform_8, window_bounds = array<i64: 128, 128>}, {pipeline_mode = #tpu.pipeline_mode<synchronous>, transform_indices = @transform_9, window_bounds = array<i64: 1, 128>}, {pipeline_mode = #tpu.pipeline_mode<synchronous>, transform_indices = @transform_10, window_bounds = array<i64: 128, 128>}, {pipeline_mode = #tpu.pipeline_mode<synchronous>, transform_indices = @transform_11, window_bounds = array<i64: 1, 128>}, {pipeline_mode = #tpu.pipeline_mode<synchronous>, transform_indices = @transform_12, window_bounds = array<i64: 128, 128>}, {pipeline_mode = #tpu.pipeline_mode<synchronous>, transform_indices = @transform_13, window_bounds = array<i64: 1, 128>}, {pipeline_mode = #tpu.pipeline_mode<synchronous>, transform_indices = @transform_14, window_bounds = array<i64: 128, 128>}, {pipeline_mode = #tpu.pipeline_mode<synchronous>, transform_indices = @transform_15, window_bounds = array<i64: 128, 128>}, {pipeline_mode = #tpu.pipeline_mode<synchronous>, transform_indices = @transform_16, window_bounds = array<i64: 128, 128>}, {pipeline_mode = #tpu.pipeline_mode<synchronous>, transform_indices = @transform_17, window_bounds = array<i64: 1, 128>}, {transform_indices = @transform_18, window_bounds = array<i64: 32, 128>}]} {
    %c0 = arith.constant 0 : index
    %c0_0 = arith.constant 0 : index
    %c0_1 = arith.constant 0 : index
    %0 = vector.load %arg1[%c0, %c0_0, %c0_1] : memref<1x256x256xbf16, #tpu.memory_space<vmem>>, vector<1x256x256xbf16>
    %1 = vector.shape_cast %0 : vector<1x256x256xbf16> to vector<256x256xbf16>
    %c0_2 = arith.constant 0 : index
    %c0_3 = arith.constant 0 : index
    %2 = vector.load %arg2[%c0_2, %c0_3] : memref<256x8xbf16, #tpu.memory_space<vmem>>, vector<256x8xbf16>
    %c0_4 = arith.constant 0 : index
    %c0_5 = arith.constant 0 : index
    %3 = vector.load %arg3[%c0_4, %c0_5] : memref<8x128xbf16, #tpu.memory_space<vmem>>, vector<8x128xbf16>
    %cst = arith.constant dense<0.000000e+00> : vector<256x128xf32>
    %4 = tpu.matmul %2, %3, %cst {dimension_numbers = #tpu.dot_dimension_numbers<[1], [0], [0], [1], [0, 0, 1, 1], [], []>} : vector<256x8xbf16>, vector<8x128xbf16>, vector<256x128xf32> -> vector<256x128xf32>
    %5 = arith.truncf %4 : vector<256x128xf32> to vector<256x128xbf16>
    %cst_6 = arith.constant dense<0.000000e+00> : vector<256x128xf32>
    %6 = tpu.matmul %1, %5, %cst_6 {dimension_numbers = #tpu.dot_dimension_numbers<[1], [0], [0], [1], [0, 0, 1, 1], [], []>} : vector<256x256xbf16>, vector<256x128xbf16>, vector<256x128xf32> -> vector<256x128xf32>
    %c0_7 = arith.constant 0 : index
    %c0_8 = arith.constant 0 : index
    %7 = vector.load %arg4[%c0_7, %c0_8] : memref<1x128xf32, #tpu.memory_space<vmem>>, vector<1x128xf32>
    %8 = vector.broadcast %7 : vector<1x128xf32> to vector<256x128xf32>
    %9 = arith.addf %6, %8 : vector<256x128xf32>
    %cst_9 = arith.constant 0.000000e+00 : f32
    %10 = vector.broadcast %cst_9 : f32 to vector<256x128xf32>
    %11 = arith.maximumf %9, %10 : vector<256x128xf32>
    %12 = arith.truncf %11 : vector<256x128xf32> to vector<256x128xbf16>
    %c0_10 = arith.constant 0 : index
    %c0_11 = arith.constant 0 : index
    %13 = vector.load %arg5[%c0_10, %c0_11] : memref<128x128xbf16, #tpu.memory_space<vmem>>, vector<128x128xbf16>
    %cst_12 = arith.constant dense<0.000000e+00> : vector<256x128xf32>
    %14 = tpu.matmul %12, %13, %cst_12 {dimension_numbers = #tpu.dot_dimension_numbers<[1], [0], [0], [1], [0, 0, 1, 1], [], []>} : vector<256x128xbf16>, vector<128x128xbf16>, vector<256x128xf32> -> vector<256x128xf32>
    %c0_13 = arith.constant 0 : index
    %c0_14 = arith.constant 0 : index
    %15 = vector.load %arg6[%c0_13, %c0_14] : memref<1x128xf32, #tpu.memory_space<vmem>>, vector<1x128xf32>
    %16 = vector.broadcast %15 : vector<1x128xf32> to vector<256x128xf32>
    %17 = arith.addf %14, %16 : vector<256x128xf32>
    %cst_15 = arith.constant 0.000000e+00 : f32
    %18 = vector.broadcast %cst_15 : f32 to vector<256x128xf32>
    %19 = arith.maximumf %17, %18 : vector<256x128xf32>
    %20 = arith.truncf %19 : vector<256x128xf32> to vector<256x128xbf16>
    %cst_16 = arith.constant dense<0.000000e+00> : vector<256x128xf32>
    %21 = tpu.matmul %1, %20, %cst_16 {dimension_numbers = #tpu.dot_dimension_numbers<[1], [0], [0], [1], [0, 0, 1, 1], [], []>} : vector<256x256xbf16>, vector<256x128xbf16>, vector<256x128xf32> -> vector<256x128xf32>
    %22 = arith.truncf %21 : vector<256x128xf32> to vector<256x128xbf16>
    %c0_17 = arith.constant 0 : index
    %c0_18 = arith.constant 0 : index
    %23 = vector.load %arg7[%c0_17, %c0_18] : memref<128x128xbf16, #tpu.memory_space<vmem>>, vector<128x128xbf16>
    %cst_19 = arith.constant dense<0.000000e+00> : vector<256x128xf32>
    %24 = tpu.matmul %22, %23, %cst_19 {dimension_numbers = #tpu.dot_dimension_numbers<[1], [0], [0], [1], [0, 0, 1, 1], [], []>} : vector<256x128xbf16>, vector<128x128xbf16>, vector<256x128xf32> -> vector<256x128xf32>
    %c0_20 = arith.constant 0 : index
    %c0_21 = arith.constant 0 : index
    %25 = vector.load %arg8[%c0_20, %c0_21] : memref<1x128xf32, #tpu.memory_space<vmem>>, vector<1x128xf32>
    %26 = vector.broadcast %25 : vector<1x128xf32> to vector<256x128xf32>
    %27 = arith.addf %24, %26 : vector<256x128xf32>
    %cst_22 = arith.constant 0.000000e+00 : f32
    %28 = vector.broadcast %cst_22 : f32 to vector<256x128xf32>
    %29 = arith.maximumf %27, %28 : vector<256x128xf32>
    %30 = arith.truncf %29 : vector<256x128xf32> to vector<256x128xbf16>
    %c0_23 = arith.constant 0 : index
    %c0_24 = arith.constant 0 : index
    %31 = vector.load %arg9[%c0_23, %c0_24] : memref<128x128xbf16, #tpu.memory_space<vmem>>, vector<128x128xbf16>
    %cst_25 = arith.constant dense<0.000000e+00> : vector<256x128xf32>
    %32 = tpu.matmul %30, %31, %cst_25 {dimension_numbers = #tpu.dot_dimension_numbers<[1], [0], [0], [1], [0, 0, 1, 1], [], []>} : vector<256x128xbf16>, vector<128x128xbf16>, vector<256x128xf32> -> vector<256x128xf32>
    %c0_26 = arith.constant 0 : index
    %c0_27 = arith.constant 0 : index
    %33 = vector.load %arg10[%c0_26, %c0_27] : memref<1x128xf32, #tpu.memory_space<vmem>>, vector<1x128xf32>
    %34 = vector.broadcast %33 : vector<1x128xf32> to vector<256x128xf32>
    %35 = arith.addf %32, %34 : vector<256x128xf32>
    %cst_28 = arith.constant 0.000000e+00 : f32
    %36 = vector.broadcast %cst_28 : f32 to vector<256x128xf32>
    %37 = arith.maximumf %35, %36 : vector<256x128xf32>
    %38 = arith.truncf %37 : vector<256x128xf32> to vector<256x128xbf16>
    %cst_29 = arith.constant dense<0.000000e+00> : vector<256x128xf32>
    %39 = tpu.matmul %1, %38, %cst_29 {dimension_numbers = #tpu.dot_dimension_numbers<[1], [0], [0], [1], [0, 0, 1, 1], [], []>} : vector<256x256xbf16>, vector<256x128xbf16>, vector<256x128xf32> -> vector<256x128xf32>
    %40 = arith.truncf %39 : vector<256x128xf32> to vector<256x128xbf16>
    %c0_30 = arith.constant 0 : index
    %c0_31 = arith.constant 0 : index
    %41 = vector.load %arg11[%c0_30, %c0_31] : memref<128x128xbf16, #tpu.memory_space<vmem>>, vector<128x128xbf16>
    %cst_32 = arith.constant dense<0.000000e+00> : vector<256x128xf32>
    %42 = tpu.matmul %40, %41, %cst_32 {dimension_numbers = #tpu.dot_dimension_numbers<[1], [0], [0], [1], [0, 0, 1, 1], [], []>} : vector<256x128xbf16>, vector<128x128xbf16>, vector<256x128xf32> -> vector<256x128xf32>
    %c0_33 = arith.constant 0 : index
    %c0_34 = arith.constant 0 : index
    %43 = vector.load %arg12[%c0_33, %c0_34] : memref<1x128xf32, #tpu.memory_space<vmem>>, vector<1x128xf32>
    %44 = vector.broadcast %43 : vector<1x128xf32> to vector<256x128xf32>
    %45 = arith.addf %42, %44 : vector<256x128xf32>
    %cst_35 = arith.constant 0.000000e+00 : f32
    %46 = vector.broadcast %cst_35 : f32 to vector<256x128xf32>
    %47 = arith.maximumf %45, %46 : vector<256x128xf32>
    %48 = arith.truncf %47 : vector<256x128xf32> to vector<256x128xbf16>
    %c0_36 = arith.constant 0 : index
    %c0_37 = arith.constant 0 : index
    %49 = vector.load %arg13[%c0_36, %c0_37] : memref<128x128xbf16, #tpu.memory_space<vmem>>, vector<128x128xbf16>
    %cst_38 = arith.constant dense<0.000000e+00> : vector<256x128xf32>
    %50 = tpu.matmul %48, %49, %cst_38 {dimension_numbers = #tpu.dot_dimension_numbers<[1], [0], [0], [1], [0, 0, 1, 1], [], []>} : vector<256x128xbf16>, vector<128x128xbf16>, vector<256x128xf32> -> vector<256x128xf32>
    %c0_39 = arith.constant 0 : index
    %c0_40 = arith.constant 0 : index
    %51 = vector.load %arg14[%c0_39, %c0_40] : memref<1x128xf32, #tpu.memory_space<vmem>>, vector<1x128xf32>
    %52 = vector.broadcast %51 : vector<1x128xf32> to vector<256x128xf32>
    %53 = arith.addf %50, %52 : vector<256x128xf32>
    %cst_41 = arith.constant 0.000000e+00 : f32
    %54 = vector.broadcast %cst_41 : f32 to vector<256x128xf32>
    %55 = arith.maximumf %53, %54 : vector<256x128xf32>
    %56 = arith.truncf %55 : vector<256x128xf32> to vector<256x128xbf16>
    %c0_42 = arith.constant 0 : index
    %c0_43 = arith.constant 0 : index
    %57 = vector.load %arg15[%c0_42, %c0_43] : memref<128x128xbf16, #tpu.memory_space<vmem>>, vector<128x128xbf16>
    %cst_44 = arith.constant dense<0.000000e+00> : vector<256x128xf32>
    %58 = tpu.matmul %20, %57, %cst_44 {dimension_numbers = #tpu.dot_dimension_numbers<[1], [0], [0], [1], [0, 0, 1, 1], [], []>} : vector<256x128xbf16>, vector<128x128xbf16>, vector<256x128xf32> -> vector<256x128xf32>
    %c0_45 = arith.constant 0 : index
    %c0_46 = arith.constant 0 : index
    %59 = vector.load %arg16[%c0_45, %c0_46] : memref<128x128xbf16, #tpu.memory_space<vmem>>, vector<128x128xbf16>
    %cst_47 = arith.constant dense<0.000000e+00> : vector<256x128xf32>
    %60 = tpu.matmul %38, %59, %cst_47 {dimension_numbers = #tpu.dot_dimension_numbers<[1], [0], [0], [1], [0, 0, 1, 1], [], []>} : vector<256x128xbf16>, vector<128x128xbf16>, vector<256x128xf32> -> vector<256x128xf32>
    %61 = arith.addf %58, %60 : vector<256x128xf32>
    %c0_48 = arith.constant 0 : index
    %c0_49 = arith.constant 0 : index
    %62 = vector.load %arg17[%c0_48, %c0_49] : memref<128x128xbf16, #tpu.memory_space<vmem>>, vector<128x128xbf16>
    %cst_50 = arith.constant dense<0.000000e+00> : vector<256x128xf32>
    %63 = tpu.matmul %56, %62, %cst_50 {dimension_numbers = #tpu.dot_dimension_numbers<[1], [0], [0], [1], [0, 0, 1, 1], [], []>} : vector<256x128xbf16>, vector<128x128xbf16>, vector<256x128xf32> -> vector<256x128xf32>
    %64 = arith.addf %61, %63 : vector<256x128xf32>
    %c0_51 = arith.constant 0 : index
    %c0_52 = arith.constant 0 : index
    %65 = vector.load %arg18[%c0_51, %c0_52] : memref<1x128xf32, #tpu.memory_space<vmem>>, vector<1x128xf32>
    %66 = vector.broadcast %65 : vector<1x128xf32> to vector<256x128xf32>
    %67 = arith.addf %64, %66 : vector<256x128xf32>
    %68 = vector.shape_cast %67 : vector<256x128xf32> to vector<32x8x128xf32>
    %cst_53 = arith.constant dense<0.000000e+00> : vector<32x128xf32>
    %69 = vector.multi_reduction <add>, %68, %cst_53 [1] : vector<32x8x128xf32> to vector<32x128xf32>
    %c0_54 = arith.constant 0 : index
    %c0_55 = arith.constant 0 : index
    %70 = vector.load %arg19[%c0_54, %c0_55] : memref<32x128xf32, #tpu.memory_space<vmem>>, vector<32x128xf32>
    tpu.vector_store %arg19[%c0_54, %c0_55], %69 {strides = array<i32>} : memref<32x128xf32, #tpu.memory_space<vmem>>, vector<32x128xf32>,
    return
  }
  func.func @transform_0(%arg0: i32) -> (i32, i32, i32) {
    %c0_i32 = arith.constant 0 : i32
    %c0_i32_0 = arith.constant 0 : i32
    %c0_i32_1 = arith.constant 0 : i32
    return %arg0, %c0_i32, %c0_i32_0 : i32, i32, i32
  }
  func.func @transform_1(%arg0: i32) -> (i32, i32) {
    %c0_i32 = arith.constant 0 : i32
    %c0_i32_0 = arith.constant 0 : i32
    return %arg0, %c0_i32 : i32, i32
  }
  func.func @transform_2(%arg0: i32) -> (i32, i32) {
    %c0_i32 = arith.constant 0 : i32
    %c0_i32_0 = arith.constant 0 : i32
    %c0_i32_1 = arith.constant 0 : i32
    return %c0_i32, %c0_i32_0 : i32, i32
  }
  func.func @transform_3(%arg0: i32) -> (i32, i32) {
    %c0_i32 = arith.constant 0 : i32
    %c0_i32_0 = arith.constant 0 : i32
    %c0_i32_1 = arith.constant 0 : i32
    return %c0_i32, %c0_i32_0 : i32, i32
  }
  func.func @transform_4(%arg0: i32) -> (i32, i32) {
    %c0_i32 = arith.constant 0 : i32
    %c0_i32_0 = arith.constant 0 : i32
    %c0_i32_1 = arith.constant 0 : i32
    return %c0_i32, %c0_i32_0 : i32, i32
  }
  func.func @transform_5(%arg0: i32) -> (i32, i32) {
    %c0_i32 = arith.constant 0 : i32
    %c0_i32_0 = arith.constant 0 : i32
    %c0_i32_1 = arith.constant 0 : i32
    return %c0_i32, %c0_i32_0 : i32, i32
  }
  func.func @transform_6(%arg0: i32) -> (i32, i32) {
    %c0_i32 = arith.constant 0 : i32
    %c0_i32_0 = arith.constant 0 : i32
    %c0_i32_1 = arith.constant 0 : i32
    return %c0_i32, %c0_i32_0 : i32, i32
  }
  func.func @transform_7(%arg0: i32) -> (i32, i32) {
    %c0_i32 = arith.constant 0 : i32
    %c0_i32_0 = arith.constant 0 : i32
    %c0_i32_1 = arith.constant 0 : i32
    return %c0_i32, %c0_i32_0 : i32, i32
  }
  func.func @transform_8(%arg0: i32) -> (i32, i32) {
    %c0_i32 = arith.constant 0 : i32
    %c0_i32_0 = arith.constant 0 : i32
    %c0_i32_1 = arith.constant 0 : i32
    return %c0_i32, %c0_i32_0 : i32, i32
  }
  func.func @transform_9(%arg0: i32) -> (i32, i32) {
    %c0_i32 = arith.constant 0 : i32
    %c0_i32_0 = arith.constant 0 : i32
    %c0_i32_1 = arith.constant 0 : i32
    return %c0_i32, %c0_i32_0 : i32, i32
  }
  func.func @transform_10(%arg0: i32) -> (i32, i32) {
    %c0_i32 = arith.constant 0 : i32
    %c0_i32_0 = arith.constant 0 : i32
    %c0_i32_1 = arith.constant 0 : i32
    return %c0_i32, %c0_i32_0 : i32, i32
  }
  func.func @transform_11(%arg0: i32) -> (i32, i32) {
    %c0_i32 = arith.constant 0 : i32
    %c0_i32_0 = arith.constant 0 : i32
    %c0_i32_1 = arith.constant 0 : i32
    return %c0_i32, %c0_i32_0 : i32, i32
  }
  func.func @transform_12(%arg0: i32) -> (i32, i32) {
    %c0_i32 = arith.constant 0 : i32
    %c0_i32_0 = arith.constant 0 : i32
    %c0_i32_1 = arith.constant 0 : i32
    return %c0_i32, %c0_i32_0 : i32, i32
  }
  func.func @transform_13(%arg0: i32) -> (i32, i32) {
    %c0_i32 = arith.constant 0 : i32
    %c0_i32_0 = arith.constant 0 : i32
    %c0_i32_1 = arith.constant 0 : i32
    return %c0_i32, %c0_i32_0 : i32, i32
  }
  func.func @transform_14(%arg0: i32) -> (i32, i32) {
    %c0_i32 = arith.constant 0 : i32
    %c0_i32_0 = arith.constant 0 : i32
    %c0_i32_1 = arith.constant 0 : i32
    return %c0_i32, %c0_i32_0 : i32, i32
  }
  func.func @transform_15(%arg0: i32) -> (i32, i32) {
    %c0_i32 = arith.constant 0 : i32
    %c0_i32_0 = arith.constant 0 : i32
    %c0_i32_1 = arith.constant 0 : i32
    return %c0_i32, %c0_i32_0 : i32, i32
  }
  func.func @transform_16(%arg0: i32) -> (i32, i32) {
    %c0_i32 = arith.constant 0 : i32
    %c0_i32_0 = arith.constant 0 : i32
    %c0_i32_1 = arith.constant 0 : i32
    return %c0_i32, %c0_i32_0 : i32, i32
  }
  func.func @transform_17(%arg0: i32) -> (i32, i32) {
    %c0_i32 = arith.constant 0 : i32
    %c0_i32_0 = arith.constant 0 : i32
    %c0_i32_1 = arith.constant 0 : i32
    return %c0_i32, %c0_i32_0 : i32, i32
  }
  func.func @transform_18(%arg0: i32) -> (i32, i32) {
    %c0_i32 = arith.constant 0 : i32
    %c0_i32_0 = arith.constant 0 : i32
    return %arg0, %c0_i32 : i32, i32
  }
}

</mosaic_0001>

<llo_original>
// kernel: tpu_custom_call.1
$region0: #{tpu_custom_call.1}
  #allocation0 [shape = 'u32[]', space=smem, size = 0x4, offset = 0x4, fixed_abs, tag = 'smem constant byte address 0x4 - core index']
  #allocation1 [shape = 'u32[72,128]{1,0:T(1,128)}', space=vmem, size = 0x9000, scoped, tag = 'internal scratch']
  %s0 = inlined_call_operand.hbm [shape: bf16[2,256,256], index: 0, kind: input, shape index: {}]
  %s1 = inlined_call_operand.vmem [shape: bf16[512,8], index: 1, kind: input, shape index: {}]
  %s2 = inlined_call_operand.vmem [shape: bf16[8,128], index: 2, kind: input, shape index: {}]
  %s3 = inlined_call_operand.vmem [shape: f32[1,128], index: 3, kind: input, shape index: {}]
  %s4 = inlined_call_operand.vmem [shape: bf16[128,128], index: 4, kind: input, shape index: {}]
  %s5 = inlined_call_operand.vmem [shape: f32[1,128], index: 5, kind: input, shape index: {}]
  %s6 = inlined_call_operand.vmem [shape: bf16[128,128], index: 6, kind: input, shape index: {}]
  %s7 = inlined_call_operand.vmem [shape: f32[1,128], index: 7, kind: input, shape index: {}]
  %s8 = inlined_call_operand.vmem [shape: bf16[128,128], index: 8, kind: input, shape index: {}]
  %s9 = inlined_call_operand.vmem [shape: f32[1,128], index: 9, kind: input, shape index: {}]
  %s10 = inlined_call_operand.vmem [shape: bf16[128,128], index: 10, kind: input, shape index: {}]
  %s11 = inlined_call_operand.vmem [shape: f32[1,128], index: 11, kind: input, shape index: {}]
  %s12 = inlined_call_operand.hbm [shape: bf16[128,128], index: 12, kind: input, shape index: {}]
  %s13 = inlined_call_operand.vmem [shape: f32[1,128], index: 13, kind: input, shape index: {}]
  %s14 = inlined_call_operand.hbm [shape: bf16[128,128], index: 14, kind: input, shape index: {}]
  %s15 = inlined_call_operand.hbm [shape: bf16[128,128], index: 15, kind: input, shape index: {}]
  %s16 = inlined_call_operand.hbm [shape: bf16[128,128], index: 16, kind: input, shape index: {}]
  %s17 = inlined_call_operand.vmem [shape: f32[1,128], index: 17, kind: input, shape index: {}]
  %s18 = inlined_call_operand.hbm [shape: f32[64,128], index: 18, kind: output, shape index: {}]
  %s19 = sld [smem:[#allocation0]]
  $region125: #{tpu_custom_call.1} parent=0
    _
  %s21 = ssub.s32 1, %s19
  %s22 = scalar_select 0, %s21, %s19
  $region1: #{tpu_custom_call.1} parent=0
    #allocation2 [shape = 'u8[262144]{0}', space=vmem, size = 0x40000, scoped, tag = 'input window, operand 0']
    #allocation3 [shape = 's32[2]{0}', space=sflag, size = 0x8, scoped, tag = 'scoped memory for tpu_custom_call.1']
    #allocation4 [shape = 's32[2]{0}', space=sflag, size = 0x8, scoped, tag = 'scoped memory for tpu_custom_call.1']
    #allocation5 [shape = 'u8[32768]{0}', space=vmem, size = 0x8000, scoped, tag = 'input window, operand 12, single buffered']
    #allocation6 [shape = 's32[1]{0}', space=sflag, size = 0x4, scoped, tag = 'scoped memory for tpu_custom_call.1']
    #allocation7 [shape = 'u8[32768]{0}', space=vmem, size = 0x8000, scoped, tag = 'input window, operand 14, single buffered']
    #allocation8 [shape = 'u8[32768]{0}', space=vmem, size = 0x8000, scoped, tag = 'input window, operand 15, single buffered']
    #allocation9 [shape = 's32[1]{0}', space=sflag, size = 0x4, scoped, tag = 'scoped memory for tpu_custom_call.1']
    #allocation10 [shape = 'u8[32768]{0}', space=vmem, size = 0x8000, scoped, tag = 'input window, operand 16, single buffered']
    #allocation11 [shape = 'u8[32768]{0}', space=vmem, size = 0x8000, scoped, tag = 'output window, operand 0']
    %23 = vsyncpa [#allocation3], 0
    %s24 = scalar_lea.sflag [#allocation3], 1
    %25 = vsyncpa %s24, 0
    %26 = vsyncpa [#allocation6], 0
    %27 = vsyncpa [#allocation9], 0
    %28 = vsyncpa [#allocation4], 0
    %s29 = scalar_lea.sflag [#allocation4], 1
    %30 = vsyncpa %s29, 0
    loop: start=0, step=1, limit=4
    $region2: #{tpu_custom_call.1} parent=1 // loop_pre_header
      _
    $region3: #{tpu_custom_call.1} parent=1 // loop_header
      %s32 = sphi 0, %s36
      %p33 = scmp.ge.s32.totalorder %s32, 4
      %s42 = sphi 0, %s44
      %s45 = sphi 0, %s42
      %s46 = sphi 0, %s45
      %s62 = sphi 0, %s46
      %s68 = sphi 0, %s70
      %s71 = sphi 0, %s68
      %s72 = sphi 0, %s71
      %s88 = sphi 0, %s72
      %s92 = sphi 0, %s92
      %s94 = sphi 0, %s92
      %s95 = sphi 0, %s94
      %s109 = sphi 0, %s95
      %s113 = sphi 0, %s113
      %s115 = sphi 0, %s113
      %s116 = sphi 0, %s115
      %s130 = sphi 0, %s116
      %s134 = sphi 0, %s134
      %s136 = sphi 0, %s134
      %s137 = sphi 0, %s136
      %s151 = sphi 0, %s137
      %s155 = sphi 0, %s155
      %s157 = sphi 0, %s155
      %s158 = sphi 0, %s157
      %s172 = sphi 0, %s158
      %s176 = sphi 0, %s176
      %s178 = sphi 0, %s176
      %s179 = sphi 0, %s178
      %s193 = sphi 0, %s179
      %s197 = sphi 0, %s197
      %s199 = sphi 0, %s197
      %s200 = sphi 0, %s199
      %s214 = sphi 0, %s200
      %s218 = sphi 0, %s218
      %s220 = sphi 0, %s218
      %s221 = sphi 0, %s220
      %s235 = sphi 0, %s221
      %s239 = sphi 0, %s239
      %s241 = sphi 0, %s239
      %s242 = sphi 0, %s241
      %s256 = sphi 0, %s242
      %s260 = sphi 0, %s260
      %s262 = sphi 0, %s260
      %s263 = sphi 0, %s262
      %s277 = sphi 0, %s263
      %s281 = sphi 0, %s281
      %s283 = sphi 0, %s281
      %s284 = sphi 0, %s283
      %s298 = sphi 0, %s284
      %s302 = sphi 0, %s302
      %s304 = sphi 0, %s302
      %s305 = sphi 0, %s304
      %s319 = sphi 0, %s305
      %s323 = sphi 0, %s323
      %s325 = sphi 0, %s323
      %s326 = sphi 0, %s325
      %s340 = sphi 0, %s326
      %s344 = sphi 0, %s344
      %s346 = sphi 0, %s344
      %s347 = sphi 0, %s346
      %s361 = sphi 0, %s347
      %s365 = sphi 0, %s365
      %s367 = sphi 0, %s365
      %s368 = sphi 0, %s367
      %s382 = sphi 0, %s368
      %s386 = sphi 0, %s386
      %s388 = sphi 0, %s386
      %s389 = sphi 0, %s388
      %s403 = sphi 0, %s389
      %s407 = sphi 0, %s407
      %s409 = sphi 0, %s407
      %s410 = sphi 0, %s409
      %s424 = sphi 0, %s410
      %s430 = sphi 0, %s432
      %s433 = sphi 0, %s430
      %s434 = sphi 0, %s433
      %s450 = sphi 0, %s434
    $region4: #{tpu_custom_call.1} parent=1 // loop_header_branch
      %35 = sbr.rel (%p33) target = $region8
    $region5: #{tpu_custom_call.1} parent=1 // loop_body
      %s37 = ssub.s32 %s32, 1
      %s38 = ssub.s32 %s32, 2
      %s39 = sadd.s32 %s32, 1
      %s40 = ssub.s32 %s32, %s39
      %p41 = scmp.eq.s32.totalorder %s40, 0
      %s43 = sadd.s32 %s42, 1
      %s44 = scalar_select %p41, %s42, %s43
      %p47 = pneg %p41
      %p48 = scmp.eq.s32.totalorder %s32, 1
      %p49 = por %p47, %p48
      %p50 = scmp.ne.s32.totalorder %s42, %s45
      %p51 = scmp.eq.s32.totalorder %s32, 0
      %p52 = por %p50, %p51
      %p53 = scmp.ne.s32.totalorder %s42, %s45
      %p54 = scmp.eq.s32.totalorder %s37, 1
      %p55 = por %p53, %p54
      %p56 = scmp.ne.s32.totalorder %s45, %s46
      %p57 = scmp.eq.s32.totalorder %s37, 0
      %p58 = por %p56, %p57
      %p59 = scmp.ne.s32.totalorder %s45, %s46
      %p60 = scmp.eq.s32.totalorder %s38, 1
      %p61 = por %p59, %p60
      %p63 = scmp.ne.s32.totalorder %s46, %s62
      %p64 = scmp.eq.s32.totalorder %s38, 0
      %p65 = por %p63, %p64
      %s66 = ssub.s32 %s32, %s39
      %p67 = scmp.eq.s32.totalorder %s66, 0
      %s69 = sadd.s32 %s68, 1
      %s70 = scalar_select %p67, %s68, %s69
      %p73 = pneg %p67
      %p74 = scmp.eq.s32.totalorder %s32, 1
      %p75 = por %p73, %p74
      %p76 = scmp.ne.s32.totalorder %s68, %s71
      %p77 = scmp.eq.s32.totalorder %s32, 0
      %p78 = por %p76, %p77
      %p79 = scmp.ne.s32.totalorder %s68, %s71
      %p80 = scmp.eq.s32.totalorder %s37, 1
      %p81 = por %p79, %p80
      %p82 = scmp.ne.s32.totalorder %s71, %s72
      %p83 = scmp.eq.s32.totalorder %s37, 0
      %p84 = por %p82, %p83
      %p85 = scmp.ne.s32.totalorder %s71, %s72
      %p86 = scmp.eq.s32.totalorder %s38, 1
      %p87 = por %p85, %p86
      %p89 = scmp.ne.s32.totalorder %s72, %s88
      %p90 = scmp.eq.s32.totalorder %s38, 0
      %p91 = por %p89, %p90
      %s93 = sadd.s32 %s92, 1
      %p96 = scmp.eq.s32.totalorder %s32, 1
      %p97 = scmp.ne.s32.totalorder %s92, %s94
      %p98 = scmp.eq.s32.totalorder %s32, 0
      %p99 = por %p97, %p98
      %p100 = scmp.ne.s32.totalorder %s92, %s94
      %p101 = scmp.eq.s32.totalorder %s37, 1
      %p102 = por %p100, %p101
      %p103 = scmp.ne.s32.totalorder %s94, %s95
      %p104 = scmp.eq.s32.totalorder %s37, 0
      %p105 = por %p103, %p104
      %p106 = scmp.ne.s32.totalorder %s94, %s95
      %p107 = scmp.eq.s32.totalorder %s38, 1
      %p108 = por %p106, %p107
      %p110 = scmp.ne.s32.totalorder %s95, %s109
      %p111 = scmp.eq.s32.totalorder %s38, 0
      %p112 = por %p110, %p111
      %s114 = sadd.s32 %s113, 1
      %p117 = scmp.eq.s32.totalorder %s32, 1
      %p118 = scmp.ne.s32.totalorder %s113, %s115
      %p119 = scmp.eq.s32.totalorder %s32, 0
      %p120 = por %p118, %p119
      %p121 = scmp.ne.s32.totalorder %s113, %s115
      %p122 = scmp.eq.s32.totalorder %s37, 1
      %p123 = por %p121, %p122
      %p124 = scmp.ne.s32.totalorder %s115, %s116
      %p125 = scmp.eq.s32.totalorder %s37, 0
      %p126 = por %p124, %p125
      %p127 = scmp.ne.s32.totalorder %s115, %s116
      %p128 = scmp.eq.s32.totalorder %s38, 1
      %p129 = por %p127, %p128
      %p131 = scmp.ne.s32.totalorder %s116, %s130
      %p132 = scmp.eq.s32.totalorder %s38, 0
      %p133 = por %p131, %p132
      %s135 = sadd.s32 %s134, 1
      %p138 = scmp.eq.s32.totalorder %s32, 1
      %p139 = scmp.ne.s32.totalorder %s134, %s136
      %p140 = scmp.eq.s32.totalorder %s32, 0
      %p141 = por %p139, %p140
      %p142 = scmp.ne.s32.totalorder %s134, %s136
      %p143 = scmp.eq.s32.totalorder %s37, 1
      %p144 = por %p142, %p143
      %p145 = scmp.ne.s32.totalorder %s136, %s137
      %p146 = scmp.eq.s32.totalorder %s37, 0
      %p147 = por %p145, %p146
      %p148 = scmp.ne.s32.totalorder %s136, %s137
      %p149 = scmp.eq.s32.totalorder %s38, 1
      %p150 = por %p148, %p149
      %p152 = scmp.ne.s32.totalorder %s137, %s151
      %p153 = scmp.eq.s32.totalorder %s38, 0
      %p154 = por %p152, %p153
      %s156 = sadd.s32 %s155, 1
      %p159 = scmp.eq.s32.totalorder %s32, 1
      %p160 = scmp.ne.s32.totalorder %s155, %s157
      %p161 = scmp.eq.s32.totalorder %s32, 0
      %p162 = por %p160, %p161
      %p163 = scmp.ne.s32.totalorder %s155, %s157
      %p164 = scmp.eq.s32.totalorder %s37, 1
      %p165 = por %p163, %p164
      %p166 = scmp.ne.s32.totalorder %s157, %s158
      %p167 = scmp.eq.s32.totalorder %s37, 0
      %p168 = por %p166, %p167
      %p169 = scmp.ne.s32.totalorder %s157, %s158
      %p170 = scmp.eq.s32.totalorder %s38, 1
      %p171 = por %p169, %p170
      %p173 = scmp.ne.s32.totalorder %s158, %s172
      %p174 = scmp.eq.s32.totalorder %s38, 0
      %p175 = por %p173, %p174
      %s177 = sadd.s32 %s176, 1
      %p180 = scmp.eq.s32.totalorder %s32, 1
      %p181 = scmp.ne.s32.totalorder %s176, %s178
      %p182 = scmp.eq.s32.totalorder %s32, 0
      %p183 = por %p181, %p182
      %p184 = scmp.ne.s32.totalorder %s176, %s178
      %p185 = scmp.eq.s32.totalorder %s37, 1
      %p186 = por %p184, %p185
      %p187 = scmp.ne.s32.totalorder %s178, %s179
      %p188 = scmp.eq.s32.totalorder %s37, 0
      %p189 = por %p187, %p188
      %p190 = scmp.ne.s32.totalorder %s178, %s179
      %p191 = scmp.eq.s32.totalorder %s38, 1
      %p192 = por %p190, %p191
      %p194 = scmp.ne.s32.totalorder %s179, %s193
      %p195 = scmp.eq.s32.totalorder %s38, 0
      %p196 = por %p194, %p195
      %s198 = sadd.s32 %s197, 1
      %p201 = scmp.eq.s32.totalorder %s32, 1
      %p202 = scmp.ne.s32.totalorder %s197, %s199
      %p203 = scmp.eq.s32.totalorder %s32, 0
      %p204 = por %p202, %p203
      %p205 = scmp.ne.s32.totalorder %s197, %s199
      %p206 = scmp.eq.s32.totalorder %s37, 1
      %p207 = por %p205, %p206
      %p208 = scmp.ne.s32.totalorder %s199, %s200
      %p209 = scmp.eq.s32.totalorder %s37, 0
      %p210 = por %p208, %p209
      %p211 = scmp.ne.s32.totalorder %s199, %s200
      %p212 = scmp.eq.s32.totalorder %s38, 1
      %p213 = por %p211, %p212
      %p215 = scmp.ne.s32.totalorder %s200, %s214
      %p216 = scmp.eq.s32.totalorder %s38, 0
      %p217 = por %p215, %p216
      %s219 = sadd.s32 %s218, 1
      %p222 = scmp.eq.s32.totalorder %s32, 1
      %p223 = scmp.ne.s32.totalorder %s218, %s220
      %p224 = scmp.eq.s32.totalorder %s32, 0
      %p225 = por %p223, %p224
      %p226 = scmp.ne.s32.totalorder %s218, %s220
      %p227 = scmp.eq.s32.totalorder %s37, 1
      %p228 = por %p226, %p227
      %p229 = scmp.ne.s32.totalorder %s220, %s221
      %p230 = scmp.eq.s32.totalorder %s37, 0
      %p231 = por %p229, %p230
      %p232 = scmp.ne.s32.totalorder %s220, %s221
      %p233 = scmp.eq.s32.totalorder %s38, 1
      %p234 = por %p232, %p233
      %p236 = scmp.ne.s32.totalorder %s221, %s235
      %p237 = scmp.eq.s32.totalorder %s38, 0
      %p238 = por %p236, %p237
      %s240 = sadd.s32 %s239, 1
      %p243 = scmp.eq.s32.totalorder %s32, 1
      %p244 = scmp.ne.s32.totalorder %s239, %s241
      %p245 = scmp.eq.s32.totalorder %s32, 0
      %p246 = por %p244, %p245
      %p247 = scmp.ne.s32.totalorder %s239, %s241
      %p248 = scmp.eq.s32.totalorder %s37, 1
      %p249 = por %p247, %p248
      %p250 = scmp.ne.s32.totalorder %s241, %s242
      %p251 = scmp.eq.s32.totalorder %s37, 0
      %p252 = por %p250, %p251
      %p253 = scmp.ne.s32.totalorder %s241, %s242
      %p254 = scmp.eq.s32.totalorder %s38, 1
      %p255 = por %p253, %p254
      %p257 = scmp.ne.s32.totalorder %s242, %s256
      %p258 = scmp.eq.s32.totalorder %s38, 0
      %p259 = por %p257, %p258
      %s261 = sadd.s32 %s260, 1
      %p264 = scmp.eq.s32.totalorder %s32, 1
      %p265 = scmp.ne.s32.totalorder %s260, %s262
      %p266 = scmp.eq.s32.totalorder %s32, 0
      %p267 = por %p265, %p266
      %p268 = scmp.ne.s32.totalorder %s260, %s262
      %p269 = scmp.eq.s32.totalorder %s37, 1
      %p270 = por %p268, %p269
      %p271 = scmp.ne.s32.totalorder %s262, %s263
      %p272 = scmp.eq.s32.totalorder %s37, 0
      %p273 = por %p271, %p272
      %p274 = scmp.ne.s32.totalorder %s262, %s263
      %p275 = scmp.eq.s32.totalorder %s38, 1
      %p276 = por %p274, %p275
      %p278 = scmp.ne.s32.totalorder %s263, %s277
      %p279 = scmp.eq.s32.totalorder %s38, 0
      %p280 = por %p278, %p279
      %s282 = sadd.s32 %s281, 1
      %p285 = scmp.eq.s32.totalorder %s32, 1
      %p286 = scmp.ne.s32.totalorder %s281, %s283
      %p287 = scmp.eq.s32.totalorder %s32, 0
      %p288 = por %p286, %p287
      %p289 = scmp.ne.s32.totalorder %s281, %s283
      %p290 = scmp.eq.s32.totalorder %s37, 1
      %p291 = por %p289, %p290
      %p292 = scmp.ne.s32.totalorder %s283, %s284
      %p293 = scmp.eq.s32.totalorder %s37, 0
      %p294 = por %p292, %p293
      %p295 = scmp.ne.s32.totalorder %s283, %s284
      %p296 = scmp.eq.s32.totalorder %s38, 1
      %p297 = por %p295, %p296
      %p299 = scmp.ne.s32.totalorder %s284, %s298
      %p300 = scmp.eq.s32.totalorder %s38, 0
      %p301 = por %p299, %p300
      %s303 = sadd.s32 %s302, 1
      %p306 = scmp.eq.s32.totalorder %s32, 1
      %p307 = scmp.ne.s32.totalorder %s302, %s304
      %p308 = scmp.eq.s32.totalorder %s32, 0
      %p309 = por %p307, %p308
      %p310 = scmp.ne.s32.totalorder %s302, %s304
      %p311 = scmp.eq.s32.totalorder %s37, 1
      %p312 = por %p310, %p311
      %p313 = scmp.ne.s32.totalorder %s304, %s305
      %p314 = scmp.eq.s32.totalorder %s37, 0
      %p315 = por %p313, %p314
      %p316 = scmp.ne.s32.totalorder %s304, %s305
      %p317 = scmp.eq.s32.totalorder %s38, 1
      %p318 = por %p316, %p317
      %p320 = scmp.ne.s32.totalorder %s305, %s319
      %p321 = scmp.eq.s32.totalorder %s38, 0
      %p322 = por %p320, %p321
      %s324 = sadd.s32 %s323, 1
      %p327 = scmp.eq.s32.totalorder %s32, 1
      %p328 = scmp.ne.s32.totalorder %s323, %s325
      %p329 = scmp.eq.s32.totalorder %s32, 0
      %p330 = por %p328, %p329
      %p331 = scmp.ne.s32.totalorder %s323, %s325
      %p332 = scmp.eq.s32.totalorder %s37, 1
      %p333 = por %p331, %p332
      %p334 = scmp.ne.s32.totalorder %s325, %s326
      %p335 = scmp.eq.s32.totalorder %s37, 0
      %p336 = por %p334, %p335
      %p337 = scmp.ne.s32.totalorder %s325, %s326
      %p338 = scmp.eq.s32.totalorder %s38, 1
      %p339 = por %p337, %p338
      %p341 = scmp.ne.s32.totalorder %s326, %s340
      %p342 = scmp.eq.s32.totalorder %s38, 0
      %p343 = por %p341, %p342
      %s345 = sadd.s32 %s344, 1
      %p348 = scmp.eq.s32.totalorder %s32, 1
      %p349 = scmp.ne.s32.totalorder %s344, %s346
      %p350 = scmp.eq.s32.totalorder %s32, 0
      %p351 = por %p349, %p350
      %p352 = scmp.ne.s32.totalorder %s344, %s346
      %p353 = scmp.eq.s32.totalorder %s37, 1
      %p354 = por %p352, %p353
      %p355 = scmp.ne.s32.totalorder %s346, %s347
      %p356 = scmp.eq.s32.totalorder %s37, 0
      %p357 = por %p355, %p356
      %p358 = scmp.ne.s32.totalorder %s346, %s347
      %p359 = scmp.eq.s32.totalorder %s38, 1
      %p360 = por %p358, %p359
      %p362 = scmp.ne.s32.totalorder %s347, %s361
      %p363 = scmp.eq.s32.totalorder %s38, 0
      %p364 = por %p362, %p363
      %s366 = sadd.s32 %s365, 1
      %p369 = scmp.eq.s32.totalorder %s32, 1
      %p370 = scmp.ne.s32.totalorder %s365, %s367
      %p371 = scmp.eq.s32.totalorder %s32, 0
      %p372 = por %p370, %p371
      %p373 = scmp.ne.s32.totalorder %s365, %s367
      %p374 = scmp.eq.s32.totalorder %s37, 1
      %p375 = por %p373, %p374
      %p376 = scmp.ne.s32.totalorder %s367, %s368
      %p377 = scmp.eq.s32.totalorder %s37, 0
      %p378 = por %p376, %p377
      %p379 = scmp.ne.s32.totalorder %s367, %s368
      %p380 = scmp.eq.s32.totalorder %s38, 1
      %p381 = por %p379, %p380
      %p383 = scmp.ne.s32.totalorder %s368, %s382
      %p384 = scmp.eq.s32.totalorder %s38, 0
      %p385 = por %p383, %p384
      %s387 = sadd.s32 %s386, 1
      %p390 = scmp.eq.s32.totalorder %s32, 1
      %p391 = scmp.ne.s32.totalorder %s386, %s388
      %p392 = scmp.eq.s32.totalorder %s32, 0
      %p393 = por %p391, %p392
      %p394 = scmp.ne.s32.totalorder %s386, %s388
      %p395 = scmp.eq.s32.totalorder %s37, 1
      %p396 = por %p394, %p395
      %p397 = scmp.ne.s32.totalorder %s388, %s389
      %p398 = scmp.eq.s32.totalorder %s37, 0
      %p399 = por %p397, %p398
      %p400 = scmp.ne.s32.totalorder %s388, %s389
      %p401 = scmp.eq.s32.totalorder %s38, 1
      %p402 = por %p400, %p401
      %p404 = scmp.ne.s32.totalorder %s389, %s403
      %p405 = scmp.eq.s32.totalorder %s38, 0
      %p406 = por %p404, %p405
      %s408 = sadd.s32 %s407, 1
      %p411 = scmp.eq.s32.totalorder %s32, 1
      %p412 = scmp.ne.s32.totalorder %s407, %s409
      %p413 = scmp.eq.s32.totalorder %s32, 0
      %p414 = por %p412, %p413
      %p415 = scmp.ne.s32.totalorder %s407, %s409
      %p416 = scmp.eq.s32.totalorder %s37, 1
      %p417 = por %p415, %p416
      %p418 = scmp.ne.s32.totalorder %s409, %s410
      %p419 = scmp.eq.s32.totalorder %s37, 0
      %p420 = por %p418, %p419
      %p421 = scmp.ne.s32.totalorder %s409, %s410
      %p422 = scmp.eq.s32.totalorder %s38, 1
      %p423 = por %p421, %p422
      %p425 = scmp.ne.s32.totalorder %s410, %s424
      %p426 = scmp.eq.s32.totalorder %s38, 0
      %p427 = por %p425, %p426
      %s428 = ssub.s32 %s32, %s39
      %p429 = scmp.eq.s32.totalorder %s428, 0
      %s431 = sadd.s32 %s430, 1
      %s432 = scalar_select %p429, %s430, %s431
      %p435 = pneg %p429
      %p436 = scmp.eq.s32.totalorder %s32, 1
      %p437 = por %p435, %p436
      %p438 = scmp.ne.s32.totalorder %s430, %s433
      %p439 = scmp.eq.s32.totalorder %s32, 0
      %p440 = por %p438, %p439
      %p441 = scmp.ne.s32.totalorder %s430, %s433
      %p442 = scmp.eq.s32.totalorder %s37, 1
      %p443 = por %p441, %p442
      %p444 = scmp.ne.s32.totalorder %s433, %s434
      %p445 = scmp.eq.s32.totalorder %s37, 0
      %p446 = por %p444, %p445
      %p447 = scmp.ne.s32.totalorder %s433, %s434
      %p448 = scmp.eq.s32.totalorder %s38, 1
      %p449 = por %p447, %p448
      %p451 = scmp.ne.s32.totalorder %s434, %s450
      %p452 = scmp.eq.s32.totalorder %s38, 0
      %p453 = por %p451, %p452
      %p454 = scmp.le.s32.totalorder 1, %s32
      %p455 = scmp.lt.s32.totalorder %s32, 3
      %p456 = pnand %p454, %p455
      %p457 = pneg %p456
      // Predicated region
      $region9: #{tpu_custom_call.1} parent=5 // pred_check
        _
      $region10: #{tpu_custom_call.1} parent=5 // pred_check_branch
        %459 = sbr.rel (%p456) target = $region12
      $region11: #{tpu_custom_call.1} parent=5 // pred_region
        %s460 = ssub.s32 %s32, 1
        // Predicated region
        $region13: #{tpu_custom_call.1} parent=11 // pred_check
          %p461 = pneg %p105
        $region14: #{tpu_custom_call.1} parent=11 // pred_check_branch
          %463 = sbr.rel (%p461) target = $region16
        $region15: #{tpu_custom_call.1} parent=11 // pred_region
          _
        $region16: #{tpu_custom_call.1} parent=11 // pred_fallthru
          _
        // Predicated region
        $region17: #{tpu_custom_call.1} parent=11 // pred_check
          %p464 = pneg %p126
        $region18: #{tpu_custom_call.1} parent=11 // pred_check_branch
          %466 = sbr.rel (%p464) target = $region20
        $region19: #{tpu_custom_call.1} parent=11 // pred_region
          _
        $region20: #{tpu_custom_call.1} parent=11 // pred_fallthru
          _
        // Predicated region
        $region21: #{tpu_custom_call.1} parent=11 // pred_check
          %p467 = pneg %p147
        $region22: #{tpu_custom_call.1} parent=11 // pred_check_branch
          %469 = sbr.rel (%p467) target = $region24
        $region23: #{tpu_custom_call.1} parent=11 // pred_region
          _
        $region24: #{tpu_custom_call.1} parent=11 // pred_fallthru
          _
        // Predicated region
        $region25: #{tpu_custom_call.1} parent=11 // pred_check
          %p470 = pneg %p168
        $region26: #{tpu_custom_call.1} parent=11 // pred_check_branch
          %472 = sbr.rel (%p470) target = $region28
        $region27: #{tpu_custom_call.1} parent=11 // pred_region
          _
        $region28: #{tpu_custom_call.1} parent=11 // pred_fallthru
          _
        // Predicated region
        $region29: #{tpu_custom_call.1} parent=11 // pred_check
          %p473 = pneg %p189
        $region30: #{tpu_custom_call.1} parent=11 // pred_check_branch
          %475 = sbr.rel (%p473) target = $region32
        $region31: #{tpu_custom_call.1} parent=11 // pred_region
          _
        $region32: #{tpu_custom_call.1} parent=11 // pred_fallthru
          _
        // Predicated region
        $region33: #{tpu_custom_call.1} parent=11 // pred_check
          %p476 = pneg %p210
        $region34: #{tpu_custom_call.1} parent=11 // pred_check_branch
          %478 = sbr.rel (%p476) target = $region36
        $region35: #{tpu_custom_call.1} parent=11 // pred_region
          _
        $region36: #{tpu_custom_call.1} parent=11 // pred_fallthru
          _
        // Predicated region
        $region37: #{tpu_custom_call.1} parent=11 // pred_check
          %p479 = pneg %p231
        $region38: #{tpu_custom_call.1} parent=11 // pred_check_branch
          %481 = sbr.rel (%p479) target = $region40
        $region39: #{tpu_custom_call.1} parent=11 // pred_region
          _
        $region40: #{tpu_custom_call.1} parent=11 // pred_fallthru
          _
        // Predicated region
        $region41: #{tpu_custom_call.1} parent=11 // pred_check
          %p482 = pneg %p252
        $region42: #{tpu_custom_call.1} parent=11 // pred_check_branch
          %484 = sbr.rel (%p482) target = $region44
        $region43: #{tpu_custom_call.1} parent=11 // pred_region
          _
        $region44: #{tpu_custom_call.1} parent=11 // pred_fallthru
          _
        // Predicated region
        $region45: #{tpu_custom_call.1} parent=11 // pred_check
          %p485 = pneg %p273
        $region46: #{tpu_custom_call.1} parent=11 // pred_check_branch
          %487 = sbr.rel (%p485) target = $region48
        $region47: #{tpu_custom_call.1} parent=11 // pred_region
          _
        $region48: #{tpu_custom_call.1} parent=11 // pred_fallthru
          _
        // Predicated region
        $region49: #{tpu_custom_call.1} parent=11 // pred_check
          %p488 = pneg %p294
        $region50: #{tpu_custom_call.1} parent=11 // pred_check_branch
          %490 = sbr.rel (%p488) target = $region52
        $region51: #{tpu_custom_call.1} parent=11 // pred_region
          _
        $region52: #{tpu_custom_call.1} parent=11 // pred_fallthru
          _
        // Predicated region
        $region53: #{tpu_custom_call.1} parent=11 // pred_check
          %p491 = pneg %p315
        $region54: #{tpu_custom_call.1} parent=11 // pred_check_branch
          %493 = sbr.rel (%p491) target = $region56
        $region55: #{tpu_custom_call.1} parent=11 // pred_region
          %495 = vsyncadd [#allocation6], 0
          %s496 = sshll.u32 %s12, 4
          %s497 = int_to_ptr.hbm [resolvable:$true] %s496
          %s498 = sshll.u32 [#allocation5], 4
          %s499 = int_to_ptr.vmem [resolvable:$true] %s498
          %504 = dma.hbm_to_vmem [thread:$0]  %s497, 1024, %s499, [#allocation6], 64, 64, 4
        $region56: #{tpu_custom_call.1} parent=11 // pred_fallthru
          _
        // Predicated region
        $region57: #{tpu_custom_call.1} parent=11 // pred_check
          %p505 = pneg %p336
        $region58: #{tpu_custom_call.1} parent=11 // pred_check_branch
          %507 = sbr.rel (%p505) target = $region60
        $region59: #{tpu_custom_call.1} parent=11 // pred_region
          _
        $region60: #{tpu_custom_call.1} parent=11 // pred_fallthru
          _
        // Predicated region
        $region61: #{tpu_custom_call.1} parent=11 // pred_check
          %p508 = pneg %p357
        $region62: #{tpu_custom_call.1} parent=11 // pred_check_branch
          %510 = sbr.rel (%p508) target = $region64
        $region63: #{tpu_custom_call.1} parent=11 // pred_region
          %512 = vsyncadd [#allocation6], 0
          %s513 = sshll.u32 %s14, 4
          %s514 = int_to_ptr.hbm [resolvable:$true] %s513
          %s515 = sshll.u32 [#allocation7], 4
          %s516 = int_to_ptr.vmem [resolvable:$true] %s515
          %521 = dma.hbm_to_vmem [thread:$0]  %s514, 1024, %s516, [#allocation6], 64, 64, 4
        $region64: #{tpu_custom_call.1} parent=11 // pred_fallthru
          _
        // Predicated region
        $region65: #{tpu_custom_call.1} parent=11 // pred_check
          %p522 = pneg %p378
        $region66: #{tpu_custom_call.1} parent=11 // pred_check_branch
          %524 = sbr.rel (%p522) target = $region68
        $region67: #{tpu_custom_call.1} parent=11 // pred_region
          %526 = vsyncadd [#allocation9], 0
          %s527 = sshll.u32 %s15, 4
          %s528 = int_to_ptr.hbm [resolvable:$true] %s527
          %s529 = sshll.u32 [#allocation8], 4
          %s530 = int_to_ptr.vmem [resolvable:$true] %s529
          %535 = dma.hbm_to_vmem [thread:$0]  %s528, 1024, %s530, [#allocation9], 64, 64, 4
        $region68: #{tpu_custom_call.1} parent=11 // pred_fallthru
          _
        // Predicated region
        $region69: #{tpu_custom_call.1} parent=11 // pred_check
          %p536 = pneg %p399
        $region70: #{tpu_custom_call.1} parent=11 // pred_check_branch
          %538 = sbr.rel (%p536) target = $region72
        $region71: #{tpu_custom_call.1} parent=11 // pred_region
          %540 = vsyncadd [#allocation9], 0
          %s541 = sshll.u32 %s16, 4
          %s542 = int_to_ptr.hbm [resolvable:$true] %s541
          %s543 = sshll.u32 [#allocation10], 4
          %s544 = int_to_ptr.vmem [resolvable:$true] %s543
          %549 = dma.hbm_to_vmem [thread:$0]  %s542, 1024, %s544, [#allocation9], 64, 64, 4
        $region72: #{tpu_custom_call.1} parent=11 // pred_fallthru
          _
        // Predicated region
        $region73: #{tpu_custom_call.1} parent=11 // pred_check
          %p550 = pneg %p420
        $region74: #{tpu_custom_call.1} parent=11 // pred_check_branch
          %552 = sbr.rel (%p550) target = $region76
        $region75: #{tpu_custom_call.1} parent=11 // pred_region
          _
        $region76: #{tpu_custom_call.1} parent=11 // pred_fallthru
          _
      $region12: #{tpu_custom_call.1} parent=5 // pred_fallthru
        _
      %p553 = scmp.lt.s32.totalorder %s32, 2
      // Predicated region
      $region77: #{tpu_custom_call.1} parent=5 // pred_check
        %p554 = pneg %p553
      $region78: #{tpu_custom_call.1} parent=5 // pred_check_branch
        %556 = sbr.rel (%p554) target = $region80
      $region79: #{tpu_custom_call.1} parent=5 // pred_region
        // Predicated region
        $region81: #{tpu_custom_call.1} parent=79 // pred_check
          %p557 = pneg %p52
        $region82: #{tpu_custom_call.1} parent=79 // pred_check_branch
          %559 = sbr.rel (%p557) target = $region84
        $region83: #{tpu_custom_call.1} parent=79 // pred_region
          %s560 = sand.u32 %s42, 1
          %s561 = scalar_lea.sflag [#allocation3], %s560
          %s562 = sand.u32 %s42, 1
          %s563 = smul.addr %s562, 256
          %s564 = scalar_lea.vmem [#allocation2], %s563
          %566 = vsyncadd %s561, 0
          %s567 = smul.addr %s32, 64
          %s568 = smul.addr %s567, 4
          %s569 = scalar_lea.hbm %s0, %s568
          %s570 = sshll.u32 %s569, 4
          %s571 = int_to_ptr.hbm [resolvable:$true] %s570
          %s572 = sshll.u32 %s564, 4
          %s573 = int_to_ptr.vmem [resolvable:$true] %s572
          %578 = dma.hbm_to_vmem [thread:$0]  %s571, 4096, %s573, %s561, 128, 128, 8
        $region84: #{tpu_custom_call.1} parent=79 // pred_fallthru
          _
        // Predicated region
        $region85: #{tpu_custom_call.1} parent=79 // pred_check
          %p579 = pneg %p78
        $region86: #{tpu_custom_call.1} parent=79 // pred_check_branch
          %581 = sbr.rel (%p579) target = $region88
        $region87: #{tpu_custom_call.1} parent=79 // pred_region
          %s582 = smul.u32 32, %s32
          %p583 = scmp.lt.s32.totalorder %s582, 63
          %s584 = scalar_select %p583, %s582, 63
          %s585 = smul.addr %s584, 4
          %s586 = scalar_lea.vmem %s1, %s585
          %s587 = smul.u32 32, %s32
        $region88: #{tpu_custom_call.1} parent=79 // pred_fallthru
          _
      $region80: #{tpu_custom_call.1} parent=5 // pred_fallthru
        _
      %p588 = scmp.le.s32.totalorder 1, %s32
      %p589 = scmp.lt.s32.totalorder %s32, 3
      %p590 = pnand %p588, %p589
      %p591 = pneg %p590
      // Predicated region
      $region89: #{tpu_custom_call.1} parent=5 // pred_check
        _
      $region90: #{tpu_custom_call.1} parent=5 // pred_check_branch
        %593 = sbr.rel (%p590) target = $region92
      $region91: #{tpu_custom_call.1} parent=5 // pred_region
        %s594 = ssub.s32 %s32, 1
        %s595 = sand.u32 %s45, 1
        %s596 = scalar_lea.sflag [#allocation3], %s595
        %s597 = sand.u32 %s45, 1
        %s598 = smul.addr %s597, 256
        %s599 = scalar_lea.vmem [#allocation2], %s598
        // Predicated region
        $region93: #{tpu_custom_call.1} parent=91 // pred_check
          %p600 = pneg %p58
        $region94: #{tpu_custom_call.1} parent=91 // pred_check_branch
          %602 = sbr.rel (%p600) target = $region96
        $region95: #{tpu_custom_call.1} parent=91 // pred_region
          %604 = dma.done %s596, 4096
        $region96: #{tpu_custom_call.1} parent=91 // pred_fallthru
          _
        // Predicated region
        $region97: #{tpu_custom_call.1} parent=91 // pred_check
          %p605 = pneg %p315
        $region98: #{tpu_custom_call.1} parent=91 // pred_check_branch
          %607 = sbr.rel (%p605) target = $region100
        $region99: #{tpu_custom_call.1} parent=91 // pred_region
          %609 = dma.done [#allocation6], 1024
        $region100: #{tpu_custom_call.1} parent=91 // pred_fallthru
          _
        // Predicated region
        $region101: #{tpu_custom_call.1} parent=91 // pred_check
          %p610 = pneg %p357
        $region102: #{tpu_custom_call.1} parent=91 // pred_check_branch
          %612 = sbr.rel (%p610) target = $region104
        $region103: #{tpu_custom_call.1} parent=91 // pred_region
          %614 = dma.done [#allocation6], 1024
        $region104: #{tpu_custom_call.1} parent=91 // pred_fallthru
          _
        // Predicated region
        $region105: #{tpu_custom_call.1} parent=91 // pred_check
          %p615 = pneg %p378
        $region106: #{tpu_custom_call.1} parent=91 // pred_check_branch
          %617 = sbr.rel (%p615) target = $region108
        $region107: #{tpu_custom_call.1} parent=91 // pred_region
          %619 = dma.done [#allocation9], 1024
        $region108: #{tpu_custom_call.1} parent=91 // pred_fallthru
          _
        // Predicated region
        $region109: #{tpu_custom_call.1} parent=91 // pred_check
          %p620 = pneg %p399
        $region110: #{tpu_custom_call.1} parent=91 // pred_check_branch
          %622 = sbr.rel (%p620) target = $region112
        $region111: #{tpu_custom_call.1} parent=91 // pred_region
          %624 = dma.done [#allocation9], 1024
        $region112: #{tpu_custom_call.1} parent=91 // pred_fallthru
          _
        %s625 = sand.u32 %s45, 1
        %s626 = scalar_lea.sflag [#allocation3], %s625
        %s627 = sand.u32 %s45, 1
        %s628 = smul.addr %s627, 256
        %s629 = scalar_lea.vmem [#allocation2], %s628
        %p630 = pneg %p58
        %p631 = pneg %p55
        %s632 = smul.u32 32, %s37
        %p633 = scmp.lt.s32.totalorder %s632, 63
        %s634 = scalar_select %p633, %s632, 63
        %s635 = smul.addr %s634, 4
        %s636 = scalar_lea.vmem %s1, %s635
        %p637 = pneg %p84
        %p638 = pneg %p81
        %p639 = pneg %p105
        %p640 = pneg %p102
        %p641 = pneg %p126
        %p642 = pneg %p123
        %p643 = pneg %p147
        %p644 = pneg %p144
        %p645 = pneg %p168
        %p646 = pneg %p165
        %p647 = pneg %p189
        %p648 = pneg %p186
        %p649 = pneg %p210
        %p650 = pneg %p207
        %p651 = pneg %p231
        %p652 = pneg %p228
        %p653 = pneg %p252
        %p654 = pneg %p249
        %p655 = pneg %p273
        %p656 = pneg %p270
        %p657 = pneg %p294
        %p658 = pneg %p291
        %p659 = pneg %p315
        %p660 = pneg %p312
        %p661 = pneg %p336
        %p662 = pneg %p333
        %p663 = pneg %p357
        %p664 = pneg %p354
        %p665 = pneg %p378
        %p666 = pneg %p375
        %p667 = pneg %p399
        %p668 = pneg %p396
        %p669 = pneg %p420
        %p670 = pneg %p417
        %p671 = pneg %p446
        %p672 = pneg %p443
        %s673 = sand.u32 %s433, 1
        %s674 = scalar_lea.sflag [#allocation4], %s673
        %s675 = sand.u32 %s433, 1
        %s676 = smul.addr %s675, 32
        %s677 = scalar_lea.vmem [#allocation11], %s676
        %s678 = smul.u32 32, %s37
        %p679 = scmp.lt.s32.totalorder %s678, 63
        %s680 = scalar_select %p679, %s678, 63
        %s681 = smul.addr %s680, 4
        %s682 = scalar_lea.vmem %s1, %s681
        %s683 = smul.u32 32, %s37
        %s684 = smul.u32 4, %s37
        %v686 = vld [vmem:[%s599] sm:$0xff]
        %v687 = vld [vmem:[%s599 + $0x8] sm:$0xff]
        %v688 = vld [vmem:[%s599 + $0x10] sm:$0xff]
        %v689 = vld [vmem:[%s599 + $0x18] sm:$0xff]
        %v690 = vld [vmem:[%s599 + $0x20] sm:$0xff]
        %v691 = vld [vmem:[%s599 + $0x28] sm:$0xff]
        %v692 = vld [vmem:[%s599 + $0x30] sm:$0xff]
        %v693 = vld [vmem:[%s599 + $0x38] sm:$0xff]
        %v694 = vld [vmem:[%s599 + $0x40] sm:$0xff]
        %v695 = vld [vmem:[%s599 + $0x48] sm:$0xff]
        %v696 = vld [vmem:[%s599 + $0x50] sm:$0xff]
        %v697 = vld [vmem:[%s599 + $0x58] sm:$0xff]
        %v698 = vld [vmem:[%s599 + $0x60] sm:$0xff]
        %v699 = vld [vmem:[%s599 + $0x68] sm:$0xff]
        %v700 = vld [vmem:[%s599 + $0x70] sm:$0xff]
        %v701 = vld [vmem:[%s599 + $0x78] sm:$0xff]
        %v702 = vld [vmem:[%s599 + $0x80] sm:$0xff]
        %v703 = vld [vmem:[%s599 + $0x88] sm:$0xff]
        %v704 = vld [vmem:[%s599 + $0x90] sm:$0xff]
        %v705 = vld [vmem:[%s599 + $0x98] sm:$0xff]
        %v706 = vld [vmem:[%s599 + $0xa0] sm:$0xff]
        %v707 = vld [vmem:[%s599 + $0xa8] sm:$0xff]
        %v708 = vld [vmem:[%s599 + $0xb0] sm:$0xff]
        %v709 = vld [vmem:[%s599 + $0xb8] sm:$0xff]
        %v710 = vld [vmem:[%s599 + $0xc0] sm:$0xff]
        %v711 = vld [vmem:[%s599 + $0xc8] sm:$0xff]
        %v712 = vld [vmem:[%s599 + $0xd0] sm:$0xff]
        %v713 = vld [vmem:[%s599 + $0xd8] sm:$0xff]
        %v714 = vld [vmem:[%s599 + $0xe0] sm:$0xff]
        %v715 = vld [vmem:[%s599 + $0xe8] sm:$0xff]
        %v716 = vld [vmem:[%s599 + $0xf0] sm:$0xff]
        %v717 = vld [vmem:[%s599 + $0xf8] sm:$0xff]
        %v718 = vld [vmem:[%s682] sm:$0xf]
        %v719 = vld [vmem:[%s682 + $0x4] sm:$0xf]
        %v720 = vld [vmem:[%s682 + $0x8] sm:$0xf]
        %v721 = vld [vmem:[%s682 + $0xc] sm:$0xf]
        %v722 = vld [vmem:[%s682 + $0x10] sm:$0xf]
        %v723 = vld [vmem:[%s682 + $0x14] sm:$0xf]
        %v724 = vld [vmem:[%s682 + $0x18] sm:$0xf]
        %v725 = vld [vmem:[%s682 + $0x1c] sm:$0xf]
        %v726 = vld [vmem:[%s682 + $0x20] sm:$0xf]
        %v727 = vld [vmem:[%s682 + $0x24] sm:$0xf]
        %v728 = vld [vmem:[%s682 + $0x28] sm:$0xf]
        %v729 = vld [vmem:[%s682 + $0x2c] sm:$0xf]
        %v730 = vld [vmem:[%s682 + $0x30] sm:$0xf]
        %v731 = vld [vmem:[%s682 + $0x34] sm:$0xf]
        %v732 = vld [vmem:[%s682 + $0x38] sm:$0xf]
        %v733 = vld [vmem:[%s682 + $0x3c] sm:$0xf]
        %v734 = vld [vmem:[%s682 + $0x40] sm:$0xf]
        %v735 = vld [vmem:[%s682 + $0x44] sm:$0xf]
        %v736 = vld [vmem:[%s682 + $0x48] sm:$0xf]
        %v737 = vld [vmem:[%s682 + $0x4c] sm:$0xf]
        %v738 = vld [vmem:[%s682 + $0x50] sm:$0xf]
        %v739 = vld [vmem:[%s682 + $0x54] sm:$0xf]
        %v740 = vld [vmem:[%s682 + $0x58] sm:$0xf]
        %v741 = vld [vmem:[%s682 + $0x5c] sm:$0xf]
        %v742 = vld [vmem:[%s682 + $0x60] sm:$0xf]
        %v743 = vld [vmem:[%s682 + $0x64] sm:$0xf]
        %v744 = vld [vmem:[%s682 + $0x68] sm:$0xf]
        %v745 = vld [vmem:[%s682 + $0x6c] sm:$0xf]
        %v746 = vld [vmem:[%s682 + $0x70] sm:$0xf]
        %v747 = vld [vmem:[%s682 + $0x74] sm:$0xf]
        %v748 = vld [vmem:[%s682 + $0x78] sm:$0xf]
        %v749 = vld [vmem:[%s682 + $0x7c] sm:$0xf]
        %v750 = vld [vmem:[%s2] sm:$0xf]
        %v783 = vunpack.c.l.b16 %v718
        %v784 = vunpack.c.l.b16 %v719
        %v785 = vunpack.c.l.b16 %v720
        %v786 = vunpack.c.l.b16 %v721
        %v787 = vunpack.c.l.b16 %v722
        %v788 = vunpack.c.l.b16 %v723
        %v789 = vunpack.c.l.b16 %v724
        %v790 = vunpack.c.l.b16 %v725
        %v791 = vunpack.c.l.b16 %v726
        %v792 = vunpack.c.l.b16 %v727
        %v793 = vunpack.c.l.b16 %v728
        %v794 = vunpack.c.l.b16 %v729
        %v795 = vunpack.c.l.b16 %v730
        %v796 = vunpack.c.l.b16 %v731
        %v797 = vunpack.c.l.b16 %v732
        %v798 = vunpack.c.l.b16 %v733
        %v799 = vunpack.c.l.b16 %v734
        %v800 = vunpack.c.l.b16 %v735
        %v801 = vunpack.c.l.b16 %v736
        %v802 = vunpack.c.l.b16 %v737
        %v803 = vunpack.c.l.b16 %v738
        %v804 = vunpack.c.l.b16 %v739
        %v805 = vunpack.c.l.b16 %v740
        %v806 = vunpack.c.l.b16 %v741
        %v807 = vunpack.c.l.b16 %v742
        %v808 = vunpack.c.l.b16 %v743
        %v809 = vunpack.c.l.b16 %v744
        %v810 = vunpack.c.l.b16 %v745
        %v811 = vunpack.c.l.b16 %v746
        %v812 = vunpack.c.l.b16 %v747
        %v813 = vunpack.c.l.b16 %v748
        %v814 = vunpack.c.l.b16 %v749
        %v815 = vpack.c.b16 %v784, %v783
        %v816 = vpack.c.b16 %v786, %v785
        %v817 = vpack.c.b16 %v788, %v787
        %v818 = vpack.c.b16 %v790, %v789
        %v819 = vpack.c.b16 %v792, %v791
        %v820 = vpack.c.b16 %v794, %v793
        %v821 = vpack.c.b16 %v796, %v795
        %v822 = vpack.c.b16 %v798, %v797
        %v823 = vpack.c.b16 %v800, %v799
        %v824 = vpack.c.b16 %v802, %v801
        %v825 = vpack.c.b16 %v804, %v803
        %v826 = vpack.c.b16 %v806, %v805
        %v827 = vpack.c.b16 %v808, %v807
        %v828 = vpack.c.b16 %v810, %v809
        %v829 = vpack.c.b16 %v812, %v811
        %v830 = vpack.c.b16 %v814, %v813
        %vm831 = vcmask 64512
        %v833 = vsel %vm831, %v815, 0
        %v836 = vsel %vm831, %v816, 0
        %v839 = vsel %vm831, %v817, 0
        %v842 = vsel %vm831, %v818, 0
        %v845 = vsel %vm831, %v819, 0
        %v848 = vsel %vm831, %v820, 0
        %v851 = vsel %vm831, %v821, 0
        %v854 = vsel %vm831, %v822, 0
        %v857 = vsel %vm831, %v823, 0
        %v860 = vsel %vm831, %v824, 0
        %v863 = vsel %vm831, %v825, 0
        %v866 = vsel %vm831, %v826, 0
        %v869 = vsel %vm831, %v827, 0
        %v872 = vsel %vm831, %v828, 0
        %v875 = vsel %vm831, %v829, 0
        %v878 = vsel %vm831, %v830, 0
        %vm880 = vcmask 1043456
        %v882 = vsel %vm880, %v750, 0
        %884 = vmatpush.bf16.msra.mxu0 0
        %885 = vmatpush.bf16.msra.mxu0 0
        %886 = vmatpush.bf16.msra.mxu0 0
        %887 = vmatpush.bf16.msra.mxu0 0
        %888 = vmatpush.bf16.msra.mxu0 0
        %889 = vmatpush.bf16.msra.mxu0 0
        %890 = vmatpush.bf16.msra.mxu0 0
        %891 = vmatpush.bf16.msra.mxu0 %v882
        %892 = vmatmul.bf16.gmra.mxu0 %v833
        %v893 = vpop.f32.mrf.mxu0
        %v894 = vadd.f32 0.0, %v893
        %v895 = vpop.f32.mrf.mxu0
        %v896 = vadd.f32 0.0, %v895
        %897 = vmatmul.bf16.gmra.mxu0 %v836
        %v898 = vpop.f32.mrf.mxu0
        %v899 = vadd.f32 0.0, %v898
        %v900 = vpop.f32.mrf.mxu0
        %v901 = vadd.f32 0.0, %v900
        %902 = vmatmul.bf16.gmra.mxu0 %v839
        %v903 = vpop.f32.mrf.mxu0
        %v904 = vadd.f32 0.0, %v903
        %v905 = vpop.f32.mrf.mxu0
        %v906 = vadd.f32 0.0, %v905
        %907 = vmatmul.bf16.gmra.mxu0 %v842
        %v908 = vpop.f32.mrf.mxu0
        %v909 = vadd.f32 0.0, %v908
        %v910 = vpop.f32.mrf.mxu0
        %v911 = vadd.f32 0.0, %v910
        %912 = vmatmul.bf16.gmra.mxu0 %v845
        %v913 = vpop.f32.mrf.mxu0
        %v914 = vadd.f32 0.0, %v913
        %v915 = vpop.f32.mrf.mxu0
        %v916 = vadd.f32 0.0, %v915
        %917 = vmatmul.bf16.gmra.mxu0 %v848
        %v918 = vpop.f32.mrf.mxu0
        %v919 = vadd.f32 0.0, %v918
        %v920 = vpop.f32.mrf.mxu0
        %v921 = vadd.f32 0.0, %v920
        %922 = vmatmul.bf16.gmra.mxu0 %v851
        %v923 = vpop.f32.mrf.mxu0
        %v924 = vadd.f32 0.0, %v923
        %v925 = vpop.f32.mrf.mxu0
        %v926 = vadd.f32 0.0, %v925
        %927 = vmatmul.bf16.gmra.mxu0 %v854
        %v928 = vpop.f32.mrf.mxu0
        %v929 = vadd.f32 0.0, %v928
        %v930 = vpop.f32.mrf.mxu0
        %v931 = vadd.f32 0.0, %v930
        %932 = vmatmul.bf16.gmra.mxu0 %v857
        %v933 = vpop.f32.mrf.mxu0
        %v934 = vadd.f32 0.0, %v933
        %v935 = vpop.f32.mrf.mxu0
        %v936 = vadd.f32 0.0, %v935
        %937 = vmatmul.bf16.gmra.mxu0 %v860
        %v938 = vpop.f32.mrf.mxu0
        %v939 = vadd.f32 0.0, %v938
        %v940 = vpop.f32.mrf.mxu0
        %v941 = vadd.f32 0.0, %v940
        %942 = vmatmul.bf16.gmra.mxu0 %v863
        %v943 = vpop.f32.mrf.mxu0
        %v944 = vadd.f32 0.0, %v943
        %v945 = vpop.f32.mrf.mxu0
        %v946 = vadd.f32 0.0, %v945
        %947 = vmatmul.bf16.gmra.mxu0 %v866
        %v948 = vpop.f32.mrf.mxu0
        %v949 = vadd.f32 0.0, %v948
        %v950 = vpop.f32.mrf.mxu0
        %v951 = vadd.f32 0.0, %v950
        %952 = vmatmul.bf16.gmra.mxu0 %v869
        %v953 = vpop.f32.mrf.mxu0
        %v954 = vadd.f32 0.0, %v953
        %v955 = vpop.f32.mrf.mxu0
        %v956 = vadd.f32 0.0, %v955
        %957 = vmatmul.bf16.gmra.mxu0 %v872
        %v958 = vpop.f32.mrf.mxu0
        %v959 = vadd.f32 0.0, %v958
        %v960 = vpop.f32.mrf.mxu0
        %v961 = vadd.f32 0.0, %v960
        %962 = vmatmul.bf16.gmra.mxu0 %v875
        %v963 = vpop.f32.mrf.mxu0
        %v964 = vadd.f32 0.0, %v963
        %v965 = vpop.f32.mrf.mxu0
        %v966 = vadd.f32 0.0, %v965
        %967 = vmatmul.bf16.gmra.mxu0 %v878
        %v968 = vpop.f32.mrf.mxu0
        %v969 = vadd.f32 0.0, %v968
        %v970 = vpop.f32.mrf.mxu0
        %v971 = vadd.f32 0.0, %v970
        %972 = vdwg.mxu0
        %v973 = vpack.c.bf16 %v896, %v894
        %v974 = vpack.c.bf16 %v901, %v899
        %v975 = vpack.c.bf16 %v906, %v904
        %v976 = vpack.c.bf16 %v911, %v909
        %v977 = vpack.c.bf16 %v916, %v914
        %v978 = vpack.c.bf16 %v921, %v919
        %v979 = vpack.c.bf16 %v926, %v924
        %v980 = vpack.c.bf16 %v931, %v929
        %v981 = vpack.c.bf16 %v936, %v934
        %v982 = vpack.c.bf16 %v941, %v939
        %v983 = vpack.c.bf16 %v946, %v944
        %v984 = vpack.c.bf16 %v951, %v949
        %v985 = vpack.c.bf16 %v956, %v954
        %v986 = vpack.c.bf16 %v961, %v959
        %v987 = vpack.c.bf16 %v966, %v964
        %v988 = vpack.c.bf16 %v971, %v969
        %v989 = vld [vmem:[%s3] sm:$0x1]
        %v991 = vperm.slane %v989, 0
        %v1025 = vunpack.c.l.b16 %v686
        %v1026 = vunpack.c.h.b16 %v686
        %v1027 = vunpack.c.l.b16 %v687
        %v1028 = vunpack.c.h.b16 %v687
        %v1029 = vunpack.c.l.b16 %v688
        %v1030 = vunpack.c.h.b16 %v688
        %v1031 = vunpack.c.l.b16 %v689
        %v1032 = vunpack.c.h.b16 %v689
        %v1033 = vunpack.c.l.b16 %v690
        %v1034 = vunpack.c.h.b16 %v690
        %v1035 = vunpack.c.l.b16 %v691
        %v1036 = vunpack.c.h.b16 %v691
        %v1037 = vunpack.c.l.b16 %v692
        %v1038 = vunpack.c.h.b16 %v692
        %v1039 = vunpack.c.l.b16 %v693
        %v1040 = vunpack.c.h.b16 %v693
        %v1041 = vunpack.c.l.b16 %v694
        %v1042 = vunpack.c.h.b16 %v694
        %v1043 = vunpack.c.l.b16 %v695
        %v1044 = vunpack.c.h.b16 %v695
        %v1045 = vunpack.c.l.b16 %v696
        %v1046 = vunpack.c.h.b16 %v696
        %v1047 = vunpack.c.l.b16 %v697
        %v1048 = vunpack.c.h.b16 %v697
        %v1049 = vunpack.c.l.b16 %v698
        %v1050 = vunpack.c.h.b16 %v698
        %v1051 = vunpack.c.l.b16 %v699
        %v1052 = vunpack.c.h.b16 %v699
        %v1053 = vunpack.c.l.b16 %v700
        %v1054 = vunpack.c.h.b16 %v700
        %v1055 = vunpack.c.l.b16 %v701
        %v1056 = vunpack.c.h.b16 %v701
        %v1057 = vunpack.c.l.b16 %v702
        %v1058 = vunpack.c.h.b16 %v702
        %v1059 = vunpack.c.l.b16 %v703
        %v1060 = vunpack.c.h.b16 %v703
        %v1061 = vunpack.c.l.b16 %v704
        %v1062 = vunpack.c.h.b16 %v704
        %v1063 = vunpack.c.l.b16 %v705
        %v1064 = vunpack.c.h.b16 %v705
        %v1065 = vunpack.c.l.b16 %v706
        %v1066 = vunpack.c.h.b16 %v706
        %v1067 = vunpack.c.l.b16 %v707
        %v1068 = vunpack.c.h.b16 %v707
        %v1069 = vunpack.c.l.b16 %v708
        %v1070 = vunpack.c.h.b16 %v708
        %v1071 = vunpack.c.l.b16 %v709
        %v1072 = vunpack.c.h.b16 %v709
        %v1073 = vunpack.c.l.b16 %v710
        %v1074 = vunpack.c.h.b16 %v710
        %v1075 = vunpack.c.l.b16 %v711
        %v1076 = vunpack.c.h.b16 %v711
        %v1077 = vunpack.c.l.b16 %v712
        %v1078 = vunpack.c.h.b16 %v712
        %v1079 = vunpack.c.l.b16 %v713
        %v1080 = vunpack.c.h.b16 %v713
        %v1081 = vunpack.c.l.b16 %v714
        %v1082 = vunpack.c.h.b16 %v714
        %v1083 = vunpack.c.l.b16 %v715
        %v1084 = vunpack.c.h.b16 %v715
        %v1085 = vunpack.c.l.b16 %v716
        %v1086 = vunpack.c.h.b16 %v716
        %v1087 = vunpack.c.l.b16 %v717
        %v1088 = vunpack.c.h.b16 %v717
        %v1089 = vpack.c.b16 %v1027, %v1025
        %v1090 = vpack.c.b16 %v1028, %v1026
        %v1091 = vpack.c.b16 %v1031, %v1029
        %v1092 = vpack.c.b16 %v1032, %v1030
        %v1093 = vpack.c.b16 %v1035, %v1033
        %v1094 = vpack.c.b16 %v1036, %v1034
        %v1095 = vpack.c.b16 %v1039, %v1037
        %v1096 = vpack.c.b16 %v1040, %v1038
        %v1097 = vpack.c.b16 %v1043, %v1041
        %v1098 = vpack.c.b16 %v1044, %v1042
        %v1099 = vpack.c.b16 %v1047, %v1045
        %v1100 = vpack.c.b16 %v1048, %v1046
        %v1101 = vpack.c.b16 %v1051, %v1049
        %v1102 = vpack.c.b16 %v1052, %v1050
        %v1103 = vpack.c.b16 %v1055, %v1053
        %v1104 = vpack.c.b16 %v1056, %v1054
        %v1105 = vpack.c.b16 %v1059, %v1057
        %v1106 = vpack.c.b16 %v1060, %v1058
        %v1107 = vpack.c.b16 %v1063, %v1061
        %v1108 = vpack.c.b16 %v1064, %v1062
        %v1109 = vpack.c.b16 %v1067, %v1065
        %v1110 = vpack.c.b16 %v1068, %v1066
        %v1111 = vpack.c.b16 %v1071, %v1069
        %v1112 = vpack.c.b16 %v1072, %v1070
        %v1113 = vpack.c.b16 %v1075, %v1073
        %v1114 = vpack.c.b16 %v1076, %v1074
        %v1115 = vpack.c.b16 %v1079, %v1077
        %v1116 = vpack.c.b16 %v1080, %v1078
        %v1117 = vpack.c.b16 %v1083, %v1081
        %v1118 = vpack.c.b16 %v1084, %v1082
        %v1119 = vpack.c.b16 %v1087, %v1085
        %v1120 = vpack.c.b16 %v1088, %v1086
        %1153 = vmatpush.bf16.msra.mxu0 %v980
        %1154 = vmatpush.bf16.msra.mxu0 %v979
        %1155 = vmatpush.bf16.msra.mxu0 %v978
        %1156 = vmatpush.bf16.msra.mxu0 %v977
        %1157 = vmatpush.bf16.msra.mxu0 %v976
        %1158 = vmatpush.bf16.msra.mxu0 %v975
        %1159 = vmatpush.bf16.msra.mxu0 %v974
        %1160 = vmatpush.bf16.msra.mxu0 %v973
        %1161 = vmatmul.bf16.gmra.mxu0 %v1089
        %v1162 = vpop.f32.mrf.mxu0
        %v1163 = vadd.f32 %v991, %v1162
        %v1164 = vpop.f32.mrf.mxu0
        %v1165 = vadd.f32 %v991, %v1164
        %1166 = vmatmul.bf16.gmra.mxu0 %v1091
        %v1167 = vpop.f32.mrf.mxu0
        %v1168 = vadd.f32 %v991, %v1167
        %v1169 = vpop.f32.mrf.mxu0
        %v1170 = vadd.f32 %v991, %v1169
        %1171 = vmatmul.bf16.gmra.mxu0 %v1093
        %v1172 = vpop.f32.mrf.mxu0
        %v1173 = vadd.f32 %v991, %v1172
        %v1174 = vpop.f32.mrf.mxu0
        %v1175 = vadd.f32 %v991, %v1174
        %1176 = vmatmul.bf16.gmra.mxu0 %v1095
        %v1177 = vpop.f32.mrf.mxu0
        %v1178 = vadd.f32 %v991, %v1177
        %v1179 = vpop.f32.mrf.mxu0
        %v1180 = vadd.f32 %v991, %v1179
        %1181 = vmatmul.bf16.gmra.mxu0 %v1097
        %v1182 = vpop.f32.mrf.mxu0
        %v1183 = vadd.f32 %v991, %v1182
        %v1184 = vpop.f32.mrf.mxu0
        %v1185 = vadd.f32 %v991, %v1184
        %1186 = vmatmul.bf16.gmra.mxu0 %v1099
        %v1187 = vpop.f32.mrf.mxu0
        %v1188 = vadd.f32 %v991, %v1187
        %v1189 = vpop.f32.mrf.mxu0
        %v1190 = vadd.f32 %v991, %v1189
        %1191 = vmatmul.bf16.gmra.mxu0 %v1101
        %v1192 = vpop.f32.mrf.mxu0
        %v1193 = vadd.f32 %v991, %v1192
        %v1194 = vpop.f32.mrf.mxu0
        %v1195 = vadd.f32 %v991, %v1194
        %1196 = vmatmul.bf16.gmra.mxu0 %v1103
        %v1197 = vpop.f32.mrf.mxu0
        %v1198 = vadd.f32 %v991, %v1197
        %v1199 = vpop.f32.mrf.mxu0
        %v1200 = vadd.f32 %v991, %v1199
        %1201 = vmatmul.bf16.gmra.mxu0 %v1105
        %v1202 = vpop.f32.mrf.mxu0
        %v1203 = vadd.f32 %v991, %v1202
        %v1204 = vpop.f32.mrf.mxu0
        %v1205 = vadd.f32 %v991, %v1204
        %1206 = vmatmul.bf16.gmra.mxu0 %v1107
        %v1207 = vpop.f32.mrf.mxu0
        %v1208 = vadd.f32 %v991, %v1207
        %v1209 = vpop.f32.mrf.mxu0
        %v1210 = vadd.f32 %v991, %v1209
        %1211 = vmatmul.bf16.gmra.mxu0 %v1109
        %v1212 = vpop.f32.mrf.mxu0
        %v1213 = vadd.f32 %v991, %v1212
        %v1214 = vpop.f32.mrf.mxu0
        %v1215 = vadd.f32 %v991, %v1214
        %1216 = vmatmul.bf16.gmra.mxu0 %v1111
        %v1217 = vpop.f32.mrf.mxu0
        %v1218 = vadd.f32 %v991, %v1217
        %v1219 = vpop.f32.mrf.mxu0
        %v1220 = vadd.f32 %v991, %v1219
        %1221 = vmatmul.bf16.gmra.mxu0 %v1113
        %v1222 = vpop.f32.mrf.mxu0
        %v1223 = vadd.f32 %v991, %v1222
        %v1224 = vpop.f32.mrf.mxu0
        %v1225 = vadd.f32 %v991, %v1224
        %1226 = vmatmul.bf16.gmra.mxu0 %v1115
        %v1227 = vpop.f32.mrf.mxu0
        %v1228 = vadd.f32 %v991, %v1227
        %v1229 = vpop.f32.mrf.mxu0
        %v1230 = vadd.f32 %v991, %v1229
        %1231 = vmatmul.bf16.gmra.mxu0 %v1117
        %v1232 = vpop.f32.mrf.mxu0
        %v1233 = vadd.f32 %v991, %v1232
        %v1234 = vpop.f32.mrf.mxu0
        %v1235 = vadd.f32 %v991, %v1234
        %1236 = vmatmul.bf16.gmra.mxu0 %v1119
        %v1237 = vpop.f32.mrf.mxu0
        %v1238 = vadd.f32 %v991, %v1237
        %v1239 = vpop.f32.mrf.mxu0
        %v1240 = vadd.f32 %v991, %v1239
        %1241 = vdwg.mxu0
        %1242 = vmatpush.bf16.msra.mxu0 %v988
        %1243 = vmatpush.bf16.msra.mxu0 %v987
        %1244 = vmatpush.bf16.msra.mxu0 %v986
        %1245 = vmatpush.bf16.msra.mxu0 %v985
        %1246 = vmatpush.bf16.msra.mxu0 %v984
        %1247 = vmatpush.bf16.msra.mxu0 %v983
        %1248 = vmatpush.bf16.msra.mxu0 %v982
        %1249 = vmatpush.bf16.msra.mxu0 %v981
        %1250 = vmatmul.bf16.gmra.mxu0 %v1090
        %v1251 = vpop.f32.mrf.mxu0
        %v1252 = vadd.f32 %v1163, %v1251
        %v1253 = vpop.f32.mrf.mxu0
        %v1254 = vadd.f32 %v1165, %v1253
        %1255 = vmatmul.bf16.gmra.mxu0 %v1092
        %v1256 = vpop.f32.mrf.mxu0
        %v1257 = vadd.f32 %v1168, %v1256
        %v1258 = vpop.f32.mrf.mxu0
        %v1259 = vadd.f32 %v1170, %v1258
        %1260 = vmatmul.bf16.gmra.mxu0 %v1094
        %v1261 = vpop.f32.mrf.mxu0
        %v1262 = vadd.f32 %v1173, %v1261
        %v1263 = vpop.f32.mrf.mxu0
        %v1264 = vadd.f32 %v1175, %v1263
        %1265 = vmatmul.bf16.gmra.mxu0 %v1096
        %v1266 = vpop.f32.mrf.mxu0
        %v1267 = vadd.f32 %v1178, %v1266
        %v1268 = vpop.f32.mrf.mxu0
        %v1269 = vadd.f32 %v1180, %v1268
        %1270 = vmatmul.bf16.gmra.mxu0 %v1098
        %v1271 = vpop.f32.mrf.mxu0
        %v1272 = vadd.f32 %v1183, %v1271
        %v1273 = vpop.f32.mrf.mxu0
        %v1274 = vadd.f32 %v1185, %v1273
        %1275 = vmatmul.bf16.gmra.mxu0 %v1100
        %v1276 = vpop.f32.mrf.mxu0
        %v1277 = vadd.f32 %v1188, %v1276
        %v1278 = vpop.f32.mrf.mxu0
        %v1279 = vadd.f32 %v1190, %v1278
        %1280 = vmatmul.bf16.gmra.mxu0 %v1102
        %v1281 = vpop.f32.mrf.mxu0
        %v1282 = vadd.f32 %v1193, %v1281
        %v1283 = vpop.f32.mrf.mxu0
        %v1284 = vadd.f32 %v1195, %v1283
        %1285 = vmatmul.bf16.gmra.mxu0 %v1104
        %v1286 = vpop.f32.mrf.mxu0
        %v1287 = vadd.f32 %v1198, %v1286
        %v1288 = vpop.f32.mrf.mxu0
        %v1289 = vadd.f32 %v1200, %v1288
        %1290 = vmatmul.bf16.gmra.mxu0 %v1106
        %v1291 = vpop.f32.mrf.mxu0
        %v1292 = vadd.f32 %v1203, %v1291
        %v1293 = vpop.f32.mrf.mxu0
        %v1294 = vadd.f32 %v1205, %v1293
        %1295 = vmatmul.bf16.gmra.mxu0 %v1108
        %v1296 = vpop.f32.mrf.mxu0
        %v1297 = vadd.f32 %v1208, %v1296
        %v1298 = vpop.f32.mrf.mxu0
        %v1299 = vadd.f32 %v1210, %v1298
        %1300 = vmatmul.bf16.gmra.mxu0 %v1110
        %v1301 = vpop.f32.mrf.mxu0
        %v1302 = vadd.f32 %v1213, %v1301
        %v1303 = vpop.f32.mrf.mxu0
        %v1304 = vadd.f32 %v1215, %v1303
        %1305 = vmatmul.bf16.gmra.mxu0 %v1112
        %v1306 = vpop.f32.mrf.mxu0
        %v1307 = vadd.f32 %v1218, %v1306
        %v1308 = vpop.f32.mrf.mxu0
        %v1309 = vadd.f32 %v1220, %v1308
        %1310 = vmatmul.bf16.gmra.mxu0 %v1114
        %v1311 = vpop.f32.mrf.mxu0
        %v1312 = vadd.f32 %v1223, %v1311
        %v1313 = vpop.f32.mrf.mxu0
        %v1314 = vadd.f32 %v1225, %v1313
        %1315 = vmatmul.bf16.gmra.mxu0 %v1116
        %v1316 = vpop.f32.mrf.mxu0
        %v1317 = vadd.f32 %v1228, %v1316
        %v1318 = vpop.f32.mrf.mxu0
        %v1319 = vadd.f32 %v1230, %v1318
        %1320 = vmatmul.bf16.gmra.mxu0 %v1118
        %v1321 = vpop.f32.mrf.mxu0
        %v1322 = vadd.f32 %v1233, %v1321
        %v1323 = vpop.f32.mrf.mxu0
        %v1324 = vadd.f32 %v1235, %v1323
        %1325 = vmatmul.bf16.gmra.mxu0 %v1120
        %v1326 = vpop.f32.mrf.mxu0
        %v1327 = vadd.f32 %v1238, %v1326
        %v1328 = vpop.f32.mrf.mxu0
        %v1329 = vadd.f32 %v1240, %v1328
        %1330 = vdwg.mxu0
        %v1331 = vmax.f32 %v1252, 0.0
        %v1332 = vmax.f32 %v1254, 0.0
        %v1333 = vmax.f32 %v1257, 0.0
        %v1334 = vmax.f32 %v1259, 0.0
        %v1335 = vmax.f32 %v1262, 0.0
        %v1336 = vmax.f32 %v1264, 0.0
        %v1337 = vmax.f32 %v1267, 0.0
        %v1338 = vmax.f32 %v1269, 0.0
        %v1339 = vmax.f32 %v1272, 0.0
        %v1340 = vmax.f32 %v1274, 0.0
        %v1341 = vmax.f32 %v1277, 0.0
        %v1342 = vmax.f32 %v1279, 0.0
        %v1343 = vmax.f32 %v1282, 0.0
        %v1344 = vmax.f32 %v1284, 0.0
        %v1345 = vmax.f32 %v1287, 0.0
        %v1346 = vmax.f32 %v1289, 0.0
        %v1347 = vmax.f32 %v1292, 0.0
        %v1348 = vmax.f32 %v1294, 0.0
        %v1349 = vmax.f32 %v1297, 0.0
        %v1350 = vmax.f32 %v1299, 0.0
        %v1351 = vmax.f32 %v1302, 0.0
        %v1352 = vmax.f32 %v1304, 0.0
        %v1353 = vmax.f32 %v1307, 0.0
        %v1354 = vmax.f32 %v1309, 0.0
        %v1355 = vmax.f32 %v1312, 0.0
        %v1356 = vmax.f32 %v1314, 0.0
        %v1357 = vmax.f32 %v1317, 0.0
        %v1358 = vmax.f32 %v1319, 0.0
        %v1359 = vmax.f32 %v1322, 0.0
        %v1360 = vmax.f32 %v1324, 0.0
        %v1361 = vmax.f32 %v1327, 0.0
        %v1362 = vmax.f32 %v1329, 0.0
        %v1363 = vpack.c.bf16 %v1332, %v1331
        %v1364 = vpack.c.bf16 %v1334, %v1333
        %v1365 = vpack.c.bf16 %v1336, %v1335
        %v1366 = vpack.c.bf16 %v1338, %v1337
        %v1367 = vpack.c.bf16 %v1340, %v1339
        %v1368 = vpack.c.bf16 %v1342, %v1341
        %v1369 = vpack.c.bf16 %v1344, %v1343
        %v1370 = vpack.c.bf16 %v1346, %v1345
        %v1371 = vpack.c.bf16 %v1348, %v1347
        %v1372 = vpack.c.bf16 %v1350, %v1349
        %v1373 = vpack.c.bf16 %v1352, %v1351
        %v1374 = vpack.c.bf16 %v1354, %v1353
        %v1375 = vpack.c.bf16 %v1356, %v1355
        %v1376 = vpack.c.bf16 %v1358, %v1357
        %v1377 = vpack.c.bf16 %v1360, %v1359
        %v1378 = vpack.c.bf16 %v1362, %v1361
        %v1379 = vld [vmem:[%s4] sm:$0xf]
        %v1380 = vld [vmem:[%s4 + $0x4] sm:$0xf]
        %v1381 = vld [vmem:[%s4 + $0x8] sm:$0xf]
        %v1382 = vld [vmem:[%s4 + $0xc] sm:$0xf]
        %v1383 = vld [vmem:[%s4 + $0x10] sm:$0xf]
        %v1384 = vld [vmem:[%s4 + $0x14] sm:$0xf]
        %v1385 = vld [vmem:[%s4 + $0x18] sm:$0xf]
        %v1386 = vld [vmem:[%s4 + $0x1c] sm:$0xf]
        %v1387 = vld [vmem:[%s4 + $0x20] sm:$0xf]
        %v1388 = vld [vmem:[%s4 + $0x24] sm:$0xf]
        %v1389 = vld [vmem:[%s4 + $0x28] sm:$0xf]
        %v1390 = vld [vmem:[%s4 + $0x2c] sm:$0xf]
        %v1391 = vld [vmem:[%s4 + $0x30] sm:$0xf]
        %v1392 = vld [vmem:[%s4 + $0x34] sm:$0xf]
        %v1393 = vld [vmem:[%s4 + $0x38] sm:$0xf]
        %v1394 = vld [vmem:[%s4 + $0x3c] sm:$0xf]
        %v1395 = vld [vmem:[%s5] sm:$0x1]
        %v1397 = vperm.slane %v1395, 0
        %v1415 = vunpack.c.l.b16 %v1379
        %v1416 = vunpack.c.l.b16 %v1380
        %v1417 = vunpack.c.l.b16 %v1381
        %v1418 = vunpack.c.l.b16 %v1382
        %v1419 = vunpack.c.l.b16 %v1383
        %v1420 = vunpack.c.l.b16 %v1384
        %v1421 = vunpack.c.l.b16 %v1385
        %v1422 = vunpack.c.l.b16 %v1386
        %v1423 = vunpack.c.l.b16 %v1387
        %v1424 = vunpack.c.l.b16 %v1388
        %v1425 = vunpack.c.l.b16 %v1389
        %v1426 = vunpack.c.l.b16 %v1390
        %v1427 = vunpack.c.l.b16 %v1391
        %v1428 = vunpack.c.l.b16 %v1392
        %v1429 = vunpack.c.l.b16 %v1393
        %v1430 = vunpack.c.l.b16 %v1394
        %v1431 = vpack.c.b16 %v1416, %v1415
        %v1432 = vpack.c.b16 %v1418, %v1417
        %v1433 = vpack.c.b16 %v1420, %v1419
        %v1434 = vpack.c.b16 %v1422, %v1421
        %v1435 = vpack.c.b16 %v1424, %v1423
        %v1436 = vpack.c.b16 %v1426, %v1425
        %v1437 = vpack.c.b16 %v1428, %v1427
        %v1438 = vpack.c.b16 %v1430, %v1429
        %1447 = vmatpush.bf16.msra.mxu0 %v1438
        %1448 = vmatpush.bf16.msra.mxu0 %v1437
        %1449 = vmatpush.bf16.msra.mxu0 %v1436
        %1450 = vmatpush.bf16.msra.mxu0 %v1435
        %1451 = vmatpush.bf16.msra.mxu0 %v1434
        %1452 = vmatpush.bf16.msra.mxu0 %v1433
        %1453 = vmatpush.bf16.msra.mxu0 %v1432
        %1454 = vmatpush.bf16.msra.mxu0 %v1431
        %1455 = vmatmul.bf16.gmra.mxu0 %v1363
        %v1456 = vpop.f32.mrf.mxu0
        %v1457 = vadd.f32 %v1397, %v1456
        %v1458 = vpop.f32.mrf.mxu0
        %v1459 = vadd.f32 %v1397, %v1458
        %1460 = vmatmul.bf16.gmra.mxu0 %v1364
        %v1461 = vpop.f32.mrf.mxu0
        %v1462 = vadd.f32 %v1397, %v1461
        %v1463 = vpop.f32.mrf.mxu0
        %v1464 = vadd.f32 %v1397, %v1463
        %1465 = vmatmul.bf16.gmra.mxu0 %v1365
        %v1466 = vpop.f32.mrf.mxu0
        %v1467 = vadd.f32 %v1397, %v1466
        %v1468 = vpop.f32.mrf.mxu0
        %v1469 = vadd.f32 %v1397, %v1468
        %1470 = vmatmul.bf16.gmra.mxu0 %v1366
        %v1471 = vpop.f32.mrf.mxu0
        %v1472 = vadd.f32 %v1397, %v1471
        %v1473 = vpop.f32.mrf.mxu0
        %v1474 = vadd.f32 %v1397, %v1473
        %1475 = vmatmul.bf16.gmra.mxu0 %v1367
        %v1476 = vpop.f32.mrf.mxu0
        %v1477 = vadd.f32 %v1397, %v1476
        %v1478 = vpop.f32.mrf.mxu0
        %v1479 = vadd.f32 %v1397, %v1478
        %1480 = vmatmul.bf16.gmra.mxu0 %v1368
        %v1481 = vpop.f32.mrf.mxu0
        %v1482 = vadd.f32 %v1397, %v1481
        %v1483 = vpop.f32.mrf.mxu0
        %v1484 = vadd.f32 %v1397, %v1483
        %1485 = vmatmul.bf16.gmra.mxu0 %v1369
        %v1486 = vpop.f32.mrf.mxu0
        %v1487 = vadd.f32 %v1397, %v1486
        %v1488 = vpop.f32.mrf.mxu0
        %v1489 = vadd.f32 %v1397, %v1488
        %1490 = vmatmul.bf16.gmra.mxu0 %v1370
        %v1491 = vpop.f32.mrf.mxu0
        %v1492 = vadd.f32 %v1397, %v1491
        %v1493 = vpop.f32.mrf.mxu0
        %v1494 = vadd.f32 %v1397, %v1493
        %1495 = vmatmul.bf16.gmra.mxu0 %v1371
        %v1496 = vpop.f32.mrf.mxu0
        %v1497 = vadd.f32 %v1397, %v1496
        %v1498 = vpop.f32.mrf.mxu0
        %v1499 = vadd.f32 %v1397, %v1498
        %1500 = vmatmul.bf16.gmra.mxu0 %v1372
        %v1501 = vpop.f32.mrf.mxu0
        %v1502 = vadd.f32 %v1397, %v1501
        %v1503 = vpop.f32.mrf.mxu0
        %v1504 = vadd.f32 %v1397, %v1503
        %1505 = vmatmul.bf16.gmra.mxu0 %v1373
        %v1506 = vpop.f32.mrf.mxu0
        %v1507 = vadd.f32 %v1397, %v1506
        %v1508 = vpop.f32.mrf.mxu0
        %v1509 = vadd.f32 %v1397, %v1508
        %1510 = vmatmul.bf16.gmra.mxu0 %v1374
        %v1511 = vpop.f32.mrf.mxu0
        %v1512 = vadd.f32 %v1397, %v1511
        %v1513 = vpop.f32.mrf.mxu0
        %v1514 = vadd.f32 %v1397, %v1513
        %1515 = vmatmul.bf16.gmra.mxu0 %v1375
        %v1516 = vpop.f32.mrf.mxu0
        %v1517 = vadd.f32 %v1397, %v1516
        %v1518 = vpop.f32.mrf.mxu0
        %v1519 = vadd.f32 %v1397, %v1518
        %1520 = vmatmul.bf16.gmra.mxu0 %v1376
        %v1521 = vpop.f32.mrf.mxu0
        %v1522 = vadd.f32 %v1397, %v1521
        %v1523 = vpop.f32.mrf.mxu0
        %v1524 = vadd.f32 %v1397, %v1523
        %1525 = vmatmul.bf16.gmra.mxu0 %v1377
        %v1526 = vpop.f32.mrf.mxu0
        %v1527 = vadd.f32 %v1397, %v1526
        %v1528 = vpop.f32.mrf.mxu0
        %v1529 = vadd.f32 %v1397, %v1528
        %1530 = vmatmul.bf16.gmra.mxu0 %v1378
        %v1531 = vpop.f32.mrf.mxu0
        %v1532 = vadd.f32 %v1397, %v1531
        %v1533 = vpop.f32.mrf.mxu0
        %v1534 = vadd.f32 %v1397, %v1533
        %1535 = vdwg.mxu0
        %v1536 = vmax.f32 %v1457, 0.0
        %v1537 = vmax.f32 %v1459, 0.0
        %v1538 = vmax.f32 %v1462, 0.0
        %v1539 = vmax.f32 %v1464, 0.0
        %v1540 = vmax.f32 %v1467, 0.0
        %v1541 = vmax.f32 %v1469, 0.0
        %v1542 = vmax.f32 %v1472, 0.0
        %v1543 = vmax.f32 %v1474, 0.0
        %v1544 = vmax.f32 %v1477, 0.0
        %v1545 = vmax.f32 %v1479, 0.0
        %v1546 = vmax.f32 %v1482, 0.0
        %v1547 = vmax.f32 %v1484, 0.0
        %v1548 = vmax.f32 %v1487, 0.0
        %v1549 = vmax.f32 %v1489, 0.0
        %v1550 = vmax.f32 %v1492, 0.0
        %v1551 = vmax.f32 %v1494, 0.0
        %v1552 = vmax.f32 %v1497, 0.0
        %v1553 = vmax.f32 %v1499, 0.0
        %v1554 = vmax.f32 %v1502, 0.0
        %v1555 = vmax.f32 %v1504, 0.0
        %v1556 = vmax.f32 %v1507, 0.0
        %v1557 = vmax.f32 %v1509, 0.0
        %v1558 = vmax.f32 %v1512, 0.0
        %v1559 = vmax.f32 %v1514, 0.0
        %v1560 = vmax.f32 %v1517, 0.0
        %v1561 = vmax.f32 %v1519, 0.0
        %v1562 = vmax.f32 %v1522, 0.0
        %v1563 = vmax.f32 %v1524, 0.0
        %v1564 = vmax.f32 %v1527, 0.0
        %v1565 = vmax.f32 %v1529, 0.0
        %v1566 = vmax.f32 %v1532, 0.0
        %v1567 = vmax.f32 %v1534, 0.0
        %v1568 = vpack.c.bf16 %v1537, %v1536
        %v1569 = vpack.c.bf16 %v1539, %v1538
        %v1570 = vpack.c.bf16 %v1541, %v1540
        %v1571 = vpack.c.bf16 %v1543, %v1542
        %v1572 = vpack.c.bf16 %v1545, %v1544
        %v1573 = vpack.c.bf16 %v1547, %v1546
        %v1574 = vpack.c.bf16 %v1549, %v1548
        %v1575 = vpack.c.bf16 %v1551, %v1550
        %v1576 = vpack.c.bf16 %v1553, %v1552
        %v1577 = vpack.c.bf16 %v1555, %v1554
        %v1578 = vpack.c.bf16 %v1557, %v1556
        %v1579 = vpack.c.bf16 %v1559, %v1558
        %v1580 = vpack.c.bf16 %v1561, %v1560
        %v1581 = vpack.c.bf16 %v1563, %v1562
        %v1582 = vpack.c.bf16 %v1565, %v1564
        %v1583 = vpack.c.bf16 %v1567, %v1566
        %1584 = vmatpush.bf16.msra.mxu0 %v1575
        %1585 = vmatpush.bf16.msra.mxu0 %v1574
        %1586 = vmatpush.bf16.msra.mxu0 %v1573
        %1587 = vmatpush.bf16.msra.mxu0 %v1572
        %1588 = vmatpush.bf16.msra.mxu0 %v1571
        %1589 = vmatpush.bf16.msra.mxu0 %v1570
        %1590 = vmatpush.bf16.msra.mxu0 %v1569
        %1591 = vmatpush.bf16.msra.mxu0 %v1568
        %1592 = vmatmul.bf16.gmra.mxu0 %v1089
        %v1593 = vpop.f32.mrf.mxu0
        %v1594 = vadd.f32 0.0, %v1593
        %v1595 = vpop.f32.mrf.mxu0
        %v1596 = vadd.f32 0.0, %v1595
        %1597 = vmatmul.bf16.gmra.mxu0 %v1091
        %v1598 = vpop.f32.mrf.mxu0
        %v1599 = vadd.f32 0.0, %v1598
        %v1600 = vpop.f32.mrf.mxu0
        %v1601 = vadd.f32 0.0, %v1600
        %1602 = vmatmul.bf16.gmra.mxu0 %v1093
        %v1603 = vpop.f32.mrf.mxu0
        %v1604 = vadd.f32 0.0, %v1603
        %v1605 = vpop.f32.mrf.mxu0
        %v1606 = vadd.f32 0.0, %v1605
        %1607 = vmatmul.bf16.gmra.mxu0 %v1095
        %v1608 = vpop.f32.mrf.mxu0
        %v1609 = vadd.f32 0.0, %v1608
        %v1610 = vpop.f32.mrf.mxu0
        %v1611 = vadd.f32 0.0, %v1610
        %1612 = vmatmul.bf16.gmra.mxu0 %v1097
        %v1613 = vpop.f32.mrf.mxu0
        %v1614 = vadd.f32 0.0, %v1613
        %v1615 = vpop.f32.mrf.mxu0
        %v1616 = vadd.f32 0.0, %v1615
        %1617 = vmatmul.bf16.gmra.mxu0 %v1099
        %v1618 = vpop.f32.mrf.mxu0
        %v1619 = vadd.f32 0.0, %v1618
        %v1620 = vpop.f32.mrf.mxu0
        %v1621 = vadd.f32 0.0, %v1620
        %1622 = vmatmul.bf16.gmra.mxu0 %v1101
        %v1623 = vpop.f32.mrf.mxu0
        %v1624 = vadd.f32 0.0, %v1623
        %v1625 = vpop.f32.mrf.mxu0
        %v1626 = vadd.f32 0.0, %v1625
        %1627 = vmatmul.bf16.gmra.mxu0 %v1103
        %v1628 = vpop.f32.mrf.mxu0
        %v1629 = vadd.f32 0.0, %v1628
        %v1630 = vpop.f32.mrf.mxu0
        %v1631 = vadd.f32 0.0, %v1630
        %1632 = vmatmul.bf16.gmra.mxu0 %v1105
        %v1633 = vpop.f32.mrf.mxu0
        %v1634 = vadd.f32 0.0, %v1633
        %v1635 = vpop.f32.mrf.mxu0
        %v1636 = vadd.f32 0.0, %v1635
        %1637 = vmatmul.bf16.gmra.mxu0 %v1107
        %v1638 = vpop.f32.mrf.mxu0
        %v1639 = vadd.f32 0.0, %v1638
        %v1640 = vpop.f32.mrf.mxu0
        %v1641 = vadd.f32 0.0, %v1640
        %1642 = vmatmul.bf16.gmra.mxu0 %v1109
        %v1643 = vpop.f32.mrf.mxu0
        %v1644 = vadd.f32 0.0, %v1643
        %v1645 = vpop.f32.mrf.mxu0
        %v1646 = vadd.f32 0.0, %v1645
        %1647 = vmatmul.bf16.gmra.mxu0 %v1111
        %v1648 = vpop.f32.mrf.mxu0
        %v1649 = vadd.f32 0.0, %v1648
        %v1650 = vpop.f32.mrf.mxu0
        %v1651 = vadd.f32 0.0, %v1650
        %1652 = vmatmul.bf16.gmra.mxu0 %v1113
        %v1653 = vpop.f32.mrf.mxu0
        %v1654 = vadd.f32 0.0, %v1653
        %v1655 = vpop.f32.mrf.mxu0
        %v1656 = vadd.f32 0.0, %v1655
        %1657 = vmatmul.bf16.gmra.mxu0 %v1115
        %v1658 = vpop.f32.mrf.mxu0
        %v1659 = vadd.f32 0.0, %v1658
        %v1660 = vpop.f32.mrf.mxu0
        %v1661 = vadd.f32 0.0, %v1660
        %1662 = vmatmul.bf16.gmra.mxu0 %v1117
        %v1663 = vpop.f32.mrf.mxu0
        %v1664 = vadd.f32 0.0, %v1663
        %v1665 = vpop.f32.mrf.mxu0
        %v1666 = vadd.f32 0.0, %v1665
        %1667 = vmatmul.bf16.gmra.mxu0 %v1119
        %v1668 = vpop.f32.mrf.mxu0
        %v1669 = vadd.f32 0.0, %v1668
        %v1670 = vpop.f32.mrf.mxu0
        %v1671 = vadd.f32 0.0, %v1670
        %1672 = vdwg.mxu0
        %1673 = vmatpush.bf16.msra.mxu0 %v1583
        %1674 = vmatpush.bf16.msra.mxu0 %v1582
        %1675 = vmatpush.bf16.msra.mxu0 %v1581
        %1676 = vmatpush.bf16.msra.mxu0 %v1580
        %1677 = vmatpush.bf16.msra.mxu0 %v1579
        %1678 = vmatpush.bf16.msra.mxu0 %v1578
        %1679 = vmatpush.bf16.msra.mxu0 %v1577
        %1680 = vmatpush.bf16.msra.mxu0 %v1576
        %1681 = vmatmul.bf16.gmra.mxu0 %v1090
        %v1682 = vpop.f32.mrf.mxu0
        %v1683 = vadd.f32 %v1594, %v1682
        %v1684 = vpop.f32.mrf.mxu0
        %v1685 = vadd.f32 %v1596, %v1684
        %1686 = vmatmul.bf16.gmra.mxu0 %v1092
        %v1687 = vpop.f32.mrf.mxu0
        %v1688 = vadd.f32 %v1599, %v1687
        %v1689 = vpop.f32.mrf.mxu0
        %v1690 = vadd.f32 %v1601, %v1689
        %1691 = vmatmul.bf16.gmra.mxu0 %v1094
        %v1692 = vpop.f32.mrf.mxu0
        %v1693 = vadd.f32 %v1604, %v1692
        %v1694 = vpop.f32.mrf.mxu0
        %v1695 = vadd.f32 %v1606, %v1694
        %1696 = vmatmul.bf16.gmra.mxu0 %v1096
        %v1697 = vpop.f32.mrf.mxu0
        %v1698 = vadd.f32 %v1609, %v1697
        %v1699 = vpop.f32.mrf.mxu0
        %v1700 = vadd.f32 %v1611, %v1699
        %1701 = vmatmul.bf16.gmra.mxu0 %v1098
        %v1702 = vpop.f32.mrf.mxu0
        %v1703 = vadd.f32 %v1614, %v1702
        %v1704 = vpop.f32.mrf.mxu0
        %v1705 = vadd.f32 %v1616, %v1704
        %1706 = vmatmul.bf16.gmra.mxu0 %v1100
        %v1707 = vpop.f32.mrf.mxu0
        %v1708 = vadd.f32 %v1619, %v1707
        %v1709 = vpop.f32.mrf.mxu0
        %v1710 = vadd.f32 %v1621, %v1709
        %1711 = vmatmul.bf16.gmra.mxu0 %v1102
        %v1712 = vpop.f32.mrf.mxu0
        %v1713 = vadd.f32 %v1624, %v1712
        %v1714 = vpop.f32.mrf.mxu0
        %v1715 = vadd.f32 %v1626, %v1714
        %1716 = vmatmul.bf16.gmra.mxu0 %v1104
        %v1717 = vpop.f32.mrf.mxu0
        %v1718 = vadd.f32 %v1629, %v1717
        %v1719 = vpop.f32.mrf.mxu0
        %v1720 = vadd.f32 %v1631, %v1719
        %1721 = vmatmul.bf16.gmra.mxu0 %v1106
        %v1722 = vpop.f32.mrf.mxu0
        %v1723 = vadd.f32 %v1634, %v1722
        %v1724 = vpop.f32.mrf.mxu0
        %v1725 = vadd.f32 %v1636, %v1724
        %1726 = vmatmul.bf16.gmra.mxu0 %v1108
        %v1727 = vpop.f32.mrf.mxu0
        %v1728 = vadd.f32 %v1639, %v1727
        %v1729 = vpop.f32.mrf.mxu0
        %v1730 = vadd.f32 %v1641, %v1729
        %1731 = vmatmul.bf16.gmra.mxu0 %v1110
        %v1732 = vpop.f32.mrf.mxu0
        %v1733 = vadd.f32 %v1644, %v1732
        %v1734 = vpop.f32.mrf.mxu0
        %v1735 = vadd.f32 %v1646, %v1734
        %1736 = vmatmul.bf16.gmra.mxu0 %v1112
        %v1737 = vpop.f32.mrf.mxu0
        %v1738 = vadd.f32 %v1649, %v1737
        %v1739 = vpop.f32.mrf.mxu0
        %v1740 = vadd.f32 %v1651, %v1739
        %1741 = vmatmul.bf16.gmra.mxu0 %v1114
        %v1742 = vpop.f32.mrf.mxu0
        %v1743 = vadd.f32 %v1654, %v1742
        %v1744 = vpop.f32.mrf.mxu0
        %v1745 = vadd.f32 %v1656, %v1744
        %1746 = vmatmul.bf16.gmra.mxu0 %v1116
        %v1747 = vpop.f32.mrf.mxu0
        %v1748 = vadd.f32 %v1659, %v1747
        %v1749 = vpop.f32.mrf.mxu0
        %v1750 = vadd.f32 %v1661, %v1749
        %1751 = vmatmul.bf16.gmra.mxu0 %v1118
        %v1752 = vpop.f32.mrf.mxu0
        %v1753 = vadd.f32 %v1664, %v1752
        %v1754 = vpop.f32.mrf.mxu0
        %v1755 = vadd.f32 %v1666, %v1754
        %1756 = vmatmul.bf16.gmra.mxu0 %v1120
        %v1757 = vpop.f32.mrf.mxu0
        %v1758 = vadd.f32 %v1669, %v1757
        %v1759 = vpop.f32.mrf.mxu0
        %v1760 = vadd.f32 %v1671, %v1759
        %1761 = vdwg.mxu0
        %v1762 = vpack.c.bf16 %v1685, %v1683
        %v1763 = vpack.c.bf16 %v1690, %v1688
        %v1764 = vpack.c.bf16 %v1695, %v1693
        %v1765 = vpack.c.bf16 %v1700, %v1698
        %v1766 = vpack.c.bf16 %v1705, %v1703
        %v1767 = vpack.c.bf16 %v1710, %v1708
        %v1768 = vpack.c.bf16 %v1715, %v1713
        %v1769 = vpack.c.bf16 %v1720, %v1718
        %v1770 = vpack.c.bf16 %v1725, %v1723
        %v1771 = vpack.c.bf16 %v1730, %v1728
        %v1772 = vpack.c.bf16 %v1735, %v1733
        %v1773 = vpack.c.bf16 %v1740, %v1738
        %v1774 = vpack.c.bf16 %v1745, %v1743
        %v1775 = vpack.c.bf16 %v1750, %v1748
        %v1776 = vpack.c.bf16 %v1755, %v1753
        %v1777 = vpack.c.bf16 %v1760, %v1758
        %v1778 = vld [vmem:[%s6] sm:$0xf]
        %v1779 = vld [vmem:[%s6 + $0x4] sm:$0xf]
        %v1780 = vld [vmem:[%s6 + $0x8] sm:$0xf]
        %v1781 = vld [vmem:[%s6 + $0xc] sm:$0xf]
        %v1782 = vld [vmem:[%s6 + $0x10] sm:$0xf]
        %v1783 = vld [vmem:[%s6 + $0x14] sm:$0xf]
        %v1784 = vld [vmem:[%s6 + $0x18] sm:$0xf]
        %v1785 = vld [vmem:[%s6 + $0x1c] sm:$0xf]
        %v1786 = vld [vmem:[%s6 + $0x20] sm:$0xf]
        %v1787 = vld [vmem:[%s6 + $0x24] sm:$0xf]
        %v1788 = vld [vmem:[%s6 + $0x28] sm:$0xf]
        %v1789 = vld [vmem:[%s6 + $0x2c] sm:$0xf]
        %v1790 = vld [vmem:[%s6 + $0x30] sm:$0xf]
        %v1791 = vld [vmem:[%s6 + $0x34] sm:$0xf]
        %v1792 = vld [vmem:[%s6 + $0x38] sm:$0xf]
        %v1793 = vld [vmem:[%s6 + $0x3c] sm:$0xf]
        %v1794 = vld [vmem:[%s7] sm:$0x1]
        %v1796 = vperm.slane %v1794, 0
        %v1814 = vunpack.c.l.b16 %v1778
        %v1815 = vunpack.c.l.b16 %v1779
        %v1816 = vunpack.c.l.b16 %v1780
        %v1817 = vunpack.c.l.b16 %v1781
        %v1818 = vunpack.c.l.b16 %v1782
        %v1819 = vunpack.c.l.b16 %v1783
        %v1820 = vunpack.c.l.b16 %v1784
        %v1821 = vunpack.c.l.b16 %v1785
        %v1822 = vunpack.c.l.b16 %v1786
        %v1823 = vunpack.c.l.b16 %v1787
        %v1824 = vunpack.c.l.b16 %v1788
        %v1825 = vunpack.c.l.b16 %v1789
        %v1826 = vunpack.c.l.b16 %v1790
        %v1827 = vunpack.c.l.b16 %v1791
        %v1828 = vunpack.c.l.b16 %v1792
        %v1829 = vunpack.c.l.b16 %v1793
        %v1830 = vpack.c.b16 %v1815, %v1814
        %v1831 = vpack.c.b16 %v1817, %v1816
        %v1832 = vpack.c.b16 %v1819, %v1818
        %v1833 = vpack.c.b16 %v1821, %v1820
        %v1834 = vpack.c.b16 %v1823, %v1822
        %v1835 = vpack.c.b16 %v1825, %v1824
        %v1836 = vpack.c.b16 %v1827, %v1826
        %v1837 = vpack.c.b16 %v1829, %v1828
        %1846 = vmatpush.bf16.msra.mxu0 %v1837
        %1847 = vmatpush.bf16.msra.mxu0 %v1836
        %1848 = vmatpush.bf16.msra.mxu0 %v1835
        %1849 = vmatpush.bf16.msra.mxu0 %v1834
        %1850 = vmatpush.bf16.msra.mxu0 %v1833
        %1851 = vmatpush.bf16.msra.mxu0 %v1832
        %1852 = vmatpush.bf16.msra.mxu0 %v1831
        %1853 = vmatpush.bf16.msra.mxu0 %v1830
        %1854 = vmatmul.bf16.gmra.mxu0 %v1762
        %v1855 = vpop.f32.mrf.mxu0
        %v1856 = vadd.f32 %v1796, %v1855
        %v1857 = vpop.f32.mrf.mxu0
        %v1858 = vadd.f32 %v1796, %v1857
        %1859 = vmatmul.bf16.gmra.mxu0 %v1763
        %v1860 = vpop.f32.mrf.mxu0
        %v1861 = vadd.f32 %v1796, %v1860
        %v1862 = vpop.f32.mrf.mxu0
        %v1863 = vadd.f32 %v1796, %v1862
        %1864 = vmatmul.bf16.gmra.mxu0 %v1764
        %v1865 = vpop.f32.mrf.mxu0
        %v1866 = vadd.f32 %v1796, %v1865
        %v1867 = vpop.f32.mrf.mxu0
        %v1868 = vadd.f32 %v1796, %v1867
        %1869 = vmatmul.bf16.gmra.mxu0 %v1765
        %v1870 = vpop.f32.mrf.mxu0
        %v1871 = vadd.f32 %v1796, %v1870
        %v1872 = vpop.f32.mrf.mxu0
        %v1873 = vadd.f32 %v1796, %v1872
        %1874 = vmatmul.bf16.gmra.mxu0 %v1766
        %v1875 = vpop.f32.mrf.mxu0
        %v1876 = vadd.f32 %v1796, %v1875
        %v1877 = vpop.f32.mrf.mxu0
        %v1878 = vadd.f32 %v1796, %v1877
        %1879 = vmatmul.bf16.gmra.mxu0 %v1767
        %v1880 = vpop.f32.mrf.mxu0
        %v1881 = vadd.f32 %v1796, %v1880
        %v1882 = vpop.f32.mrf.mxu0
        %v1883 = vadd.f32 %v1796, %v1882
        %1884 = vmatmul.bf16.gmra.mxu0 %v1768
        %v1885 = vpop.f32.mrf.mxu0
        %v1886 = vadd.f32 %v1796, %v1885
        %v1887 = vpop.f32.mrf.mxu0
        %v1888 = vadd.f32 %v1796, %v1887
        %1889 = vmatmul.bf16.gmra.mxu0 %v1769
        %v1890 = vpop.f32.mrf.mxu0
        %v1891 = vadd.f32 %v1796, %v1890
        %v1892 = vpop.f32.mrf.mxu0
        %v1893 = vadd.f32 %v1796, %v1892
        %1894 = vmatmul.bf16.gmra.mxu0 %v1770
        %v1895 = vpop.f32.mrf.mxu0
        %v1896 = vadd.f32 %v1796, %v1895
        %v1897 = vpop.f32.mrf.mxu0
        %v1898 = vadd.f32 %v1796, %v1897
        %1899 = vmatmul.bf16.gmra.mxu0 %v1771
        %v1900 = vpop.f32.mrf.mxu0
        %v1901 = vadd.f32 %v1796, %v1900
        %v1902 = vpop.f32.mrf.mxu0
        %v1903 = vadd.f32 %v1796, %v1902
        %1904 = vmatmul.bf16.gmra.mxu0 %v1772
        %v1905 = vpop.f32.mrf.mxu0
        %v1906 = vadd.f32 %v1796, %v1905
        %v1907 = vpop.f32.mrf.mxu0
        %v1908 = vadd.f32 %v1796, %v1907
        %1909 = vmatmul.bf16.gmra.mxu0 %v1773
        %v1910 = vpop.f32.mrf.mxu0
        %v1911 = vadd.f32 %v1796, %v1910
        %v1912 = vpop.f32.mrf.mxu0
        %v1913 = vadd.f32 %v1796, %v1912
        %1914 = vmatmul.bf16.gmra.mxu0 %v1774
        %v1915 = vpop.f32.mrf.mxu0
        %v1916 = vadd.f32 %v1796, %v1915
        %v1917 = vpop.f32.mrf.mxu0
        %v1918 = vadd.f32 %v1796, %v1917
        %1919 = vmatmul.bf16.gmra.mxu0 %v1775
        %v1920 = vpop.f32.mrf.mxu0
        %v1921 = vadd.f32 %v1796, %v1920
        %v1922 = vpop.f32.mrf.mxu0
        %v1923 = vadd.f32 %v1796, %v1922
        %1924 = vmatmul.bf16.gmra.mxu0 %v1776
        %v1925 = vpop.f32.mrf.mxu0
        %v1926 = vadd.f32 %v1796, %v1925
        %v1927 = vpop.f32.mrf.mxu0
        %v1928 = vadd.f32 %v1796, %v1927
        %1929 = vmatmul.bf16.gmra.mxu0 %v1777
        %v1930 = vpop.f32.mrf.mxu0
        %v1931 = vadd.f32 %v1796, %v1930
        %v1932 = vpop.f32.mrf.mxu0
        %v1933 = vadd.f32 %v1796, %v1932
        %1934 = vdwg.mxu0
        %v1935 = vmax.f32 %v1856, 0.0
        %v1936 = vmax.f32 %v1858, 0.0
        %v1937 = vmax.f32 %v1861, 0.0
        %v1938 = vmax.f32 %v1863, 0.0
        %v1939 = vmax.f32 %v1866, 0.0
        %v1940 = vmax.f32 %v1868, 0.0
        %v1941 = vmax.f32 %v1871, 0.0
        %v1942 = vmax.f32 %v1873, 0.0
        %v1943 = vmax.f32 %v1876, 0.0
        %v1944 = vmax.f32 %v1878, 0.0
        %v1945 = vmax.f32 %v1881, 0.0
        %v1946 = vmax.f32 %v1883, 0.0
        %v1947 = vmax.f32 %v1886, 0.0
        %v1948 = vmax.f32 %v1888, 0.0
        %v1949 = vmax.f32 %v1891, 0.0
        %v1950 = vmax.f32 %v1893, 0.0
        %v1951 = vmax.f32 %v1896, 0.0
        %v1952 = vmax.f32 %v1898, 0.0
        %v1953 = vmax.f32 %v1901, 0.0
        %v1954 = vmax.f32 %v1903, 0.0
        %v1955 = vmax.f32 %v1906, 0.0
        %v1956 = vmax.f32 %v1908, 0.0
        %v1957 = vmax.f32 %v1911, 0.0
        %v1958 = vmax.f32 %v1913, 0.0
        %v1959 = vmax.f32 %v1916, 0.0
        %v1960 = vmax.f32 %v1918, 0.0
        %v1961 = vmax.f32 %v1921, 0.0
        %v1962 = vmax.f32 %v1923, 0.0
        %v1963 = vmax.f32 %v1926, 0.0
        %v1964 = vmax.f32 %v1928, 0.0
        %v1965 = vmax.f32 %v1931, 0.0
        %v1966 = vmax.f32 %v1933, 0.0
        %v1967 = vpack.c.bf16 %v1936, %v1935
        %v1968 = vpack.c.bf16 %v1938, %v1937
        %v1969 = vpack.c.bf16 %v1940, %v1939
        %v1970 = vpack.c.bf16 %v1942, %v1941
        %v1971 = vpack.c.bf16 %v1944, %v1943
        %v1972 = vpack.c.bf16 %v1946, %v1945
        %v1973 = vpack.c.bf16 %v1948, %v1947
        %v1974 = vpack.c.bf16 %v1950, %v1949
        %v1975 = vpack.c.bf16 %v1952, %v1951
        %v1976 = vpack.c.bf16 %v1954, %v1953
        %v1977 = vpack.c.bf16 %v1956, %v1955
        %v1978 = vpack.c.bf16 %v1958, %v1957
        %v1979 = vpack.c.bf16 %v1960, %v1959
        %v1980 = vpack.c.bf16 %v1962, %v1961
        %v1981 = vpack.c.bf16 %v1964, %v1963
        %v1982 = vpack.c.bf16 %v1966, %v1965
        %v1983 = vld [vmem:[%s8] sm:$0xf]
        %v1984 = vld [vmem:[%s8 + $0x4] sm:$0xf]
        %v1985 = vld [vmem:[%s8 + $0x8] sm:$0xf]
        %v1986 = vld [vmem:[%s8 + $0xc] sm:$0xf]
        %v1987 = vld [vmem:[%s8 + $0x10] sm:$0xf]
        %v1988 = vld [vmem:[%s8 + $0x14] sm:$0xf]
        %v1989 = vld [vmem:[%s8 + $0x18] sm:$0xf]
        %v1990 = vld [vmem:[%s8 + $0x1c] sm:$0xf]
        %v1991 = vld [vmem:[%s8 + $0x20] sm:$0xf]
        %v1992 = vld [vmem:[%s8 + $0x24] sm:$0xf]
        %v1993 = vld [vmem:[%s8 + $0x28] sm:$0xf]
        %v1994 = vld [vmem:[%s8 + $0x2c] sm:$0xf]
        %v1995 = vld [vmem:[%s8 + $0x30] sm:$0xf]
        %v1996 = vld [vmem:[%s8 + $0x34] sm:$0xf]
        %v1997 = vld [vmem:[%s8 + $0x38] sm:$0xf]
        %v1998 = vld [vmem:[%s8 + $0x3c] sm:$0xf]
        %v1999 = vld [vmem:[%s9] sm:$0x1]
        %v2001 = vperm.slane %v1999, 0
        %v2019 = vunpack.c.l.b16 %v1983
        %v2020 = vunpack.c.l.b16 %v1984
        %v2021 = vunpack.c.l.b16 %v1985
        %v2022 = vunpack.c.l.b16 %v1986
        %v2023 = vunpack.c.l.b16 %v1987
        %v2024 = vunpack.c.l.b16 %v1988
        %v2025 = vunpack.c.l.b16 %v1989
        %v2026 = vunpack.c.l.b16 %v1990
        %v2027 = vunpack.c.l.b16 %v1991
        %v2028 = vunpack.c.l.b16 %v1992
        %v2029 = vunpack.c.l.b16 %v1993
        %v2030 = vunpack.c.l.b16 %v1994
        %v2031 = vunpack.c.l.b16 %v1995
        %v2032 = vunpack.c.l.b16 %v1996
        %v2033 = vunpack.c.l.b16 %v1997
        %v2034 = vunpack.c.l.b16 %v1998
        %v2035 = vpack.c.b16 %v2020, %v2019
        %v2036 = vpack.c.b16 %v2022, %v2021
        %v2037 = vpack.c.b16 %v2024, %v2023
        %v2038 = vpack.c.b16 %v2026, %v2025
        %v2039 = vpack.c.b16 %v2028, %v2027
        %v2040 = vpack.c.b16 %v2030, %v2029
        %v2041 = vpack.c.b16 %v2032, %v2031
        %v2042 = vpack.c.b16 %v2034, %v2033
        %2051 = vmatpush.bf16.msra.mxu0 %v2042
        %2052 = vmatpush.bf16.msra.mxu0 %v2041
        %2053 = vmatpush.bf16.msra.mxu0 %v2040
        %2054 = vmatpush.bf16.msra.mxu0 %v2039
        %2055 = vmatpush.bf16.msra.mxu0 %v2038
        %2056 = vmatpush.bf16.msra.mxu0 %v2037
        %2057 = vmatpush.bf16.msra.mxu0 %v2036
        %2058 = vmatpush.bf16.msra.mxu0 %v2035
        %2059 = vmatmul.bf16.gmra.mxu0 %v1967
        %v2060 = vpop.f32.mrf.mxu0
        %v2061 = vadd.f32 %v2001, %v2060
        %v2062 = vpop.f32.mrf.mxu0
        %v2063 = vadd.f32 %v2001, %v2062
        %2064 = vmatmul.bf16.gmra.mxu0 %v1968
        %v2065 = vpop.f32.mrf.mxu0
        %v2066 = vadd.f32 %v2001, %v2065
        %v2067 = vpop.f32.mrf.mxu0
        %v2068 = vadd.f32 %v2001, %v2067
        %2069 = vmatmul.bf16.gmra.mxu0 %v1969
        %v2070 = vpop.f32.mrf.mxu0
        %v2071 = vadd.f32 %v2001, %v2070
        %v2072 = vpop.f32.mrf.mxu0
        %v2073 = vadd.f32 %v2001, %v2072
        %2074 = vmatmul.bf16.gmra.mxu0 %v1970
        %v2075 = vpop.f32.mrf.mxu0
        %v2076 = vadd.f32 %v2001, %v2075
        %v2077 = vpop.f32.mrf.mxu0
        %v2078 = vadd.f32 %v2001, %v2077
        %2079 = vmatmul.bf16.gmra.mxu0 %v1971
        %v2080 = vpop.f32.mrf.mxu0
        %v2081 = vadd.f32 %v2001, %v2080
        %v2082 = vpop.f32.mrf.mxu0
        %v2083 = vadd.f32 %v2001, %v2082
        %2084 = vmatmul.bf16.gmra.mxu0 %v1972
        %v2085 = vpop.f32.mrf.mxu0
        %v2086 = vadd.f32 %v2001, %v2085
        %v2087 = vpop.f32.mrf.mxu0
        %v2088 = vadd.f32 %v2001, %v2087
        %2089 = vmatmul.bf16.gmra.mxu0 %v1973
        %v2090 = vpop.f32.mrf.mxu0
        %v2091 = vadd.f32 %v2001, %v2090
        %v2092 = vpop.f32.mrf.mxu0
        %v2093 = vadd.f32 %v2001, %v2092
        %2094 = vmatmul.bf16.gmra.mxu0 %v1974
        %v2095 = vpop.f32.mrf.mxu0
        %v2096 = vadd.f32 %v2001, %v2095
        %v2097 = vpop.f32.mrf.mxu0
        %v2098 = vadd.f32 %v2001, %v2097
        %2099 = vmatmul.bf16.gmra.mxu0 %v1975
        %v2100 = vpop.f32.mrf.mxu0
        %v2101 = vadd.f32 %v2001, %v2100
        %v2102 = vpop.f32.mrf.mxu0
        %v2103 = vadd.f32 %v2001, %v2102
        %2104 = vmatmul.bf16.gmra.mxu0 %v1976
        %v2105 = vpop.f32.mrf.mxu0
        %v2106 = vadd.f32 %v2001, %v2105
        %v2107 = vpop.f32.mrf.mxu0
        %v2108 = vadd.f32 %v2001, %v2107
        %2109 = vmatmul.bf16.gmra.mxu0 %v1977
        %v2110 = vpop.f32.mrf.mxu0
        %v2111 = vadd.f32 %v2001, %v2110
        %v2112 = vpop.f32.mrf.mxu0
        %v2113 = vadd.f32 %v2001, %v2112
        %2114 = vmatmul.bf16.gmra.mxu0 %v1978
        %v2115 = vpop.f32.mrf.mxu0
        %v2116 = vadd.f32 %v2001, %v2115
        %v2117 = vpop.f32.mrf.mxu0
        %v2118 = vadd.f32 %v2001, %v2117
        %2119 = vmatmul.bf16.gmra.mxu0 %v1979
        %v2120 = vpop.f32.mrf.mxu0
        %v2121 = vadd.f32 %v2001, %v2120
        %v2122 = vpop.f32.mrf.mxu0
        %v2123 = vadd.f32 %v2001, %v2122
        %2124 = vmatmul.bf16.gmra.mxu0 %v1980
        %v2125 = vpop.f32.mrf.mxu0
        %v2126 = vadd.f32 %v2001, %v2125
        %v2127 = vpop.f32.mrf.mxu0
        %v2128 = vadd.f32 %v2001, %v2127
        %2129 = vmatmul.bf16.gmra.mxu0 %v1981
        %v2130 = vpop.f32.mrf.mxu0
        %v2131 = vadd.f32 %v2001, %v2130
        %v2132 = vpop.f32.mrf.mxu0
        %v2133 = vadd.f32 %v2001, %v2132
        %2134 = vmatmul.bf16.gmra.mxu0 %v1982
        %v2135 = vpop.f32.mrf.mxu0
        %v2136 = vadd.f32 %v2001, %v2135
        %v2137 = vpop.f32.mrf.mxu0
        %v2138 = vadd.f32 %v2001, %v2137
        %2139 = vdwg.mxu0
        %v2140 = vmax.f32 %v2061, 0.0
        %v2141 = vmax.f32 %v2063, 0.0
        %v2142 = vmax.f32 %v2066, 0.0
        %v2143 = vmax.f32 %v2068, 0.0
        %v2144 = vmax.f32 %v2071, 0.0
        %v2145 = vmax.f32 %v2073, 0.0
        %v2146 = vmax.f32 %v2076, 0.0
        %v2147 = vmax.f32 %v2078, 0.0
        %v2148 = vmax.f32 %v2081, 0.0
        %v2149 = vmax.f32 %v2083, 0.0
        %v2150 = vmax.f32 %v2086, 0.0
        %v2151 = vmax.f32 %v2088, 0.0
        %v2152 = vmax.f32 %v2091, 0.0
        %v2153 = vmax.f32 %v2093, 0.0
        %v2154 = vmax.f32 %v2096, 0.0
        %v2155 = vmax.f32 %v2098, 0.0
        %v2156 = vmax.f32 %v2101, 0.0
        %v2157 = vmax.f32 %v2103, 0.0
        %v2158 = vmax.f32 %v2106, 0.0
        %v2159 = vmax.f32 %v2108, 0.0
        %v2160 = vmax.f32 %v2111, 0.0
        %v2161 = vmax.f32 %v2113, 0.0
        %v2162 = vmax.f32 %v2116, 0.0
        %v2163 = vmax.f32 %v2118, 0.0
        %v2164 = vmax.f32 %v2121, 0.0
        %v2165 = vmax.f32 %v2123, 0.0
        %v2166 = vmax.f32 %v2126, 0.0
        %v2167 = vmax.f32 %v2128, 0.0
        %v2168 = vmax.f32 %v2131, 0.0
        %v2169 = vmax.f32 %v2133, 0.0
        %v2170 = vmax.f32 %v2136, 0.0
        %v2171 = vmax.f32 %v2138, 0.0
        %v2172 = vpack.c.bf16 %v2141, %v2140
        %v2173 = vpack.c.bf16 %v2143, %v2142
        %v2174 = vpack.c.bf16 %v2145, %v2144
        %v2175 = vpack.c.bf16 %v2147, %v2146
        %v2176 = vpack.c.bf16 %v2149, %v2148
        %v2177 = vpack.c.bf16 %v2151, %v2150
        %v2178 = vpack.c.bf16 %v2153, %v2152
        %v2179 = vpack.c.bf16 %v2155, %v2154
        %v2180 = vpack.c.bf16 %v2157, %v2156
        %v2181 = vpack.c.bf16 %v2159, %v2158
        %v2182 = vpack.c.bf16 %v2161, %v2160
        %v2183 = vpack.c.bf16 %v2163, %v2162
        %v2184 = vpack.c.bf16 %v2165, %v2164
        %v2185 = vpack.c.bf16 %v2167, %v2166
        %v2186 = vpack.c.bf16 %v2169, %v2168
        %v2187 = vpack.c.bf16 %v2171, %v2170
        %2188 = vmatpush.bf16.msra.mxu0 %v2179
        %2189 = vmatpush.bf16.msra.mxu0 %v2178
        %2190 = vmatpush.bf16.msra.mxu0 %v2177
        %2191 = vmatpush.bf16.msra.mxu0 %v2176
        %2192 = vmatpush.bf16.msra.mxu0 %v2175
        %2193 = vmatpush.bf16.msra.mxu0 %v2174
        %2194 = vmatpush.bf16.msra.mxu0 %v2173
        %2195 = vmatpush.bf16.msra.mxu0 %v2172
        %2196 = vmatmul.bf16.gmra.mxu0 %v1089
        %v2197 = vpop.f32.mrf.mxu0
        %v2198 = vadd.f32 0.0, %v2197
        %v2199 = vpop.f32.mrf.mxu0
        %v2200 = vadd.f32 0.0, %v2199
        %2201 = vmatmul.bf16.gmra.mxu0 %v1091
        %v2202 = vpop.f32.mrf.mxu0
        %v2203 = vadd.f32 0.0, %v2202
        %v2204 = vpop.f32.mrf.mxu0
        %v2205 = vadd.f32 0.0, %v2204
        %2206 = vmatmul.bf16.gmra.mxu0 %v1093
        %v2207 = vpop.f32.mrf.mxu0
        %v2208 = vadd.f32 0.0, %v2207
        %v2209 = vpop.f32.mrf.mxu0
        %v2210 = vadd.f32 0.0, %v2209
        %2211 = vmatmul.bf16.gmra.mxu0 %v1095
        %v2212 = vpop.f32.mrf.mxu0
        %v2213 = vadd.f32 0.0, %v2212
        %v2214 = vpop.f32.mrf.mxu0
        %v2215 = vadd.f32 0.0, %v2214
        %2216 = vmatmul.bf16.gmra.mxu0 %v1097
        %v2217 = vpop.f32.mrf.mxu0
        %v2218 = vadd.f32 0.0, %v2217
        %v2219 = vpop.f32.mrf.mxu0
        %v2220 = vadd.f32 0.0, %v2219
        %2221 = vmatmul.bf16.gmra.mxu0 %v1099
        %v2222 = vpop.f32.mrf.mxu0
        %v2223 = vadd.f32 0.0, %v2222
        %v2224 = vpop.f32.mrf.mxu0
        %v2225 = vadd.f32 0.0, %v2224
        %2226 = vmatmul.bf16.gmra.mxu0 %v1101
        %v2227 = vpop.f32.mrf.mxu0
        %v2228 = vadd.f32 0.0, %v2227
        %v2229 = vpop.f32.mrf.mxu0
        %v2230 = vadd.f32 0.0, %v2229
        %2231 = vmatmul.bf16.gmra.mxu0 %v1103
        %v2232 = vpop.f32.mrf.mxu0
        %v2233 = vadd.f32 0.0, %v2232
        %v2234 = vpop.f32.mrf.mxu0
        %v2235 = vadd.f32 0.0, %v2234
        %2236 = vmatmul.bf16.gmra.mxu0 %v1105
        %v2237 = vpop.f32.mrf.mxu0
        %v2238 = vadd.f32 0.0, %v2237
        %v2239 = vpop.f32.mrf.mxu0
        %v2240 = vadd.f32 0.0, %v2239
        %2241 = vmatmul.bf16.gmra.mxu0 %v1107
        %v2242 = vpop.f32.mrf.mxu0
        %v2243 = vadd.f32 0.0, %v2242
        %v2244 = vpop.f32.mrf.mxu0
        %v2245 = vadd.f32 0.0, %v2244
        %2246 = vmatmul.bf16.gmra.mxu0 %v1109
        %v2247 = vpop.f32.mrf.mxu0
        %v2248 = vadd.f32 0.0, %v2247
        %v2249 = vpop.f32.mrf.mxu0
        %v2250 = vadd.f32 0.0, %v2249
        %2251 = vmatmul.bf16.gmra.mxu0 %v1111
        %v2252 = vpop.f32.mrf.mxu0
        %v2253 = vadd.f32 0.0, %v2252
        %v2254 = vpop.f32.mrf.mxu0
        %v2255 = vadd.f32 0.0, %v2254
        %2256 = vmatmul.bf16.gmra.mxu0 %v1113
        %v2257 = vpop.f32.mrf.mxu0
        %v2258 = vadd.f32 0.0, %v2257
        %v2259 = vpop.f32.mrf.mxu0
        %v2260 = vadd.f32 0.0, %v2259
        %2261 = vmatmul.bf16.gmra.mxu0 %v1115
        %v2262 = vpop.f32.mrf.mxu0
        %v2263 = vadd.f32 0.0, %v2262
        %v2264 = vpop.f32.mrf.mxu0
        %v2265 = vadd.f32 0.0, %v2264
        %2266 = vmatmul.bf16.gmra.mxu0 %v1117
        %v2267 = vpop.f32.mrf.mxu0
        %v2268 = vadd.f32 0.0, %v2267
        %v2269 = vpop.f32.mrf.mxu0
        %v2270 = vadd.f32 0.0, %v2269
        %2271 = vmatmul.bf16.gmra.mxu0 %v1119
        %v2272 = vpop.f32.mrf.mxu0
        %v2273 = vadd.f32 0.0, %v2272
        %v2274 = vpop.f32.mrf.mxu0
        %v2275 = vadd.f32 0.0, %v2274
        %2276 = vdwg.mxu0
        %2277 = vmatpush.bf16.msra.mxu0 %v2187
        %2278 = vmatpush.bf16.msra.mxu0 %v2186
        %2279 = vmatpush.bf16.msra.mxu0 %v2185
        %2280 = vmatpush.bf16.msra.mxu0 %v2184
        %2281 = vmatpush.bf16.msra.mxu0 %v2183
        %2282 = vmatpush.bf16.msra.mxu0 %v2182
        %2283 = vmatpush.bf16.msra.mxu0 %v2181
        %2284 = vmatpush.bf16.msra.mxu0 %v2180
        %2285 = vmatmul.bf16.gmra.mxu0 %v1090
        %v2286 = vpop.f32.mrf.mxu0
        %v2287 = vadd.f32 %v2198, %v2286
        %v2288 = vpop.f32.mrf.mxu0
        %v2289 = vadd.f32 %v2200, %v2288
        %2290 = vmatmul.bf16.gmra.mxu0 %v1092
        %v2291 = vpop.f32.mrf.mxu0
        %v2292 = vadd.f32 %v2203, %v2291
        %v2293 = vpop.f32.mrf.mxu0
        %v2294 = vadd.f32 %v2205, %v2293
        %2295 = vmatmul.bf16.gmra.mxu0 %v1094
        %v2296 = vpop.f32.mrf.mxu0
        %v2297 = vadd.f32 %v2208, %v2296
        %v2298 = vpop.f32.mrf.mxu0
        %v2299 = vadd.f32 %v2210, %v2298
        %2300 = vmatmul.bf16.gmra.mxu0 %v1096
        %v2301 = vpop.f32.mrf.mxu0
        %v2302 = vadd.f32 %v2213, %v2301
        %v2303 = vpop.f32.mrf.mxu0
        %v2304 = vadd.f32 %v2215, %v2303
        %2305 = vmatmul.bf16.gmra.mxu0 %v1098
        %v2306 = vpop.f32.mrf.mxu0
        %v2307 = vadd.f32 %v2218, %v2306
        %v2308 = vpop.f32.mrf.mxu0
        %v2309 = vadd.f32 %v2220, %v2308
        %2310 = vmatmul.bf16.gmra.mxu0 %v1100
        %v2311 = vpop.f32.mrf.mxu0
        %v2312 = vadd.f32 %v2223, %v2311
        %v2313 = vpop.f32.mrf.mxu0
        %v2314 = vadd.f32 %v2225, %v2313
        %2315 = vmatmul.bf16.gmra.mxu0 %v1102
        %v2316 = vpop.f32.mrf.mxu0
        %v2317 = vadd.f32 %v2228, %v2316
        %v2318 = vpop.f32.mrf.mxu0
        %v2319 = vadd.f32 %v2230, %v2318
        %2320 = vmatmul.bf16.gmra.mxu0 %v1104
        %v2321 = vpop.f32.mrf.mxu0
        %v2322 = vadd.f32 %v2233, %v2321
        %v2323 = vpop.f32.mrf.mxu0
        %v2324 = vadd.f32 %v2235, %v2323
        %2325 = vmatmul.bf16.gmra.mxu0 %v1106
        %v2326 = vpop.f32.mrf.mxu0
        %v2327 = vadd.f32 %v2238, %v2326
        %v2328 = vpop.f32.mrf.mxu0
        %v2329 = vadd.f32 %v2240, %v2328
        %2330 = vmatmul.bf16.gmra.mxu0 %v1108
        %v2331 = vpop.f32.mrf.mxu0
        %v2332 = vadd.f32 %v2243, %v2331
        %v2333 = vpop.f32.mrf.mxu0
        %v2334 = vadd.f32 %v2245, %v2333
        %2335 = vmatmul.bf16.gmra.mxu0 %v1110
        %v2336 = vpop.f32.mrf.mxu0
        %v2337 = vadd.f32 %v2248, %v2336
        %v2338 = vpop.f32.mrf.mxu0
        %v2339 = vadd.f32 %v2250, %v2338
        %2340 = vmatmul.bf16.gmra.mxu0 %v1112
        %v2341 = vpop.f32.mrf.mxu0
        %v2342 = vadd.f32 %v2253, %v2341
        %v2343 = vpop.f32.mrf.mxu0
        %v2344 = vadd.f32 %v2255, %v2343
        %2345 = vmatmul.bf16.gmra.mxu0 %v1114
        %v2346 = vpop.f32.mrf.mxu0
        %v2347 = vadd.f32 %v2258, %v2346
        %v2348 = vpop.f32.mrf.mxu0
        %v2349 = vadd.f32 %v2260, %v2348
        %2350 = vmatmul.bf16.gmra.mxu0 %v1116
        %v2351 = vpop.f32.mrf.mxu0
        %v2352 = vadd.f32 %v2263, %v2351
        %v2353 = vpop.f32.mrf.mxu0
        %v2354 = vadd.f32 %v2265, %v2353
        %2355 = vmatmul.bf16.gmra.mxu0 %v1118
        %v2356 = vpop.f32.mrf.mxu0
        %v2357 = vadd.f32 %v2268, %v2356
        %v2358 = vpop.f32.mrf.mxu0
        %v2359 = vadd.f32 %v2270, %v2358
        %2360 = vmatmul.bf16.gmra.mxu0 %v1120
        %v2361 = vpop.f32.mrf.mxu0
        %v2362 = vadd.f32 %v2273, %v2361
        %v2363 = vpop.f32.mrf.mxu0
        %v2364 = vadd.f32 %v2275, %v2363
        %2365 = vdwg.mxu0
        %v2366 = vpack.c.bf16 %v2289, %v2287
        %v2367 = vpack.c.bf16 %v2294, %v2292
        %v2368 = vpack.c.bf16 %v2299, %v2297
        %v2369 = vpack.c.bf16 %v2304, %v2302
        %v2370 = vpack.c.bf16 %v2309, %v2307
        %v2371 = vpack.c.bf16 %v2314, %v2312
        %v2372 = vpack.c.bf16 %v2319, %v2317
        %v2373 = vpack.c.bf16 %v2324, %v2322
        %v2374 = vpack.c.bf16 %v2329, %v2327
        %v2375 = vpack.c.bf16 %v2334, %v2332
        %v2376 = vpack.c.bf16 %v2339, %v2337
        %v2377 = vpack.c.bf16 %v2344, %v2342
        %v2378 = vpack.c.bf16 %v2349, %v2347
        %v2379 = vpack.c.bf16 %v2354, %v2352
        %v2380 = vpack.c.bf16 %v2359, %v2357
        %v2381 = vpack.c.bf16 %v2364, %v2362
        %v2382 = vld [vmem:[%s10] sm:$0xf]
        %v2383 = vld [vmem:[%s10 + $0x4] sm:$0xf]
        %v2384 = vld [vmem:[%s10 + $0x8] sm:$0xf]
        %v2385 = vld [vmem:[%s10 + $0xc] sm:$0xf]
        %v2386 = vld [vmem:[%s10 + $0x10] sm:$0xf]
        %v2387 = vld [vmem:[%s10 + $0x14] sm:$0xf]
        %v2388 = vld [vmem:[%s10 + $0x18] sm:$0xf]
        %v2389 = vld [vmem:[%s10 + $0x1c] sm:$0xf]
        %v2390 = vld [vmem:[%s10 + $0x20] sm:$0xf]
        %v2391 = vld [vmem:[%s10 + $0x24] sm:$0xf]
        %v2392 = vld [vmem:[%s10 + $0x28] sm:$0xf]
        %v2393 = vld [vmem:[%s10 + $0x2c] sm:$0xf]
        %v2394 = vld [vmem:[%s10 + $0x30] sm:$0xf]
        %v2395 = vld [vmem:[%s10 + $0x34] sm:$0xf]
        %v2396 = vld [vmem:[%s10 + $0x38] sm:$0xf]
        %v2397 = vld [vmem:[%s10 + $0x3c] sm:$0xf]
        %v2398 = vld [vmem:[%s11] sm:$0x1]
        %v2400 = vperm.slane %v2398, 0
        %v2418 = vunpack.c.l.b16 %v2382
        %v2419 = vunpack.c.l.b16 %v2383
        %v2420 = vunpack.c.l.b16 %v2384
        %v2421 = vunpack.c.l.b16 %v2385
        %v2422 = vunpack.c.l.b16 %v2386
        %v2423 = vunpack.c.l.b16 %v2387
        %v2424 = vunpack.c.l.b16 %v2388
        %v2425 = vunpack.c.l.b16 %v2389
        %v2426 = vunpack.c.l.b16 %v2390
        %v2427 = vunpack.c.l.b16 %v2391
        %v2428 = vunpack.c.l.b16 %v2392
        %v2429 = vunpack.c.l.b16 %v2393
        %v2430 = vunpack.c.l.b16 %v2394
        %v2431 = vunpack.c.l.b16 %v2395
        %v2432 = vunpack.c.l.b16 %v2396
        %v2433 = vunpack.c.l.b16 %v2397
        %v2434 = vpack.c.b16 %v2419, %v2418
        %v2435 = vpack.c.b16 %v2421, %v2420
        %v2436 = vpack.c.b16 %v2423, %v2422
        %v2437 = vpack.c.b16 %v2425, %v2424
        %v2438 = vpack.c.b16 %v2427, %v2426
        %v2439 = vpack.c.b16 %v2429, %v2428
        %v2440 = vpack.c.b16 %v2431, %v2430
        %v2441 = vpack.c.b16 %v2433, %v2432
        %2450 = vmatpush.bf16.msra.mxu0 %v2441
        %2451 = vmatpush.bf16.msra.mxu0 %v2440
        %2452 = vmatpush.bf16.msra.mxu0 %v2439
        %2453 = vmatpush.bf16.msra.mxu0 %v2438
        %2454 = vmatpush.bf16.msra.mxu0 %v2437
        %2455 = vmatpush.bf16.msra.mxu0 %v2436
        %2456 = vmatpush.bf16.msra.mxu0 %v2435
        %2457 = vmatpush.bf16.msra.mxu0 %v2434
        %2458 = vmatmul.bf16.gmra.mxu0 %v2366
        %v2459 = vpop.f32.mrf.mxu0
        %v2460 = vadd.f32 %v2400, %v2459
        %v2461 = vpop.f32.mrf.mxu0
        %v2462 = vadd.f32 %v2400, %v2461
        %2463 = vmatmul.bf16.gmra.mxu0 %v2367
        %v2464 = vpop.f32.mrf.mxu0
        %v2465 = vadd.f32 %v2400, %v2464
        %v2466 = vpop.f32.mrf.mxu0
        %v2467 = vadd.f32 %v2400, %v2466
        %2468 = vmatmul.bf16.gmra.mxu0 %v2368
        %v2469 = vpop.f32.mrf.mxu0
        %v2470 = vadd.f32 %v2400, %v2469
        %v2471 = vpop.f32.mrf.mxu0
        %v2472 = vadd.f32 %v2400, %v2471
        %2473 = vmatmul.bf16.gmra.mxu0 %v2369
        %v2474 = vpop.f32.mrf.mxu0
        %v2475 = vadd.f32 %v2400, %v2474
        %v2476 = vpop.f32.mrf.mxu0
        %v2477 = vadd.f32 %v2400, %v2476
        %2478 = vmatmul.bf16.gmra.mxu0 %v2370
        %v2479 = vpop.f32.mrf.mxu0
        %v2480 = vadd.f32 %v2400, %v2479
        %v2481 = vpop.f32.mrf.mxu0
        %v2482 = vadd.f32 %v2400, %v2481
        %2483 = vmatmul.bf16.gmra.mxu0 %v2371
        %v2484 = vpop.f32.mrf.mxu0
        %v2485 = vadd.f32 %v2400, %v2484
        %v2486 = vpop.f32.mrf.mxu0
        %v2487 = vadd.f32 %v2400, %v2486
        %2488 = vmatmul.bf16.gmra.mxu0 %v2372
        %v2489 = vpop.f32.mrf.mxu0
        %v2490 = vadd.f32 %v2400, %v2489
        %v2491 = vpop.f32.mrf.mxu0
        %v2492 = vadd.f32 %v2400, %v2491
        %2493 = vmatmul.bf16.gmra.mxu0 %v2373
        %v2494 = vpop.f32.mrf.mxu0
        %v2495 = vadd.f32 %v2400, %v2494
        %v2496 = vpop.f32.mrf.mxu0
        %v2497 = vadd.f32 %v2400, %v2496
        %2498 = vmatmul.bf16.gmra.mxu0 %v2374
        %v2499 = vpop.f32.mrf.mxu0
        %v2500 = vadd.f32 %v2400, %v2499
        %v2501 = vpop.f32.mrf.mxu0
        %v2502 = vadd.f32 %v2400, %v2501
        %2503 = vmatmul.bf16.gmra.mxu0 %v2375
        %v2504 = vpop.f32.mrf.mxu0
        %v2505 = vadd.f32 %v2400, %v2504
        %v2506 = vpop.f32.mrf.mxu0
        %v2507 = vadd.f32 %v2400, %v2506
        %2508 = vmatmul.bf16.gmra.mxu0 %v2376
        %v2509 = vpop.f32.mrf.mxu0
        %v2510 = vadd.f32 %v2400, %v2509
        %v2511 = vpop.f32.mrf.mxu0
        %v2512 = vadd.f32 %v2400, %v2511
        %2513 = vmatmul.bf16.gmra.mxu0 %v2377
        %v2514 = vpop.f32.mrf.mxu0
        %v2515 = vadd.f32 %v2400, %v2514
        %v2516 = vpop.f32.mrf.mxu0
        %v2517 = vadd.f32 %v2400, %v2516
        %2518 = vmatmul.bf16.gmra.mxu0 %v2378
        %v2519 = vpop.f32.mrf.mxu0
        %v2520 = vadd.f32 %v2400, %v2519
        %v2521 = vpop.f32.mrf.mxu0
        %v2522 = vadd.f32 %v2400, %v2521
        %2523 = vmatmul.bf16.gmra.mxu0 %v2379
        %v2524 = vpop.f32.mrf.mxu0
        %v2525 = vadd.f32 %v2400, %v2524
        %v2526 = vpop.f32.mrf.mxu0
        %v2527 = vadd.f32 %v2400, %v2526
        %2528 = vmatmul.bf16.gmra.mxu0 %v2380
        %v2529 = vpop.f32.mrf.mxu0
        %v2530 = vadd.f32 %v2400, %v2529
        %v2531 = vpop.f32.mrf.mxu0
        %v2532 = vadd.f32 %v2400, %v2531
        %2533 = vmatmul.bf16.gmra.mxu0 %v2381
        %v2534 = vpop.f32.mrf.mxu0
        %v2535 = vadd.f32 %v2400, %v2534
        %v2536 = vpop.f32.mrf.mxu0
        %v2537 = vadd.f32 %v2400, %v2536
        %2538 = vdwg.mxu0
        %v2539 = vmax.f32 %v2460, 0.0
        %v2540 = vmax.f32 %v2462, 0.0
        %v2541 = vmax.f32 %v2465, 0.0
        %v2542 = vmax.f32 %v2467, 0.0
        %v2543 = vmax.f32 %v2470, 0.0
        %v2544 = vmax.f32 %v2472, 0.0
        %v2545 = vmax.f32 %v2475, 0.0
        %v2546 = vmax.f32 %v2477, 0.0
        %v2547 = vmax.f32 %v2480, 0.0
        %v2548 = vmax.f32 %v2482, 0.0
        %v2549 = vmax.f32 %v2485, 0.0
        %v2550 = vmax.f32 %v2487, 0.0
        %v2551 = vmax.f32 %v2490, 0.0
        %v2552 = vmax.f32 %v2492, 0.0
        %v2553 = vmax.f32 %v2495, 0.0
        %v2554 = vmax.f32 %v2497, 0.0
        %v2555 = vmax.f32 %v2500, 0.0
        %v2556 = vmax.f32 %v2502, 0.0
        %v2557 = vmax.f32 %v2505, 0.0
        %v2558 = vmax.f32 %v2507, 0.0
        %v2559 = vmax.f32 %v2510, 0.0
        %v2560 = vmax.f32 %v2512, 0.0
        %v2561 = vmax.f32 %v2515, 0.0
        %v2562 = vmax.f32 %v2517, 0.0
        %v2563 = vmax.f32 %v2520, 0.0
        %v2564 = vmax.f32 %v2522, 0.0
        %v2565 = vmax.f32 %v2525, 0.0
        %v2566 = vmax.f32 %v2527, 0.0
        %v2567 = vmax.f32 %v2530, 0.0
        %v2568 = vmax.f32 %v2532, 0.0
        %v2569 = vmax.f32 %v2535, 0.0
        %v2570 = vmax.f32 %v2537, 0.0
        %v2571 = vpack.c.bf16 %v2540, %v2539
        %v2572 = vpack.c.bf16 %v2542, %v2541
        %v2573 = vpack.c.bf16 %v2544, %v2543
        %v2574 = vpack.c.bf16 %v2546, %v2545
        %v2575 = vpack.c.bf16 %v2548, %v2547
        %v2576 = vpack.c.bf16 %v2550, %v2549
        %v2577 = vpack.c.bf16 %v2552, %v2551
        %v2578 = vpack.c.bf16 %v2554, %v2553
        %v2579 = vpack.c.bf16 %v2556, %v2555
        %v2580 = vpack.c.bf16 %v2558, %v2557
        %v2581 = vpack.c.bf16 %v2560, %v2559
        %v2582 = vpack.c.bf16 %v2562, %v2561
        %v2583 = vpack.c.bf16 %v2564, %v2563
        %v2584 = vpack.c.bf16 %v2566, %v2565
        %v2585 = vpack.c.bf16 %v2568, %v2567
        %v2586 = vpack.c.bf16 %v2570, %v2569
        %v2587 = vld [vmem:[#allocation5] sm:$0xf]
        %v2588 = vld [vmem:[#allocation5 + $0x4] sm:$0xf]
        %v2589 = vld [vmem:[#allocation5 + $0x8] sm:$0xf]
        %v2590 = vld [vmem:[#allocation5 + $0xc] sm:$0xf]
        %v2591 = vld [vmem:[#allocation5 + $0x10] sm:$0xf]
        %v2592 = vld [vmem:[#allocation5 + $0x14] sm:$0xf]
        %v2593 = vld [vmem:[#allocation5 + $0x18] sm:$0xf]
        %v2594 = vld [vmem:[#allocation5 + $0x1c] sm:$0xf]
        %v2595 = vld [vmem:[#allocation5 + $0x20] sm:$0xf]
        %v2596 = vld [vmem:[#allocation5 + $0x24] sm:$0xf]
        %v2597 = vld [vmem:[#allocation5 + $0x28] sm:$0xf]
        %v2598 = vld [vmem:[#allocation5 + $0x2c] sm:$0xf]
        %v2599 = vld [vmem:[#allocation5 + $0x30] sm:$0xf]
        %v2600 = vld [vmem:[#allocation5 + $0x34] sm:$0xf]
        %v2601 = vld [vmem:[#allocation5 + $0x38] sm:$0xf]
        %v2602 = vld [vmem:[#allocation5 + $0x3c] sm:$0xf]
        %v2603 = vld [vmem:[%s13] sm:$0x1]
        %v2605 = vperm.slane %v2603, 0
        %v2623 = vunpack.c.l.b16 %v2587
        %v2624 = vunpack.c.l.b16 %v2588
        %v2625 = vunpack.c.l.b16 %v2589
        %v2626 = vunpack.c.l.b16 %v2590
        %v2627 = vunpack.c.l.b16 %v2591
        %v2628 = vunpack.c.l.b16 %v2592
        %v2629 = vunpack.c.l.b16 %v2593
        %v2630 = vunpack.c.l.b16 %v2594
        %v2631 = vunpack.c.l.b16 %v2595
        %v2632 = vunpack.c.l.b16 %v2596
        %v2633 = vunpack.c.l.b16 %v2597
        %v2634 = vunpack.c.l.b16 %v2598
        %v2635 = vunpack.c.l.b16 %v2599
        %v2636 = vunpack.c.l.b16 %v2600
        %v2637 = vunpack.c.l.b16 %v2601
        %v2638 = vunpack.c.l.b16 %v2602
        %v2639 = vpack.c.b16 %v2624, %v2623
        %v2640 = vpack.c.b16 %v2626, %v2625
        %v2641 = vpack.c.b16 %v2628, %v2627
        %v2642 = vpack.c.b16 %v2630, %v2629
        %v2643 = vpack.c.b16 %v2632, %v2631
        %v2644 = vpack.c.b16 %v2634, %v2633
        %v2645 = vpack.c.b16 %v2636, %v2635
        %v2646 = vpack.c.b16 %v2638, %v2637
        %2655 = vmatpush.bf16.msra.mxu0 %v2646
        %2656 = vmatpush.bf16.msra.mxu0 %v2645
        %2657 = vmatpush.bf16.msra.mxu0 %v2644
        %2658 = vmatpush.bf16.msra.mxu0 %v2643
        %2659 = vmatpush.bf16.msra.mxu0 %v2642
        %2660 = vmatpush.bf16.msra.mxu0 %v2641
        %2661 = vmatpush.bf16.msra.mxu0 %v2640
        %2662 = vmatpush.bf16.msra.mxu0 %v2639
        %2663 = vmatmul.bf16.gmra.mxu0 %v2571
        %v2664 = vpop.f32.mrf.mxu0
        %v2665 = vadd.f32 %v2605, %v2664
        %v2666 = vpop.f32.mrf.mxu0
        %v2667 = vadd.f32 %v2605, %v2666
        %2668 = vmatmul.bf16.gmra.mxu0 %v2572
        %v2669 = vpop.f32.mrf.mxu0
        %v2670 = vadd.f32 %v2605, %v2669
        %v2671 = vpop.f32.mrf.mxu0
        %v2672 = vadd.f32 %v2605, %v2671
        %2673 = vmatmul.bf16.gmra.mxu0 %v2573
        %v2674 = vpop.f32.mrf.mxu0
        %v2675 = vadd.f32 %v2605, %v2674
        %v2676 = vpop.f32.mrf.mxu0
        %v2677 = vadd.f32 %v2605, %v2676
        %2678 = vmatmul.bf16.gmra.mxu0 %v2574
        %v2679 = vpop.f32.mrf.mxu0
        %v2680 = vadd.f32 %v2605, %v2679
        %v2681 = vpop.f32.mrf.mxu0
        %v2682 = vadd.f32 %v2605, %v2681
        %2683 = vmatmul.bf16.gmra.mxu0 %v2575
        %v2684 = vpop.f32.mrf.mxu0
        %v2685 = vadd.f32 %v2605, %v2684
        %v2686 = vpop.f32.mrf.mxu0
        %v2687 = vadd.f32 %v2605, %v2686
        %2688 = vmatmul.bf16.gmra.mxu0 %v2576
        %v2689 = vpop.f32.mrf.mxu0
        %v2690 = vadd.f32 %v2605, %v2689
        %v2691 = vpop.f32.mrf.mxu0
        %v2692 = vadd.f32 %v2605, %v2691
        %2693 = vmatmul.bf16.gmra.mxu0 %v2577
        %v2694 = vpop.f32.mrf.mxu0
        %v2695 = vadd.f32 %v2605, %v2694
        %v2696 = vpop.f32.mrf.mxu0
        %v2697 = vadd.f32 %v2605, %v2696
        %2698 = vmatmul.bf16.gmra.mxu0 %v2578
        %v2699 = vpop.f32.mrf.mxu0
        %v2700 = vadd.f32 %v2605, %v2699
        %v2701 = vpop.f32.mrf.mxu0
        %v2702 = vadd.f32 %v2605, %v2701
        %2703 = vmatmul.bf16.gmra.mxu0 %v2579
        %v2704 = vpop.f32.mrf.mxu0
        %v2705 = vadd.f32 %v2605, %v2704
        %v2706 = vpop.f32.mrf.mxu0
        %v2707 = vadd.f32 %v2605, %v2706
        %2708 = vmatmul.bf16.gmra.mxu0 %v2580
        %v2709 = vpop.f32.mrf.mxu0
        %v2710 = vadd.f32 %v2605, %v2709
        %v2711 = vpop.f32.mrf.mxu0
        %v2712 = vadd.f32 %v2605, %v2711
        %2713 = vmatmul.bf16.gmra.mxu0 %v2581
        %v2714 = vpop.f32.mrf.mxu0
        %v2715 = vadd.f32 %v2605, %v2714
        %v2716 = vpop.f32.mrf.mxu0
        %v2717 = vadd.f32 %v2605, %v2716
        %2718 = vmatmul.bf16.gmra.mxu0 %v2582
        %v2719 = vpop.f32.mrf.mxu0
        %v2720 = vadd.f32 %v2605, %v2719
        %v2721 = vpop.f32.mrf.mxu0
        %v2722 = vadd.f32 %v2605, %v2721
        %2723 = vmatmul.bf16.gmra.mxu0 %v2583
        %v2724 = vpop.f32.mrf.mxu0
        %v2725 = vadd.f32 %v2605, %v2724
        %v2726 = vpop.f32.mrf.mxu0
        %v2727 = vadd.f32 %v2605, %v2726
        %2728 = vmatmul.bf16.gmra.mxu0 %v2584
        %v2729 = vpop.f32.mrf.mxu0
        %v2730 = vadd.f32 %v2605, %v2729
        %v2731 = vpop.f32.mrf.mxu0
        %v2732 = vadd.f32 %v2605, %v2731
        %2733 = vmatmul.bf16.gmra.mxu0 %v2585
        %v2734 = vpop.f32.mrf.mxu0
        %v2735 = vadd.f32 %v2605, %v2734
        %v2736 = vpop.f32.mrf.mxu0
        %v2737 = vadd.f32 %v2605, %v2736
        %2738 = vmatmul.bf16.gmra.mxu0 %v2586
        %v2739 = vpop.f32.mrf.mxu0
        %v2740 = vadd.f32 %v2605, %v2739
        %v2741 = vpop.f32.mrf.mxu0
        %v2742 = vadd.f32 %v2605, %v2741
        %2743 = vdwg.mxu0
        %v2744 = vmax.f32 %v2665, 0.0
        %v2745 = vmax.f32 %v2667, 0.0
        %v2746 = vmax.f32 %v2670, 0.0
        %v2747 = vmax.f32 %v2672, 0.0
        %v2748 = vmax.f32 %v2675, 0.0
        %v2749 = vmax.f32 %v2677, 0.0
        %v2750 = vmax.f32 %v2680, 0.0
        %v2751 = vmax.f32 %v2682, 0.0
        %v2752 = vmax.f32 %v2685, 0.0
        %v2753 = vmax.f32 %v2687, 0.0
        %v2754 = vmax.f32 %v2690, 0.0
        %v2755 = vmax.f32 %v2692, 0.0
        %v2756 = vmax.f32 %v2695, 0.0
        %v2757 = vmax.f32 %v2697, 0.0
        %v2758 = vmax.f32 %v2700, 0.0
        %v2759 = vmax.f32 %v2702, 0.0
        %v2760 = vmax.f32 %v2705, 0.0
        %v2761 = vmax.f32 %v2707, 0.0
        %v2762 = vmax.f32 %v2710, 0.0
        %v2763 = vmax.f32 %v2712, 0.0
        %v2764 = vmax.f32 %v2715, 0.0
        %v2765 = vmax.f32 %v2717, 0.0
        %v2766 = vmax.f32 %v2720, 0.0
        %v2767 = vmax.f32 %v2722, 0.0
        %v2768 = vmax.f32 %v2725, 0.0
        %v2769 = vmax.f32 %v2727, 0.0
        %v2770 = vmax.f32 %v2730, 0.0
        %v2771 = vmax.f32 %v2732, 0.0
        %v2772 = vmax.f32 %v2735, 0.0
        %v2773 = vmax.f32 %v2737, 0.0
        %v2774 = vmax.f32 %v2740, 0.0
        %v2775 = vmax.f32 %v2742, 0.0
        %v2776 = vpack.c.bf16 %v2745, %v2744
        %v2777 = vpack.c.bf16 %v2747, %v2746
        %v2778 = vpack.c.bf16 %v2749, %v2748
        %v2779 = vpack.c.bf16 %v2751, %v2750
        %v2780 = vpack.c.bf16 %v2753, %v2752
        %v2781 = vpack.c.bf16 %v2755, %v2754
        %v2782 = vpack.c.bf16 %v2757, %v2756
        %v2783 = vpack.c.bf16 %v2759, %v2758
        %v2784 = vpack.c.bf16 %v2761, %v2760
        %v2785 = vpack.c.bf16 %v2763, %v2762
        %v2786 = vpack.c.bf16 %v2765, %v2764
        %v2787 = vpack.c.bf16 %v2767, %v2766
        %v2788 = vpack.c.bf16 %v2769, %v2768
        %v2789 = vpack.c.bf16 %v2771, %v2770
        %v2790 = vpack.c.bf16 %v2773, %v2772
        %v2791 = vpack.c.bf16 %v2775, %v2774
        %v2792 = vld [vmem:[#allocation7] sm:$0xf]
        %v2793 = vld [vmem:[#allocation7 + $0x4] sm:$0xf]
        %v2794 = vld [vmem:[#allocation7 + $0x8] sm:$0xf]
        %v2795 = vld [vmem:[#allocation7 + $0xc] sm:$0xf]
        %v2796 = vld [vmem:[#allocation7 + $0x10] sm:$0xf]
        %v2797 = vld [vmem:[#allocation7 + $0x14] sm:$0xf]
        %v2798 = vld [vmem:[#allocation7 + $0x18] sm:$0xf]
        %v2799 = vld [vmem:[#allocation7 + $0x1c] sm:$0xf]
        %v2800 = vld [vmem:[#allocation7 + $0x20] sm:$0xf]
        %v2801 = vld [vmem:[#allocation7 + $0x24] sm:$0xf]
        %v2802 = vld [vmem:[#allocation7 + $0x28] sm:$0xf]
        %v2803 = vld [vmem:[#allocation7 + $0x2c] sm:$0xf]
        %v2804 = vld [vmem:[#allocation7 + $0x30] sm:$0xf]
        %v2805 = vld [vmem:[#allocation7 + $0x34] sm:$0xf]
        %v2806 = vld [vmem:[#allocation7 + $0x38] sm:$0xf]
        %v2807 = vld [vmem:[#allocation7 + $0x3c] sm:$0xf]
        %v2808 = vld [vmem:[#allocation8] sm:$0xf]
        %v2809 = vld [vmem:[#allocation8 + $0x4] sm:$0xf]
        %v2810 = vld [vmem:[#allocation8 + $0x8] sm:$0xf]
        %v2811 = vld [vmem:[#allocation8 + $0xc] sm:$0xf]
        %v2812 = vld [vmem:[#allocation8 + $0x10] sm:$0xf]
        %v2813 = vld [vmem:[#allocation8 + $0x14] sm:$0xf]
        %v2814 = vld [vmem:[#allocation8 + $0x18] sm:$0xf]
        %v2815 = vld [vmem:[#allocation8 + $0x1c] sm:$0xf]
        %v2816 = vld [vmem:[#allocation8 + $0x20] sm:$0xf]
        %v2817 = vld [vmem:[#allocation8 + $0x24] sm:$0xf]
        %v2818 = vld [vmem:[#allocation8 + $0x28] sm:$0xf]
        %v2819 = vld [vmem:[#allocation8 + $0x2c] sm:$0xf]
        %v2820 = vld [vmem:[#allocation8 + $0x30] sm:$0xf]
        %v2821 = vld [vmem:[#allocation8 + $0x34] sm:$0xf]
        %v2822 = vld [vmem:[#allocation8 + $0x38] sm:$0xf]
        %v2823 = vld [vmem:[#allocation8 + $0x3c] sm:$0xf]
        %v2840 = vunpack.c.l.b16 %v2808
        %v2841 = vunpack.c.l.b16 %v2809
        %v2842 = vunpack.c.l.b16 %v2810
        %v2843 = vunpack.c.l.b16 %v2811
        %v2844 = vunpack.c.l.b16 %v2812
        %v2845 = vunpack.c.l.b16 %v2813
        %v2846 = vunpack.c.l.b16 %v2814
        %v2847 = vunpack.c.l.b16 %v2815
        %v2848 = vunpack.c.l.b16 %v2816
        %v2849 = vunpack.c.l.b16 %v2817
        %v2850 = vunpack.c.l.b16 %v2818
        %v2851 = vunpack.c.l.b16 %v2819
        %v2852 = vunpack.c.l.b16 %v2820
        %v2853 = vunpack.c.l.b16 %v2821
        %v2854 = vunpack.c.l.b16 %v2822
        %v2855 = vunpack.c.l.b16 %v2823
        %v2856 = vpack.c.b16 %v2841, %v2840
        %v2857 = vpack.c.b16 %v2843, %v2842
        %v2858 = vpack.c.b16 %v2845, %v2844
        %v2859 = vpack.c.b16 %v2847, %v2846
        %v2860 = vpack.c.b16 %v2849, %v2848
        %v2861 = vpack.c.b16 %v2851, %v2850
        %v2862 = vpack.c.b16 %v2853, %v2852
        %v2863 = vpack.c.b16 %v2855, %v2854
        %2872 = vmatpush.bf16.msra.mxu0 %v2863
        %2873 = vmatpush.bf16.msra.mxu0 %v2862
        %2874 = vmatpush.bf16.msra.mxu0 %v2861
        %2875 = vmatpush.bf16.msra.mxu0 %v2860
        %2876 = vmatpush.bf16.msra.mxu0 %v2859
        %2877 = vmatpush.bf16.msra.mxu0 %v2858
        %2878 = vmatpush.bf16.msra.mxu0 %v2857
        %2879 = vmatpush.bf16.msra.mxu0 %v2856
        %2880 = vmatmul.bf16.gmra.mxu0 %v2172
        %v2881 = vpop.f32.mrf.mxu0
        %v2882 = vadd.f32 0.0, %v2881
        %v2883 = vpop.f32.mrf.mxu0
        %v2884 = vadd.f32 0.0, %v2883
        %2885 = vmatmul.bf16.gmra.mxu0 %v2173
        %v2886 = vpop.f32.mrf.mxu0
        %v2887 = vadd.f32 0.0, %v2886
        %v2888 = vpop.f32.mrf.mxu0
        %v2889 = vadd.f32 0.0, %v2888
        %2890 = vmatmul.bf16.gmra.mxu0 %v2174
        %v2891 = vpop.f32.mrf.mxu0
        %v2892 = vadd.f32 0.0, %v2891
        %v2893 = vpop.f32.mrf.mxu0
        %v2894 = vadd.f32 0.0, %v2893
        %2895 = vmatmul.bf16.gmra.mxu0 %v2175
        %v2896 = vpop.f32.mrf.mxu0
        %v2897 = vadd.f32 0.0, %v2896
        %v2898 = vpop.f32.mrf.mxu0
        %v2899 = vadd.f32 0.0, %v2898
        %2900 = vmatmul.bf16.gmra.mxu0 %v2176
        %v2901 = vpop.f32.mrf.mxu0
        %v2902 = vadd.f32 0.0, %v2901
        %v2903 = vpop.f32.mrf.mxu0
        %v2904 = vadd.f32 0.0, %v2903
        %2905 = vmatmul.bf16.gmra.mxu0 %v2177
        %v2906 = vpop.f32.mrf.mxu0
        %v2907 = vadd.f32 0.0, %v2906
        %v2908 = vpop.f32.mrf.mxu0
        %v2909 = vadd.f32 0.0, %v2908
        %2910 = vmatmul.bf16.gmra.mxu0 %v2178
        %v2911 = vpop.f32.mrf.mxu0
        %v2912 = vadd.f32 0.0, %v2911
        %v2913 = vpop.f32.mrf.mxu0
        %v2914 = vadd.f32 0.0, %v2913
        %2915 = vmatmul.bf16.gmra.mxu0 %v2179
        %v2916 = vpop.f32.mrf.mxu0
        %v2917 = vadd.f32 0.0, %v2916
        %v2918 = vpop.f32.mrf.mxu0
        %v2919 = vadd.f32 0.0, %v2918
        %2920 = vmatmul.bf16.gmra.mxu0 %v2180
        %v2921 = vpop.f32.mrf.mxu0
        %v2922 = vadd.f32 0.0, %v2921
        %v2923 = vpop.f32.mrf.mxu0
        %v2924 = vadd.f32 0.0, %v2923
        %2925 = vmatmul.bf16.gmra.mxu0 %v2181
        %v2926 = vpop.f32.mrf.mxu0
        %v2927 = vadd.f32 0.0, %v2926
        %v2928 = vpop.f32.mrf.mxu0
        %v2929 = vadd.f32 0.0, %v2928
        %2930 = vmatmul.bf16.gmra.mxu0 %v2182
        %v2931 = vpop.f32.mrf.mxu0
        %v2932 = vadd.f32 0.0, %v2931
        %v2933 = vpop.f32.mrf.mxu0
        %v2934 = vadd.f32 0.0, %v2933
        %2935 = vmatmul.bf16.gmra.mxu0 %v2183
        %v2936 = vpop.f32.mrf.mxu0
        %v2937 = vadd.f32 0.0, %v2936
        %v2938 = vpop.f32.mrf.mxu0
        %v2939 = vadd.f32 0.0, %v2938
        %2940 = vmatmul.bf16.gmra.mxu0 %v2184
        %v2941 = vpop.f32.mrf.mxu0
        %v2942 = vadd.f32 0.0, %v2941
        %v2943 = vpop.f32.mrf.mxu0
        %v2944 = vadd.f32 0.0, %v2943
        %2945 = vmatmul.bf16.gmra.mxu0 %v2185
        %v2946 = vpop.f32.mrf.mxu0
        %v2947 = vadd.f32 0.0, %v2946
        %v2948 = vpop.f32.mrf.mxu0
        %v2949 = vadd.f32 0.0, %v2948
        %2950 = vmatmul.bf16.gmra.mxu0 %v2186
        %v2951 = vpop.f32.mrf.mxu0
        %v2952 = vadd.f32 0.0, %v2951
        %v2953 = vpop.f32.mrf.mxu0
        %v2954 = vadd.f32 0.0, %v2953
        %2955 = vmatmul.bf16.gmra.mxu0 %v2187
        %v2956 = vpop.f32.mrf.mxu0
        %v2957 = vadd.f32 0.0, %v2956
        %v2958 = vpop.f32.mrf.mxu0
        %v2959 = vadd.f32 0.0, %v2958
        %2960 = vdwg.mxu0
        %v2977 = vunpack.c.l.b16 %v2792
        %v2978 = vunpack.c.l.b16 %v2793
        %v2979 = vunpack.c.l.b16 %v2794
        %v2980 = vunpack.c.l.b16 %v2795
        %v2981 = vunpack.c.l.b16 %v2796
        %v2982 = vunpack.c.l.b16 %v2797
        %v2983 = vunpack.c.l.b16 %v2798
        %v2984 = vunpack.c.l.b16 %v2799
        %v2985 = vunpack.c.l.b16 %v2800
        %v2986 = vunpack.c.l.b16 %v2801
        %v2987 = vunpack.c.l.b16 %v2802
        %v2988 = vunpack.c.l.b16 %v2803
        %v2989 = vunpack.c.l.b16 %v2804
        %v2990 = vunpack.c.l.b16 %v2805
        %v2991 = vunpack.c.l.b16 %v2806
        %v2992 = vunpack.c.l.b16 %v2807
        %v2993 = vpack.c.b16 %v2978, %v2977
        %v2994 = vpack.c.b16 %v2980, %v2979
        %v2995 = vpack.c.b16 %v2982, %v2981
        %v2996 = vpack.c.b16 %v2984, %v2983
        %v2997 = vpack.c.b16 %v2986, %v2985
        %v2998 = vpack.c.b16 %v2988, %v2987
        %v2999 = vpack.c.b16 %v2990, %v2989
        %v3000 = vpack.c.b16 %v2992, %v2991
        %3009 = vmatpush.bf16.msra.mxu0 %v3000
        %3010 = vmatpush.bf16.msra.mxu0 %v2999
        %3011 = vmatpush.bf16.msra.mxu0 %v2998
        %3012 = vmatpush.bf16.msra.mxu0 %v2997
        %3013 = vmatpush.bf16.msra.mxu0 %v2996
        %3014 = vmatpush.bf16.msra.mxu0 %v2995
        %3015 = vmatpush.bf16.msra.mxu0 %v2994
        %3016 = vmatpush.bf16.msra.mxu0 %v2993
        %3017 = vmatmul.bf16.gmra.mxu0 %v1568
        %v3018 = vpop.f32.mrf.mxu0
        %v3019 = vadd.f32 %v2882, %v3018
        %v3020 = vpop.f32.mrf.mxu0
        %v3021 = vadd.f32 %v2884, %v3020
        %3022 = vmatmul.bf16.gmra.mxu0 %v1569
        %v3023 = vpop.f32.mrf.mxu0
        %v3024 = vadd.f32 %v2887, %v3023
        %v3025 = vpop.f32.mrf.mxu0
        %v3026 = vadd.f32 %v2889, %v3025
        %3027 = vmatmul.bf16.gmra.mxu0 %v1570
        %v3028 = vpop.f32.mrf.mxu0
        %v3029 = vadd.f32 %v2892, %v3028
        %v3030 = vpop.f32.mrf.mxu0
        %v3031 = vadd.f32 %v2894, %v3030
        %3032 = vmatmul.bf16.gmra.mxu0 %v1571
        %v3033 = vpop.f32.mrf.mxu0
        %v3034 = vadd.f32 %v2897, %v3033
        %v3035 = vpop.f32.mrf.mxu0
        %v3036 = vadd.f32 %v2899, %v3035
        %3037 = vmatmul.bf16.gmra.mxu0 %v1572
        %v3038 = vpop.f32.mrf.mxu0
        %v3039 = vadd.f32 %v2902, %v3038
        %v3040 = vpop.f32.mrf.mxu0
        %v3041 = vadd.f32 %v2904, %v3040
        %3042 = vmatmul.bf16.gmra.mxu0 %v1573
        %v3043 = vpop.f32.mrf.mxu0
        %v3044 = vadd.f32 %v2907, %v3043
        %v3045 = vpop.f32.mrf.mxu0
        %v3046 = vadd.f32 %v2909, %v3045
        %3047 = vmatmul.bf16.gmra.mxu0 %v1574
        %v3048 = vpop.f32.mrf.mxu0
        %v3049 = vadd.f32 %v2912, %v3048
        %v3050 = vpop.f32.mrf.mxu0
        %v3051 = vadd.f32 %v2914, %v3050
        %3052 = vmatmul.bf16.gmra.mxu0 %v1575
        %v3053 = vpop.f32.mrf.mxu0
        %v3054 = vadd.f32 %v2917, %v3053
        %v3055 = vpop.f32.mrf.mxu0
        %v3056 = vadd.f32 %v2919, %v3055
        %3057 = vmatmul.bf16.gmra.mxu0 %v1576
        %v3058 = vpop.f32.mrf.mxu0
        %v3059 = vadd.f32 %v2922, %v3058
        %v3060 = vpop.f32.mrf.mxu0
        %v3061 = vadd.f32 %v2924, %v3060
        %3062 = vmatmul.bf16.gmra.mxu0 %v1577
        %v3063 = vpop.f32.mrf.mxu0
        %v3064 = vadd.f32 %v2927, %v3063
        %v3065 = vpop.f32.mrf.mxu0
        %v3066 = vadd.f32 %v2929, %v3065
        %3067 = vmatmul.bf16.gmra.mxu0 %v1578
        %v3068 = vpop.f32.mrf.mxu0
        %v3069 = vadd.f32 %v2932, %v3068
        %v3070 = vpop.f32.mrf.mxu0
        %v3071 = vadd.f32 %v2934, %v3070
        %3072 = vmatmul.bf16.gmra.mxu0 %v1579
        %v3073 = vpop.f32.mrf.mxu0
        %v3074 = vadd.f32 %v2937, %v3073
        %v3075 = vpop.f32.mrf.mxu0
        %v3076 = vadd.f32 %v2939, %v3075
        %3077 = vmatmul.bf16.gmra.mxu0 %v1580
        %v3078 = vpop.f32.mrf.mxu0
        %v3079 = vadd.f32 %v2942, %v3078
        %v3080 = vpop.f32.mrf.mxu0
        %v3081 = vadd.f32 %v2944, %v3080
        %3082 = vmatmul.bf16.gmra.mxu0 %v1581
        %v3083 = vpop.f32.mrf.mxu0
        %v3084 = vadd.f32 %v2947, %v3083
        %v3085 = vpop.f32.mrf.mxu0
        %v3086 = vadd.f32 %v2949, %v3085
        %3087 = vmatmul.bf16.gmra.mxu0 %v1582
        %v3088 = vpop.f32.mrf.mxu0
        %v3089 = vadd.f32 %v2952, %v3088
        %v3090 = vpop.f32.mrf.mxu0
        %v3091 = vadd.f32 %v2954, %v3090
        %3092 = vmatmul.bf16.gmra.mxu0 %v1583
        %v3093 = vpop.f32.mrf.mxu0
        %v3094 = vadd.f32 %v2957, %v3093
        %v3095 = vpop.f32.mrf.mxu0
        %v3096 = vadd.f32 %v2959, %v3095
        %3097 = vdwg.mxu0
        %v3098 = vld [vmem:[#allocation10] sm:$0xf]
        %v3099 = vld [vmem:[#allocation10 + $0x4] sm:$0xf]
        %v3100 = vld [vmem:[#allocation10 + $0x8] sm:$0xf]
        %v3101 = vld [vmem:[#allocation10 + $0xc] sm:$0xf]
        %v3102 = vld [vmem:[#allocation10 + $0x10] sm:$0xf]
        %v3103 = vld [vmem:[#allocation10 + $0x14] sm:$0xf]
        %v3104 = vld [vmem:[#allocation10 + $0x18] sm:$0xf]
        %v3105 = vld [vmem:[#allocation10 + $0x1c] sm:$0xf]
        %v3106 = vld [vmem:[#allocation10 + $0x20] sm:$0xf]
        %v3107 = vld [vmem:[#allocation10 + $0x24] sm:$0xf]
        %v3108 = vld [vmem:[#allocation10 + $0x28] sm:$0xf]
        %v3109 = vld [vmem:[#allocation10 + $0x2c] sm:$0xf]
        %v3110 = vld [vmem:[#allocation10 + $0x30] sm:$0xf]
        %v3111 = vld [vmem:[#allocation10 + $0x34] sm:$0xf]
        %v3112 = vld [vmem:[#allocation10 + $0x38] sm:$0xf]
        %v3113 = vld [vmem:[#allocation10 + $0x3c] sm:$0xf]
        %v3130 = vunpack.c.l.b16 %v3098
        %v3131 = vunpack.c.l.b16 %v3099
        %v3132 = vunpack.c.l.b16 %v3100
        %v3133 = vunpack.c.l.b16 %v3101
        %v3134 = vunpack.c.l.b16 %v3102
        %v3135 = vunpack.c.l.b16 %v3103
        %v3136 = vunpack.c.l.b16 %v3104
        %v3137 = vunpack.c.l.b16 %v3105
        %v3138 = vunpack.c.l.b16 %v3106
        %v3139 = vunpack.c.l.b16 %v3107
        %v3140 = vunpack.c.l.b16 %v3108
        %v3141 = vunpack.c.l.b16 %v3109
        %v3142 = vunpack.c.l.b16 %v3110
        %v3143 = vunpack.c.l.b16 %v3111
        %v3144 = vunpack.c.l.b16 %v3112
        %v3145 = vunpack.c.l.b16 %v3113
        %v3146 = vpack.c.b16 %v3131, %v3130
        %v3147 = vpack.c.b16 %v3133, %v3132
        %v3148 = vpack.c.b16 %v3135, %v3134
        %v3149 = vpack.c.b16 %v3137, %v3136
        %v3150 = vpack.c.b16 %v3139, %v3138
        %v3151 = vpack.c.b16 %v3141, %v3140
        %v3152 = vpack.c.b16 %v3143, %v3142
        %v3153 = vpack.c.b16 %v3145, %v3144
        %3162 = vmatpush.bf16.msra.mxu0 %v3153
        %3163 = vmatpush.bf16.msra.mxu0 %v3152
        %3164 = vmatpush.bf16.msra.mxu0 %v3151
        %3165 = vmatpush.bf16.msra.mxu0 %v3150
        %3166 = vmatpush.bf16.msra.mxu0 %v3149
        %3167 = vmatpush.bf16.msra.mxu0 %v3148
        %3168 = vmatpush.bf16.msra.mxu0 %v3147
        %3169 = vmatpush.bf16.msra.mxu0 %v3146
        %3170 = vmatmul.bf16.gmra.mxu0 %v2776
        %v3171 = vpop.f32.mrf.mxu0
        %v3172 = vadd.f32 0.0, %v3171
        %v3173 = vpop.f32.mrf.mxu0
        %v3174 = vadd.f32 0.0, %v3173
        %3175 = vmatmul.bf16.gmra.mxu0 %v2777
        %v3176 = vpop.f32.mrf.mxu0
        %v3177 = vadd.f32 0.0, %v3176
        %v3178 = vpop.f32.mrf.mxu0
        %v3179 = vadd.f32 0.0, %v3178
        %3180 = vmatmul.bf16.gmra.mxu0 %v2778
        %v3181 = vpop.f32.mrf.mxu0
        %v3182 = vadd.f32 0.0, %v3181
        %v3183 = vpop.f32.mrf.mxu0
        %v3184 = vadd.f32 0.0, %v3183
        %3185 = vmatmul.bf16.gmra.mxu0 %v2779
        %v3186 = vpop.f32.mrf.mxu0
        %v3187 = vadd.f32 0.0, %v3186
        %v3188 = vpop.f32.mrf.mxu0
        %v3189 = vadd.f32 0.0, %v3188
        %3190 = vmatmul.bf16.gmra.mxu0 %v2780
        %v3191 = vpop.f32.mrf.mxu0
        %v3192 = vadd.f32 0.0, %v3191
        %v3193 = vpop.f32.mrf.mxu0
        %v3194 = vadd.f32 0.0, %v3193
        %3195 = vmatmul.bf16.gmra.mxu0 %v2781
        %v3196 = vpop.f32.mrf.mxu0
        %v3197 = vadd.f32 0.0, %v3196
        %v3198 = vpop.f32.mrf.mxu0
        %v3199 = vadd.f32 0.0, %v3198
        %3200 = vmatmul.bf16.gmra.mxu0 %v2782
        %v3201 = vpop.f32.mrf.mxu0
        %v3202 = vadd.f32 0.0, %v3201
        %v3203 = vpop.f32.mrf.mxu0
        %v3204 = vadd.f32 0.0, %v3203
        %3205 = vmatmul.bf16.gmra.mxu0 %v2783
        %v3206 = vpop.f32.mrf.mxu0
        %v3207 = vadd.f32 0.0, %v3206
        %v3208 = vpop.f32.mrf.mxu0
        %v3209 = vadd.f32 0.0, %v3208
        %3210 = vmatmul.bf16.gmra.mxu0 %v2784
        %v3211 = vpop.f32.mrf.mxu0
        %v3212 = vadd.f32 0.0, %v3211
        %v3213 = vpop.f32.mrf.mxu0
        %v3214 = vadd.f32 0.0, %v3213
        %3215 = vmatmul.bf16.gmra.mxu0 %v2785
        %v3216 = vpop.f32.mrf.mxu0
        %v3217 = vadd.f32 0.0, %v3216
        %v3218 = vpop.f32.mrf.mxu0
        %v3219 = vadd.f32 0.0, %v3218
        %3220 = vmatmul.bf16.gmra.mxu0 %v2786
        %v3221 = vpop.f32.mrf.mxu0
        %v3222 = vadd.f32 0.0, %v3221
        %v3223 = vpop.f32.mrf.mxu0
        %v3224 = vadd.f32 0.0, %v3223
        %3225 = vmatmul.bf16.gmra.mxu0 %v2787
        %v3226 = vpop.f32.mrf.mxu0
        %v3227 = vadd.f32 0.0, %v3226
        %v3228 = vpop.f32.mrf.mxu0
        %v3229 = vadd.f32 0.0, %v3228
        %3230 = vmatmul.bf16.gmra.mxu0 %v2788
        %v3231 = vpop.f32.mrf.mxu0
        %v3232 = vadd.f32 0.0, %v3231
        %v3233 = vpop.f32.mrf.mxu0
        %v3234 = vadd.f32 0.0, %v3233
        %3235 = vmatmul.bf16.gmra.mxu0 %v2789
        %v3236 = vpop.f32.mrf.mxu0
        %v3237 = vadd.f32 0.0, %v3236
        %v3238 = vpop.f32.mrf.mxu0
        %v3239 = vadd.f32 0.0, %v3238
        %3240 = vmatmul.bf16.gmra.mxu0 %v2790
        %v3241 = vpop.f32.mrf.mxu0
        %v3242 = vadd.f32 0.0, %v3241
        %v3243 = vpop.f32.mrf.mxu0
        %v3244 = vadd.f32 0.0, %v3243
        %3245 = vmatmul.bf16.gmra.mxu0 %v2791
        %v3246 = vpop.f32.mrf.mxu0
        %v3247 = vadd.f32 0.0, %v3246
        %v3248 = vpop.f32.mrf.mxu0
        %v3249 = vadd.f32 0.0, %v3248
        %3250 = vdwg.mxu0
        %v3251 = vadd.f32 %v3019, %v3172
        %v3252 = vadd.f32 %v3021, %v3174
        %v3253 = vadd.f32 %v3024, %v3177
        %v3254 = vadd.f32 %v3026, %v3179
        %v3255 = vadd.f32 %v3029, %v3182
        %v3256 = vadd.f32 %v3031, %v3184
        %v3257 = vadd.f32 %v3034, %v3187
        %v3258 = vadd.f32 %v3036, %v3189
        %v3259 = vadd.f32 %v3039, %v3192
        %v3260 = vadd.f32 %v3041, %v3194
        %v3261 = vadd.f32 %v3044, %v3197
        %v3262 = vadd.f32 %v3046, %v3199
        %v3263 = vadd.f32 %v3049, %v3202
        %v3264 = vadd.f32 %v3051, %v3204
        %v3265 = vadd.f32 %v3054, %v3207
        %v3266 = vadd.f32 %v3056, %v3209
        %v3267 = vadd.f32 %v3059, %v3212
        %v3268 = vadd.f32 %v3061, %v3214
        %v3269 = vadd.f32 %v3064, %v3217
        %v3270 = vadd.f32 %v3066, %v3219
        %v3271 = vadd.f32 %v3069, %v3222
        %v3272 = vadd.f32 %v3071, %v3224
        %v3273 = vadd.f32 %v3074, %v3227
        %v3274 = vadd.f32 %v3076, %v3229
        %v3275 = vadd.f32 %v3079, %v3232
        %v3276 = vadd.f32 %v3081, %v3234
        %v3277 = vadd.f32 %v3084, %v3237
        %v3278 = vadd.f32 %v3086, %v3239
        %v3279 = vadd.f32 %v3089, %v3242
        %v3280 = vadd.f32 %v3091, %v3244
        %v3281 = vadd.f32 %v3094, %v3247
        %v3282 = vadd.f32 %v3096, %v3249
        %v3283 = vld [vmem:[%s17] sm:$0x1]
        %v3285 = vperm.slane %v3283, 0
        %v3287 = vadd.f32 %v3251, %v3285
        %v3288 = vadd.f32 %v3252, %v3285
        %v3289 = vadd.f32 %v3253, %v3285
        %v3290 = vadd.f32 %v3254, %v3285
        %v3291 = vadd.f32 %v3255, %v3285
        %v3292 = vadd.f32 %v3256, %v3285
        %v3293 = vadd.f32 %v3257, %v3285
        %v3294 = vadd.f32 %v3258, %v3285
        %v3295 = vadd.f32 %v3259, %v3285
        %v3296 = vadd.f32 %v3260, %v3285
        %v3297 = vadd.f32 %v3261, %v3285
        %v3298 = vadd.f32 %v3262, %v3285
        %v3299 = vadd.f32 %v3263, %v3285
        %v3300 = vadd.f32 %v3264, %v3285
        %v3301 = vadd.f32 %v3265, %v3285
        %v3302 = vadd.f32 %v3266, %v3285
        %v3303 = vadd.f32 %v3267, %v3285
        %v3304 = vadd.f32 %v3268, %v3285
        %v3305 = vadd.f32 %v3269, %v3285
        %v3306 = vadd.f32 %v3270, %v3285
        %v3307 = vadd.f32 %v3271, %v3285
        %v3308 = vadd.f32 %v3272, %v3285
        %v3309 = vadd.f32 %v3273, %v3285
        %v3310 = vadd.f32 %v3274, %v3285
        %v3311 = vadd.f32 %v3275, %v3285
        %v3312 = vadd.f32 %v3276, %v3285
        %v3313 = vadd.f32 %v3277, %v3285
        %v3314 = vadd.f32 %v3278, %v3285
        %v3315 = vadd.f32 %v3279, %v3285
        %v3316 = vadd.f32 %v3280, %v3285
        %v3317 = vadd.f32 %v3281, %v3285
        %v3318 = vadd.f32 %v3282, %v3285
        %v3319 = vrot.slane %v3287, 4
        %v3320 = vadd.f32 %v3287, %v3319
        %v3321 = vrot.slane %v3320, 2
        %v3322 = vadd.f32 %v3320, %v3321
        %v3323 = vrot.slane %v3322, 1
        %v3324 = vadd.f32 %v3322, %v3323
        %v3325 = vrot.slane %v3288, 4
        %v3326 = vadd.f32 %v3288, %v3325
        %v3327 = vrot.slane %v3326, 2
        %v3328 = vadd.f32 %v3326, %v3327
        %v3329 = vrot.slane %v3328, 1
        %v3330 = vadd.f32 %v3328, %v3329
        %v3331 = vrot.slane %v3289, 4
        %v3332 = vadd.f32 %v3289, %v3331
        %v3333 = vrot.slane %v3332, 2
        %v3334 = vadd.f32 %v3332, %v3333
        %v3335 = vrot.slane %v3334, 1
        %v3336 = vadd.f32 %v3334, %v3335
        %v3337 = vrot.slane %v3290, 4
        %v3338 = vadd.f32 %v3290, %v3337
        %v3339 = vrot.slane %v3338, 2
        %v3340 = vadd.f32 %v3338, %v3339
        %v3341 = vrot.slane %v3340, 1
        %v3342 = vadd.f32 %v3340, %v3341
        %v3343 = vrot.slane %v3291, 4
        %v3344 = vadd.f32 %v3291, %v3343
        %v3345 = vrot.slane %v3344, 2
        %v3346 = vadd.f32 %v3344, %v3345
        %v3347 = vrot.slane %v3346, 1
        %v3348 = vadd.f32 %v3346, %v3347
        %v3349 = vrot.slane %v3292, 4
        %v3350 = vadd.f32 %v3292, %v3349
        %v3351 = vrot.slane %v3350, 2
        %v3352 = vadd.f32 %v3350, %v3351
        %v3353 = vrot.slane %v3352, 1
        %v3354 = vadd.f32 %v3352, %v3353
        %v3355 = vrot.slane %v3293, 4
        %v3356 = vadd.f32 %v3293, %v3355
        %v3357 = vrot.slane %v3356, 2
        %v3358 = vadd.f32 %v3356, %v3357
        %v3359 = vrot.slane %v3358, 1
        %v3360 = vadd.f32 %v3358, %v3359
        %v3361 = vrot.slane %v3294, 4
        %v3362 = vadd.f32 %v3294, %v3361
        %v3363 = vrot.slane %v3362, 2
        %v3364 = vadd.f32 %v3362, %v3363
        %v3365 = vrot.slane %v3364, 1
        %v3366 = vadd.f32 %v3364, %v3365
        %v3367 = vrot.slane %v3295, 4
        %v3368 = vadd.f32 %v3295, %v3367
        %v3369 = vrot.slane %v3368, 2
        %v3370 = vadd.f32 %v3368, %v3369
        %v3371 = vrot.slane %v3370, 1
        %v3372 = vadd.f32 %v3370, %v3371
        %v3373 = vrot.slane %v3296, 4
        %v3374 = vadd.f32 %v3296, %v3373
        %v3375 = vrot.slane %v3374, 2
        %v3376 = vadd.f32 %v3374, %v3375
        %v3377 = vrot.slane %v3376, 1
        %v3378 = vadd.f32 %v3376, %v3377
        %v3379 = vrot.slane %v3297, 4
        %v3380 = vadd.f32 %v3297, %v3379
        %v3381 = vrot.slane %v3380, 2
        %v3382 = vadd.f32 %v3380, %v3381
        %v3383 = vrot.slane %v3382, 1
        %v3384 = vadd.f32 %v3382, %v3383
        %v3385 = vrot.slane %v3298, 4
        %v3386 = vadd.f32 %v3298, %v3385
        %v3387 = vrot.slane %v3386, 2
        %v3388 = vadd.f32 %v3386, %v3387
        %v3389 = vrot.slane %v3388, 1
        %v3390 = vadd.f32 %v3388, %v3389
        %v3391 = vrot.slane %v3299, 4
        %v3392 = vadd.f32 %v3299, %v3391
        %v3393 = vrot.slane %v3392, 2
        %v3394 = vadd.f32 %v3392, %v3393
        %v3395 = vrot.slane %v3394, 1
        %v3396 = vadd.f32 %v3394, %v3395
        %v3397 = vrot.slane %v3300, 4
        %v3398 = vadd.f32 %v3300, %v3397
        %v3399 = vrot.slane %v3398, 2
        %v3400 = vadd.f32 %v3398, %v3399
        %v3401 = vrot.slane %v3400, 1
        %v3402 = vadd.f32 %v3400, %v3401
        %v3403 = vrot.slane %v3301, 4
        %v3404 = vadd.f32 %v3301, %v3403
        %v3405 = vrot.slane %v3404, 2
        %v3406 = vadd.f32 %v3404, %v3405
        %v3407 = vrot.slane %v3406, 1
        %v3408 = vadd.f32 %v3406, %v3407
        %v3409 = vrot.slane %v3302, 4
        %v3410 = vadd.f32 %v3302, %v3409
        %v3411 = vrot.slane %v3410, 2
        %v3412 = vadd.f32 %v3410, %v3411
        %v3413 = vrot.slane %v3412, 1
        %v3414 = vadd.f32 %v3412, %v3413
        %v3415 = vrot.slane %v3303, 4
        %v3416 = vadd.f32 %v3303, %v3415
        %v3417 = vrot.slane %v3416, 2
        %v3418 = vadd.f32 %v3416, %v3417
        %v3419 = vrot.slane %v3418, 1
        %v3420 = vadd.f32 %v3418, %v3419
        %v3421 = vrot.slane %v3304, 4
        %v3422 = vadd.f32 %v3304, %v3421
        %v3423 = vrot.slane %v3422, 2
        %v3424 = vadd.f32 %v3422, %v3423
        %v3425 = vrot.slane %v3424, 1
        %v3426 = vadd.f32 %v3424, %v3425
        %v3427 = vrot.slane %v3305, 4
        %v3428 = vadd.f32 %v3305, %v3427
        %v3429 = vrot.slane %v3428, 2
        %v3430 = vadd.f32 %v3428, %v3429
        %v3431 = vrot.slane %v3430, 1
        %v3432 = vadd.f32 %v3430, %v3431
        %v3433 = vrot.slane %v3306, 4
        %v3434 = vadd.f32 %v3306, %v3433
        %v3435 = vrot.slane %v3434, 2
        %v3436 = vadd.f32 %v3434, %v3435
        %v3437 = vrot.slane %v3436, 1
        %v3438 = vadd.f32 %v3436, %v3437
        %v3439 = vrot.slane %v3307, 4
        %v3440 = vadd.f32 %v3307, %v3439
        %v3441 = vrot.slane %v3440, 2
        %v3442 = vadd.f32 %v3440, %v3441
        %v3443 = vrot.slane %v3442, 1
        %v3444 = vadd.f32 %v3442, %v3443
        %v3445 = vrot.slane %v3308, 4
        %v3446 = vadd.f32 %v3308, %v3445
        %v3447 = vrot.slane %v3446, 2
        %v3448 = vadd.f32 %v3446, %v3447
        %v3449 = vrot.slane %v3448, 1
        %v3450 = vadd.f32 %v3448, %v3449
        %v3451 = vrot.slane %v3309, 4
        %v3452 = vadd.f32 %v3309, %v3451
        %v3453 = vrot.slane %v3452, 2
        %v3454 = vadd.f32 %v3452, %v3453
        %v3455 = vrot.slane %v3454, 1
        %v3456 = vadd.f32 %v3454, %v3455
        %v3457 = vrot.slane %v3310, 4
        %v3458 = vadd.f32 %v3310, %v3457
        %v3459 = vrot.slane %v3458, 2
        %v3460 = vadd.f32 %v3458, %v3459
        %v3461 = vrot.slane %v3460, 1
        %v3462 = vadd.f32 %v3460, %v3461
        %v3463 = vrot.slane %v3311, 4
        %v3464 = vadd.f32 %v3311, %v3463
        %v3465 = vrot.slane %v3464, 2
        %v3466 = vadd.f32 %v3464, %v3465
        %v3467 = vrot.slane %v3466, 1
        %v3468 = vadd.f32 %v3466, %v3467
        %v3469 = vrot.slane %v3312, 4
        %v3470 = vadd.f32 %v3312, %v3469
        %v3471 = vrot.slane %v3470, 2
        %v3472 = vadd.f32 %v3470, %v3471
        %v3473 = vrot.slane %v3472, 1
        %v3474 = vadd.f32 %v3472, %v3473
        %v3475 = vrot.slane %v3313, 4
        %v3476 = vadd.f32 %v3313, %v3475
        %v3477 = vrot.slane %v3476, 2
        %v3478 = vadd.f32 %v3476, %v3477
        %v3479 = vrot.slane %v3478, 1
        %v3480 = vadd.f32 %v3478, %v3479
        %v3481 = vrot.slane %v3314, 4
        %v3482 = vadd.f32 %v3314, %v3481
        %v3483 = vrot.slane %v3482, 2
        %v3484 = vadd.f32 %v3482, %v3483
        %v3485 = vrot.slane %v3484, 1
        %v3486 = vadd.f32 %v3484, %v3485
        %v3487 = vrot.slane %v3315, 4
        %v3488 = vadd.f32 %v3315, %v3487
        %v3489 = vrot.slane %v3488, 2
        %v3490 = vadd.f32 %v3488, %v3489
        %v3491 = vrot.slane %v3490, 1
        %v3492 = vadd.f32 %v3490, %v3491
        %v3493 = vrot.slane %v3316, 4
        %v3494 = vadd.f32 %v3316, %v3493
        %v3495 = vrot.slane %v3494, 2
        %v3496 = vadd.f32 %v3494, %v3495
        %v3497 = vrot.slane %v3496, 1
        %v3498 = vadd.f32 %v3496, %v3497
        %v3499 = vrot.slane %v3317, 4
        %v3500 = vadd.f32 %v3317, %v3499
        %v3501 = vrot.slane %v3500, 2
        %v3502 = vadd.f32 %v3500, %v3501
        %v3503 = vrot.slane %v3502, 1
        %v3504 = vadd.f32 %v3502, %v3503
        %v3505 = vrot.slane %v3318, 4
        %v3506 = vadd.f32 %v3318, %v3505
        %v3507 = vrot.slane %v3506, 2
        %v3508 = vadd.f32 %v3506, %v3507
        %v3509 = vrot.slane %v3508, 1
        %v3510 = vadd.f32 %v3508, %v3509
        %vm3543 = vcmask 1041409
        %v3544 = vsel %vm3543, %v3330, %v3324
        %vm3545 = vcmask 1042434
        %v3546 = vsel %vm3545, %v3336, %v3544
        %vm3547 = vcmask 1043459
        %v3548 = vsel %vm3547, %v3342, %v3546
        %vm3549 = vcmask 1044484
        %v3550 = vsel %vm3549, %v3348, %v3548
        %vm3551 = vcmask 1045509
        %v3552 = vsel %vm3551, %v3354, %v3550
        %vm3553 = vcmask 1046534
        %v3554 = vsel %vm3553, %v3360, %v3552
        %vm3555 = vcmask 1047559
        %v3556 = vsel %vm3555, %v3366, %v3554
        %v3557 = vsel %vm3543, %v3378, %v3372
        %v3558 = vsel %vm3545, %v3384, %v3557
        %v3559 = vsel %vm3547, %v3390, %v3558
        %v3560 = vsel %vm3549, %v3396, %v3559
        %v3561 = vsel %vm3551, %v3402, %v3560
        %v3562 = vsel %vm3553, %v3408, %v3561
        %v3563 = vsel %vm3555, %v3414, %v3562
        %v3564 = vsel %vm3543, %v3426, %v3420
        %v3565 = vsel %vm3545, %v3432, %v3564
        %v3566 = vsel %vm3547, %v3438, %v3565
        %v3567 = vsel %vm3549, %v3444, %v3566
        %v3568 = vsel %vm3551, %v3450, %v3567
        %v3569 = vsel %vm3553, %v3456, %v3568
        %v3570 = vsel %vm3555, %v3462, %v3569
        %v3571 = vsel %vm3543, %v3474, %v3468
        %v3572 = vsel %vm3545, %v3480, %v3571
        %v3573 = vsel %vm3547, %v3486, %v3572
        %v3574 = vsel %vm3549, %v3492, %v3573
        %v3575 = vsel %vm3551, %v3498, %v3574
        %v3576 = vsel %vm3553, %v3504, %v3575
        %v3577 = vsel %vm3555, %v3510, %v3576
        %3582 = vst [vmem:[%s677] sm:$0xff] %v3556
        %3583 = vst [vmem:[%s677 + $0x8] sm:$0xff] %v3563
        %3584 = vst [vmem:[%s677 + $0x10] sm:$0xff] %v3570
        %3585 = vst [vmem:[%s677 + $0x18] sm:$0xff] %v3577
        %s3586 = sand.u32 %s433, 1
        %s3587 = scalar_lea.sflag [#allocation4], %s3586
        %s3588 = sand.u32 %s433, 1
        %s3589 = smul.addr %s3588, 32
        %s3590 = scalar_lea.vmem [#allocation11], %s3589
        // Predicated region
        $region113: #{tpu_custom_call.1} parent=91 // pred_check
          %p3591 = pneg %p443
        $region114: #{tpu_custom_call.1} parent=91 // pred_check_branch
          %3593 = sbr.rel (%p3591) target = $region116
        $region115: #{tpu_custom_call.1} parent=91 // pred_region
          %s3594 = smul.u32 4, %s37
          %3596 = vsyncadd %s3587, 0
          %s3597 = smul.addr %s3594, 8
          %s3598 = scalar_lea.hbm %s18, %s3597
          %s3599 = sshll.u32 %s3590, 4
          %s3600 = int_to_ptr.vmem [resolvable:$true] %s3599
          %s3601 = sshll.u32 %s3598, 4
          %s3602 = int_to_ptr.hbm [resolvable:$true] %s3601
          %3607 = dma.vmem_to_hbm [thread:$0]  %s3600, 512, %s3602, %s3587, 128, 128, 8
        $region116: #{tpu_custom_call.1} parent=91 // pred_fallthru
          _
      $region92: #{tpu_custom_call.1} parent=5 // pred_fallthru
        _
      %p3608 = scmp.le.s32.totalorder 2, %s32
      // Predicated region
      $region117: #{tpu_custom_call.1} parent=5 // pred_check
        %p3609 = pneg %p3608
      $region118: #{tpu_custom_call.1} parent=5 // pred_check_branch
        %3611 = sbr.rel (%p3609) target = $region120
      $region119: #{tpu_custom_call.1} parent=5 // pred_region
        %s3612 = ssub.s32 %s32, 2
        // Predicated region
        $region121: #{tpu_custom_call.1} parent=119 // pred_check
          %p3613 = pneg %p449
        $region122: #{tpu_custom_call.1} parent=119 // pred_check_branch
          %3615 = sbr.rel (%p3613) target = $region124
        $region123: #{tpu_custom_call.1} parent=119 // pred_region
          %s3616 = sand.u32 %s434, 1
          %s3617 = scalar_lea.sflag [#allocation4], %s3616
          %s3618 = sand.u32 %s434, 1
          %s3619 = smul.addr %s3618, 32
          %s3620 = scalar_lea.vmem [#allocation11], %s3619
          %3622 = dma.done %s3617, 512
        $region124: #{tpu_custom_call.1} parent=119 // pred_fallthru
          _
      $region120: #{tpu_custom_call.1} parent=5 // pred_fallthru
        _
    $region6: #{tpu_custom_call.1} parent=1 // loop_footer
      %s36 = sadd.s32 1, %s32
    $region7: #{tpu_custom_call.1} parent=1 // loop_footer_branch
      %31 = sbr.rel target = $region3
    $region8: #{tpu_custom_call.1} parent=1 // loop_exit
      _
    %3623 = vsyncpa [#allocation3], 1
    %s3624 = scalar_lea.sflag [#allocation3], 1
    %3625 = vsyncpa %s3624, 1
    %3626 = vsyncpa [#allocation6], 1
    %3627 = vsyncpa [#allocation9], 1
    %3628 = vsyncpa [#allocation4], 1
    %s3629 = scalar_lea.sflag [#allocation4], 1
    %3630 = vsyncpa %s3629, 1

</llo_original>
